<compile_context>
chip_gen: v7x
topology: tpu7x:2x2x1
jax: 0.10.0
libtpu: 0.0.40
codegen_flags: <defaults>
</compile_context>

<pallas_src>
import math
import functools

import numpy as np
import jax
import jax.numpy as jnp
from jax import lax
from jax.experimental import pallas as pl
from jax.experimental.pallas import tpu as pltpu


def _block_kernel(xc_ref, embT_ref, labT_ref, bind_ref, mask_ref, sel_ref,
                  w1_ref, b1_ref, g1_ref, be1_ref,
                  wt_ref, bt_ref, wl_ref, bl_ref,
                  w2_ref, b2_ref, g2_ref, be2_ref,
                  wf_ref, bf_ref,
                  out_ref, ca_ref, cb_ref, slab_ref,
                  *, wp, off, pspan, n_valid, eps, use_labels):
    cout = ca_ref.shape[0]
    L = ca_ref.shape[1]
    inv_n = 1.0 / n_valid

    # Hoist the (1, PSPAN) interior-pixel-mask broadcast once and reuse it.
    maskc = jnp.broadcast_to(mask_ref[...], (cout, pspan))

    # conv taps as flat lane shifts on the padded canvas.
    taps3 = tuple((kh - 1) * wp + (kw - 1) for kh in range(3) for kw in range(3))
    taps4 = tuple(kh * wp + kw for kh in range(4) for kw in range(4))

    def conv(src_ref, w_ref, b_ref, taps):
        # Stream the im2col slab into the shared bf16 VMEM scratch, one packed
        # 16-sublane tile (= 2 taps of 8 channels) per store, then ONE fused
        # (Cout, K) @ (K, PSPAN) MXU matmul with f32 accumulation.
        # TODO(synk): on v7x benchmark per-tap MRB accumulation (no slab build)
        # against this fused-slab variant; keep the fused matmul on v5e/v6e.
        c = src_ref.shape[0]
        kdim = w_ref.shape[1]              # = ceil(len(taps)/2) * 2 * c (zero-padded K)
        for j in range(0, len(taps), 2):
            lo = src_ref[:, off + taps[j]: off + taps[j] + pspan]
            if j + 1 < len(taps):
                hi = src_ref[:, off + taps[j + 1]: off + taps[j + 1] + pspan]
            else:
                hi = jnp.zeros((c, pspan), jnp.float32)   # pad odd tap count
            slab_ref[j * c:(j + 2) * c, :] = (
                jnp.concatenate([lo, hi], axis=0).astype(jnp.bfloat16))
        return jnp.dot(w_ref[...], slab_ref[0:kdim, :],
                       preferred_element_type=jnp.float32) + b_ref[...]

    def bnorm(v, g_ref, be_ref):
        # Training-mode BatchNorm2d over the masked (real) pixels; the sum and
        # sum-of-squares lane reductions are fused into a single reduce pass.
        vm = v * maskc
        stats = jnp.sum(jnp.concatenate([vm, vm * v], axis=0),
                        axis=1, keepdims=True) * inv_n          # (2*Cout, 1)
        mean = stats[0:cout, :]
        var = stats[cout:2 * cout, :] - mean * mean
        return (v - mean) * (lax.rsqrt(var + eps) * g_ref[...]) + be_ref[...]

    # Zero only the halo margins of the canvases; the [off, off+pspan) span
    # (lane-aligned, a multiple of 128 wide) is fully overwritten below.
    zl = jnp.zeros((cout, off), jnp.float32)
    zr = jnp.zeros((cout, L - off - pspan), jnp.float32)
    for c_ref in (ca_ref, cb_ref):
        c_ref[:, 0:off] = zl
        c_ref[:, off + pspan:L] = zr

    # ---- o = bnorm1(relu(conv1(x))) ----
    o = bnorm(jnp.maximum(conv(xc_ref, w1_ref, b1_ref, taps3), 0.0),
              g1_ref, be1_ref)                                   # (Cout, PSPAN)

    # ---- o += relu(time_mlp(emb_t)) [+ relu(label_mlp(labels))] per batch ----
    add_cb = jnp.maximum(
        jnp.dot(wt_ref[...], embT_ref[...],
                preferred_element_type=jnp.float32) + bt_ref[...], 0.0)  # (Cout, B)
    if use_labels:
        add_cb = add_cb + jnp.maximum(
            wl_ref[...] * labT_ref[...] + bl_ref[...], 0.0)             # (Cout, B)
    o = (o + jnp.dot(add_cb, bind_ref[...],
                     preferred_element_type=jnp.float32)) * maskc
    ca_ref[:, off:off + pspan] = o

    # ---- o = bnorm2(relu(conv2(o))) ----
    o = bnorm(jnp.maximum(conv(ca_ref, w2_ref, b2_ref, taps3), 0.0),
              g2_ref, be2_ref) * maskc
    cb_ref[:, off:off + pspan] = o

    # ---- final Conv2d(Cout, Cout, 4, stride=2, pad=1): one K=16*Cout matmul
    #      over the padded canvas; the stride-2 output subsample is taken
    #      IN-KERNEL with a constant 0/1 selection matmul so only the
    #      lane-dense (Cout, B*Ho*Wo) result is written back to HBM.
    # TODO(synk): at realistic sizes replace the (PSPAN, NOUT) selector
    # (quadratic in image size) with a strided lane gather / polyphase layout.
    y = conv(cb_ref, wf_ref, bf_ref, taps4)                       # (Cout, PSPAN)
    out_ref[...] = jnp.dot(y, sel_ref[...], preferred_element_type=jnp.float32)


# ------------------------- plain-JAX glue -------------------------

def _conv_w_flat(w, cin_pad, k_pad):
    # (Cout, Cin, KH, KW) -> (Cout, k_pad) bf16, tap-major / channel-minor,
    # zero-padding channels to cin_pad (sublane alignment) and K to k_pad
    # (matches the slab-scratch row layout incl. the odd-tap zero tile).
    co, ci, kh, kw = w.shape
    w = jnp.pad(w, ((0, 0), (0, cin_pad - ci), (0, 0), (0, 0)))
    w = jnp.transpose(w, (0, 2, 3, 1)).reshape(co, kh * kw * cin_pad)
    w = jnp.pad(w, ((0, 0), (0, k_pad - w.shape[1])))
    return w.astype(jnp.bfloat16)


def _sinusoidal_embedding(t, dim):
    # matches SinusoidalPositionEmbeddings.forward
    half = dim // 2
    freqs = jnp.exp(jnp.arange(half, dtype=jnp.float32) *
                    (-math.log(10000.0) / (half - 1)))
    args = t.astype(jnp.float32)[:, None] * freqs[None, :]
    return jnp.concatenate([jnp.sin(args), jnp.cos(args)], axis=-1)


def block_forward(x_nchw, t, labels, params, *, use_labels=True):
    B, Cin, H, W = x_nchw.shape
    Cout = params["b1"].shape[0]
    Tdim = params["wt"].shape[1]
    Hp, Wp = H + 2, W + 2
    Ho, Wo = H // 2, W // 2
    IMG = Hp * Wp
    SPAN = B * IMG                                       # real padded-flat extent
    PSPAN = ((SPAN + 127) // 128) * 128                  # lane-dense working span
    OFF = ((Wp + 1 + 127) // 128) * 128                  # lane-aligned left halo
    RIGHT = ((3 * Wp + 3 + 127) // 128) * 128            # right halo for +taps
    L = OFF + PSPAN + RIGHT
    Cin_p = ((Cin + 7) // 8) * 8                         # sublane-aligned channels
    NOUT = B * Ho * Wo
    NOUT_P = ((NOUT + 127) // 128) * 128
    kslab = lambda ntaps, c: ((ntaps + 1) // 2) * 2 * c  # pair-padded K per conv
    K1, K2, KF = kslab(9, Cin_p), kslab(9, Cout), kslab(16, Cout)
    KSLAB = max(K1, K2, KF)

    # TODO(synk): this NCHW -> channels-first flat-canvas relayout is an extra
    # HBM round trip done by XLA outside the kernel; at realistic sizes build
    # the canvas in-kernel via per-channel / row-block DMA instead.
    x_nhwc = jnp.transpose(x_nchw, (0, 2, 3, 1))
    xp = jnp.pad(x_nhwc, ((0, 0), (1, 1), (1, 1), (0, Cin_p - Cin)))   # (B,Hp,Wp,Cin_p)
    xc = jnp.transpose(xp, (3, 0, 1, 2)).reshape(Cin_p, SPAN)
    canvas_x = jnp.pad(xc, ((0, 0), (OFF, L - OFF - SPAN)))            # (Cin_p, L)

    # Static host-side constants: interior-pixel mask, per-batch 0/1 indicator,
    # and the stride-2 output-position selector for the final conv.
    m = np.zeros((1, PSPAN), np.float32)
    bind = np.zeros((B, PSPAN), np.float32)
    sel = np.zeros((PSPAN, NOUT_P), np.float32)
    for b in range(B):
        bind[b, b * IMG:(b + 1) * IMG] = 1.0
        for h in range(H):
            s = b * IMG + (h + 1) * Wp + 1
            m[0, s:s + W] = 1.0
        for ho in range(Ho):
            for wo in range(Wo):
                src = b * IMG + (2 * ho) * Wp + (2 * wo)
                sel[src, (b * Ho + ho) * Wo + wo] = 1.0
    mask = jnp.asarray(m)
    bind = jnp.asarray(bind)
    sel = jnp.asarray(sel)

    emb = _sinusoidal_embedding(t, Tdim)                 # (B, Tdim)
    col = lambda v: v[:, None]                           # (Cout,) -> (Cout, 1)

    args = (
        canvas_x, emb.T, labels.astype(jnp.float32).T, bind, mask, sel,
        _conv_w_flat(params["w1"], Cin_p, K1), col(params["b1"]),
        col(params["g1"]), col(params["be1"]),
        params["wt"], col(params["bt"]),
        params["wl"], col(params["bl"]),
        _conv_w_flat(params["w2"], Cout, K2), col(params["b2"]),
        col(params["g2"]), col(params["be2"]),
        _conv_w_flat(params["wf"], Cout, KF), col(params["bf"]),
    )

    kernel = functools.partial(
        _block_kernel, wp=Wp, off=OFF, pspan=PSPAN,
        n_valid=float(B * H * W), eps=1e-5, use_labels=use_labels)

    # TODO(synk): at realistic sizes add a ("parallel",) grid over batch x
    # row-block tiles (with a two-phase BatchNorm stats pass) so v7x's two
    # TensorCores are used, the input DMA is double-buffered, and the
    # whole-image canvas fits v7x's 64 MiB VMEM; at this toy size everything
    # runs as a single grid step.
    out_sub = pl.pallas_call(
        kernel,
        out_shape=jax.ShapeDtypeStruct((Cout, NOUT_P), jnp.float32),
        in_specs=[pl.BlockSpec(memory_space=pltpu.MemorySpace.VMEM)] * len(args),
        out_specs=pl.BlockSpec(memory_space=pltpu.MemorySpace.VMEM),
        scratch_shapes=[pltpu.VMEM((Cout, L), jnp.float32),
                        pltpu.VMEM((Cout, L), jnp.float32),
                        pltpu.VMEM((KSLAB, PSPAN), jnp.bfloat16)],
        compiler_params=pltpu.CompilerParams(vmem_limit_bytes=32 * 1024 * 1024),
    )(*args)

    # Lane-dense (Cout, B*Ho*Wo) -> NCHW; cheap relayout of the small output.
    out = out_sub[:, :NOUT].reshape(Cout, B, Ho, Wo)
    return jnp.transpose(out, (1, 0, 2, 3))              # (B, Cout, Ho, Wo)


# ------------------------- pure-JAX reference -------------------------

def block_forward_ref(x_nchw, t, labels, params, *, use_labels=True):
    x = jnp.transpose(x_nchw, (0, 2, 3, 1))              # NHWC internally

    def conv(x, w_pt, b, stride, pad):
        w_hwio = jnp.transpose(w_pt, (2, 3, 1, 0))
        y = lax.conv_general_dilated(
            x, w_hwio, (stride, stride), [(pad, pad), (pad, pad)],
            dimension_numbers=("NHWC", "HWIO", "NHWC"))
        return y + b[None, None, None, :]

    def bn(x, g, be, eps=1e-5):
        mean = x.mean(axis=(0, 1, 2), keepdims=True)
        var = ((x - mean) ** 2).mean(axis=(0, 1, 2), keepdims=True)
        return (x - mean) / jnp.sqrt(var + eps) * g + be

    Tdim = params["wt"].shape[1]
    o = bn(jax.nn.relu(conv(x, params["w1"], params["b1"], 1, 1)),
           params["g1"], params["be1"])
    emb = _sinusoidal_embedding(t, Tdim)
    o_time = jax.nn.relu(emb @ params["wt"].T + params["bt"])
    o = o + o_time[:, None, None, :]
    if use_labels:
        o_label = jax.nn.relu(labels.astype(jnp.float32) @ params["wl"].T + params["bl"])
        o = o + o_label[:, None, None, :]
    o = bn(jax.nn.relu(conv(o, params["w2"], params["b2"], 1, 1)),
           params["g2"], params["be2"])
    o = conv(o, params["wf"], params["bf"], 2, 1)
    return jnp.transpose(o, (0, 3, 1, 2))                # NCHW like PyTorch


if __name__ == "__main__":
    B, Cin, Cout, H, W, Tdim = 2, 4, 8, 16, 16, 32
    key = jax.random.PRNGKey(0)
    ks = jax.random.split(key, 16)

    def rnd(k, shape, scale=0.1):
        return scale * jax.random.normal(k, shape, dtype=jnp.float32)

    # deterministic synthetic parameters (PyTorch native layouts)
    params = {
        "w1": rnd(ks[0], (Cout, Cin, 3, 3)), "b1": rnd(ks[1], (Cout,)),
        "g1": 1.0 + rnd(ks[2], (Cout,)), "be1": rnd(ks[3], (Cout,)),
        "wt": rnd(ks[4], (Cout, Tdim)), "bt": rnd(ks[5], (Cout,)),
        "wl": rnd(ks[6], (Cout, 1)), "bl": rnd(ks[7], (Cout,)),
        "w2": rnd(ks[8], (Cout, Cout, 3, 3)), "b2": rnd(ks[9], (Cout,)),
        "g2": 1.0 + rnd(ks[10], (Cout,)), "be2": rnd(ks[11], (Cout,)),
        "wf": rnd(ks[12], (Cout, Cout, 4, 4)), "bf": rnd(ks[13], (Cout,)),
    }

    x = jax.random.normal(ks[14], (B, Cin, H, W), dtype=jnp.float32)  # NCHW input
    t = jnp.arange(B, dtype=jnp.int32)                                # timesteps
    labels = jax.random.normal(ks[15], (B, 1), dtype=jnp.float32)     # label scalars

    out = block_forward(x, t, labels, params, use_labels=True)
    out = jax.block_until_ready(out)

    ref = block_forward_ref(x, t, labels, params, use_labels=True)
    # 5e-2 tolerance covers bf16 MXU operands in the three conv matmuls
    # (elementwise/BN math and accumulation stay f32; typical max dev ~1e-2).
    np.testing.assert_allclose(np.asarray(out), np.asarray(ref), rtol=5e-2, atol=5e-2)

    print("KERNEL_OK")
</pallas_src>

<mosaic_0001>
module attributes {stable_mosaic.version = 11 : i64} {
  func.func @_block_kernel(%arg0: memref<8x1024xf32, #tpu.memory_space<vmem>>, %arg1: memref<32x2xf32, #tpu.memory_space<vmem>>, %arg2: memref<1x2xf32, #tpu.memory_space<vmem>>, %arg3: memref<2x768xf32, #tpu.memory_space<vmem>>, %arg4: memref<1x768xf32, #tpu.memory_space<vmem>>, %arg5: memref<768x128xf32, #tpu.memory_space<vmem>>, %arg6: memref<8x80xbf16, #tpu.memory_space<vmem>>, %arg7: memref<8x1xf32, #tpu.memory_space<vmem>>, %arg8: memref<8x1xf32, #tpu.memory_space<vmem>>, %arg9: memref<8x1xf32, #tpu.memory_space<vmem>>, %arg10: memref<8x32xf32, #tpu.memory_space<vmem>>, %arg11: memref<8x1xf32, #tpu.memory_space<vmem>>, %arg12: memref<8x1xf32, #tpu.memory_space<vmem>>, %arg13: memref<8x1xf32, #tpu.memory_space<vmem>>, %arg14: memref<8x80xbf16, #tpu.memory_space<vmem>>, %arg15: memref<8x1xf32, #tpu.memory_space<vmem>>, %arg16: memref<8x1xf32, #tpu.memory_space<vmem>>, %arg17: memref<8x1xf32, #tpu.memory_space<vmem>>, %arg18: memref<8x128xbf16, #tpu.memory_space<vmem>>, %arg19: memref<8x1xf32, #tpu.memory_space<vmem>>, %arg20: memref<8x128xf32, #tpu.memory_space<vmem>>, %arg21: memref<8x1024xf32, #tpu.memory_space<vmem>>, %arg22: memref<8x1024xf32, #tpu.memory_space<vmem>>, %arg23: memref<128x768xbf16, #tpu.memory_space<vmem>>) attributes {dimension_semantics = [], scalar_prefetch = 0 : i64, scratch_operands = 3 : i64, tpu.core_type = #tpu.core_type<tc>} {
    %c0 = arith.constant 0 : index
    %c0_0 = arith.constant 0 : index
    %0 = vector.load %arg4[%c0, %c0_0] : memref<1x768xf32, #tpu.memory_space<vmem>>, vector<1x768xf32>
    %1 = vector.shape_cast %0 : vector<1x768xf32> to vector<1x768xf32>
    %2 = vector.broadcast %1 : vector<1x768xf32> to vector<8x768xf32>
    %cst = arith.constant 0.000000e+00 : f32
    %3 = vector.broadcast %cst : f32 to vector<8x128xf32>
    %cst_1 = arith.constant 0.000000e+00 : f32
    %4 = vector.broadcast %cst_1 : f32 to vector<8x128xf32>
    %c0_2 = arith.constant 0 : index
    %c0_3 = arith.constant 0 : index
    %5 = vector.load %arg21[%c0_2, %c0_3] : memref<8x1024xf32, #tpu.memory_space<vmem>>, vector<8x128xf32>
    tpu.vector_store %arg21[%c0_2, %c0_3], %3 {strides = array<i32>} : memref<8x1024xf32, #tpu.memory_space<vmem>>, vector<8x128xf32>,
    %c0_4 = arith.constant 0 : index
    %c896 = arith.constant 896 : index
    %6 = vector.load %arg21[%c0_4, %c896] : memref<8x1024xf32, #tpu.memory_space<vmem>>, vector<8x128xf32>
    tpu.vector_store %arg21[%c0_4, %c896], %4 {strides = array<i32>} : memref<8x1024xf32, #tpu.memory_space<vmem>>, vector<8x128xf32>,
    %c0_5 = arith.constant 0 : index
    %c0_6 = arith.constant 0 : index
    %7 = vector.load %arg22[%c0_5, %c0_6] : memref<8x1024xf32, #tpu.memory_space<vmem>>, vector<8x128xf32>
    tpu.vector_store %arg22[%c0_5, %c0_6], %3 {strides = array<i32>} : memref<8x1024xf32, #tpu.memory_space<vmem>>, vector<8x128xf32>,
    %c0_7 = arith.constant 0 : index
    %c896_8 = arith.constant 896 : index
    %8 = vector.load %arg22[%c0_7, %c896_8] : memref<8x1024xf32, #tpu.memory_space<vmem>>, vector<8x128xf32>
    tpu.vector_store %arg22[%c0_7, %c896_8], %4 {strides = array<i32>} : memref<8x1024xf32, #tpu.memory_space<vmem>>, vector<8x128xf32>,
    %c0_9 = arith.constant 0 : index
    %c109 = arith.constant 109 : index
    %9 = vector.load %arg0[%c0_9, %c109] : memref<8x1024xf32, #tpu.memory_space<vmem>>, vector<8x768xf32>
    %c0_10 = arith.constant 0 : index
    %c110 = arith.constant 110 : index
    %10 = vector.load %arg0[%c0_10, %c110] : memref<8x1024xf32, #tpu.memory_space<vmem>>, vector<8x768xf32>
    %11 = tpu.concatenate %9, %10 in 0 : vector<8x768xf32>, vector<8x768xf32> -> vector<16x768xf32>
    %12 = arith.truncf %11 : vector<16x768xf32> to vector<16x768xbf16>
    %c0_11 = arith.constant 0 : index
    %c0_12 = arith.constant 0 : index
    %13 = vector.load %arg23[%c0_11, %c0_12] : memref<128x768xbf16, #tpu.memory_space<vmem>>, vector<16x768xbf16>
    tpu.vector_store %arg23[%c0_11, %c0_12], %12 {strides = array<i32>} : memref<128x768xbf16, #tpu.memory_space<vmem>>, vector<16x768xbf16>,
    %c0_13 = arith.constant 0 : index
    %c111 = arith.constant 111 : index
    %14 = vector.load %arg0[%c0_13, %c111] : memref<8x1024xf32, #tpu.memory_space<vmem>>, vector<8x768xf32>
    %c0_14 = arith.constant 0 : index
    %c127 = arith.constant 127 : index
    %15 = vector.load %arg0[%c0_14, %c127] : memref<8x1024xf32, #tpu.memory_space<vmem>>, vector<8x768xf32>
    %16 = tpu.concatenate %14, %15 in 0 : vector<8x768xf32>, vector<8x768xf32> -> vector<16x768xf32>
    %17 = arith.truncf %16 : vector<16x768xf32> to vector<16x768xbf16>
    %c16 = arith.constant 16 : index
    %c0_15 = arith.constant 0 : index
    %18 = vector.load %arg23[%c16, %c0_15] : memref<128x768xbf16, #tpu.memory_space<vmem>>, vector<16x768xbf16>
    tpu.vector_store %arg23[%c16, %c0_15], %17 {strides = array<i32>} : memref<128x768xbf16, #tpu.memory_space<vmem>>, vector<16x768xbf16>,
    %c0_16 = arith.constant 0 : index
    %c128 = arith.constant 128 : index
    %19 = vector.load %arg0[%c0_16, %c128] : memref<8x1024xf32, #tpu.memory_space<vmem>>, vector<8x768xf32>
    %c0_17 = arith.constant 0 : index
    %c129 = arith.constant 129 : index
    %20 = vector.load %arg0[%c0_17, %c129] : memref<8x1024xf32, #tpu.memory_space<vmem>>, vector<8x768xf32>
    %21 = tpu.concatenate %19, %20 in 0 : vector<8x768xf32>, vector<8x768xf32> -> vector<16x768xf32>
    %22 = arith.truncf %21 : vector<16x768xf32> to vector<16x768xbf16>
    %c32 = arith.constant 32 : index
    %c0_18 = arith.constant 0 : index
    %23 = vector.load %arg23[%c32, %c0_18] : memref<128x768xbf16, #tpu.memory_space<vmem>>, vector<16x768xbf16>
    tpu.vector_store %arg23[%c32, %c0_18], %22 {strides = array<i32>} : memref<128x768xbf16, #tpu.memory_space<vmem>>, vector<16x768xbf16>,
    %c0_19 = arith.constant 0 : index
    %c145 = arith.constant 145 : index
    %24 = vector.load %arg0[%c0_19, %c145] : memref<8x1024xf32, #tpu.memory_space<vmem>>, vector<8x768xf32>
    %c0_20 = arith.constant 0 : index
    %c146 = arith.constant 146 : index
    %25 = vector.load %arg0[%c0_20, %c146] : memref<8x1024xf32, #tpu.memory_space<vmem>>, vector<8x768xf32>
    %26 = tpu.concatenate %24, %25 in 0 : vector<8x768xf32>, vector<8x768xf32> -> vector<16x768xf32>
    %27 = arith.truncf %26 : vector<16x768xf32> to vector<16x768xbf16>
    %c48 = arith.constant 48 : index
    %c0_21 = arith.constant 0 : index
    %28 = vector.load %arg23[%c48, %c0_21] : memref<128x768xbf16, #tpu.memory_space<vmem>>, vector<16x768xbf16>
    tpu.vector_store %arg23[%c48, %c0_21], %27 {strides = array<i32>} : memref<128x768xbf16, #tpu.memory_space<vmem>>, vector<16x768xbf16>,
    %c0_22 = arith.constant 0 : index
    %c147 = arith.constant 147 : index
    %29 = vector.load %arg0[%c0_22, %c147] : memref<8x1024xf32, #tpu.memory_space<vmem>>, vector<8x768xf32>
    %cst_23 = arith.constant 0.000000e+00 : f32
    %30 = vector.broadcast %cst_23 : f32 to vector<8x768xf32>
    %31 = tpu.concatenate %29, %30 in 0 : vector<8x768xf32>, vector<8x768xf32> -> vector<16x768xf32>
    %32 = arith.truncf %31 : vector<16x768xf32> to vector<16x768xbf16>
    %c64 = arith.constant 64 : index
    %c0_24 = arith.constant 0 : index
    %33 = vector.load %arg23[%c64, %c0_24] : memref<128x768xbf16, #tpu.memory_space<vmem>>, vector<16x768xbf16>
    tpu.vector_store %arg23[%c64, %c0_24], %32 {strides = array<i32>} : memref<128x768xbf16, #tpu.memory_space<vmem>>, vector<16x768xbf16>,
    %c0_25 = arith.constant 0 : index
    %c0_26 = arith.constant 0 : index
    %34 = vector.load %arg6[%c0_25, %c0_26] : memref<8x80xbf16, #tpu.memory_space<vmem>>, vector<8x80xbf16>
    %c0_27 = arith.constant 0 : index
    %c0_28 = arith.constant 0 : index
    %35 = vector.load %arg23[%c0_27, %c0_28] : memref<128x768xbf16, #tpu.memory_space<vmem>>, vector<80x768xbf16>
    %cst_29 = arith.constant dense<0.000000e+00> : vector<8x768xf32>
    %36 = tpu.matmul %34, %35, %cst_29 {dimension_numbers = #tpu.dot_dimension_numbers<[1], [0], [0], [1], [0, 0, 1, 1], [], []>} : vector<8x80xbf16>, vector<80x768xbf16>, vector<8x768xf32> -> vector<8x768xf32>
    %c0_30 = arith.constant 0 : index
    %c0_31 = arith.constant 0 : index
    %37 = vector.load %arg7[%c0_30, %c0_31] : memref<8x1xf32, #tpu.memory_space<vmem>>, vector<8x1xf32>
    %38 = vector.broadcast %37 : vector<8x1xf32> to vector<8x768xf32>
    %39 = arith.addf %36, %38 : vector<8x768xf32>
    %cst_32 = arith.constant 0.000000e+00 : f32
    %40 = vector.broadcast %cst_32 : f32 to vector<8x768xf32>
    %41 = arith.maximumf %39, %40 : vector<8x768xf32>
    %42 = arith.mulf %41, %2 : vector<8x768xf32>
    %43 = arith.mulf %42, %41 : vector<8x768xf32>
    %44 = tpu.concatenate %42, %43 in 0 : vector<8x768xf32>, vector<8x768xf32> -> vector<16x768xf32>
    %cst_33 = arith.constant dense<0.000000e+00> : vector<16xf32>
    %45 = vector.multi_reduction <add>, %44, %cst_33 [1] : vector<16x768xf32> to vector<16xf32>
    %46 = vector.shape_cast %45 : vector<16xf32> to vector<16x1xf32>
    %cst_34 = arith.constant 0.001953125 : f32
    %47 = vector.broadcast %cst_34 : f32 to vector<16x1xf32>
    %48 = arith.mulf %46, %47 : vector<16x1xf32>
    %49 = vector.extract_strided_slice %48 {offsets = [0, 0], sizes = [8, 1], strides = [1, 1]} : vector<16x1xf32> to vector<8x1xf32>
    %50 = vector.extract_strided_slice %48 {offsets = [8, 0], sizes = [8, 1], strides = [1, 1]} : vector<16x1xf32> to vector<8x1xf32>
    %51 = arith.mulf %49, %49 : vector<8x1xf32>
    %52 = arith.subf %50, %51 : vector<8x1xf32>
    %53 = vector.broadcast %49 : vector<8x1xf32> to vector<8x768xf32>
    %54 = arith.subf %41, %53 : vector<8x768xf32>
    %cst_35 = arith.constant 9.99999974E-6 : f32
    %55 = vector.broadcast %cst_35 : f32 to vector<8x1xf32>
    %56 = arith.addf %52, %55 : vector<8x1xf32>
    %57 = math.rsqrt %56 : vector<8x1xf32>
    %c0_36 = arith.constant 0 : index
    %c0_37 = arith.constant 0 : index
    %58 = vector.load %arg8[%c0_36, %c0_37] : memref<8x1xf32, #tpu.memory_space<vmem>>, vector<8x1xf32>
    %59 = arith.mulf %57, %58 : vector<8x1xf32>
    %60 = vector.broadcast %59 : vector<8x1xf32> to vector<8x768xf32>
    %61 = arith.mulf %54, %60 : vector<8x768xf32>
    %c0_38 = arith.constant 0 : index
    %c0_39 = arith.constant 0 : index
    %62 = vector.load %arg9[%c0_38, %c0_39] : memref<8x1xf32, #tpu.memory_space<vmem>>, vector<8x1xf32>
    %63 = vector.broadcast %62 : vector<8x1xf32> to vector<8x768xf32>
    %64 = arith.addf %61, %63 : vector<8x768xf32>
    %c0_40 = arith.constant 0 : index
    %c0_41 = arith.constant 0 : index
    %65 = vector.load %arg10[%c0_40, %c0_41] : memref<8x32xf32, #tpu.memory_space<vmem>>, vector<8x32xf32>
    %c0_42 = arith.constant 0 : index
    %c0_43 = arith.constant 0 : index
    %66 = vector.load %arg1[%c0_42, %c0_43] : memref<32x2xf32, #tpu.memory_space<vmem>>, vector<32x2xf32>
    %cst_44 = arith.constant dense<0.000000e+00> : vector<8x2xf32>
    %67 = tpu.matmul %65, %66, %cst_44 {dimension_numbers = #tpu.dot_dimension_numbers<[1], [0], [0], [1], [0, 0, 1, 1], [], []>} : vector<8x32xf32>, vector<32x2xf32>, vector<8x2xf32> -> vector<8x2xf32>
    %c0_45 = arith.constant 0 : index
    %c0_46 = arith.constant 0 : index
    %68 = vector.load %arg11[%c0_45, %c0_46] : memref<8x1xf32, #tpu.memory_space<vmem>>, vector<8x1xf32>
    %69 = vector.broadcast %68 : vector<8x1xf32> to vector<8x2xf32>
    %70 = arith.addf %67, %69 : vector<8x2xf32>
    %cst_47 = arith.constant 0.000000e+00 : f32
    %71 = vector.broadcast %cst_47 : f32 to vector<8x2xf32>
    %72 = arith.maximumf %70, %71 : vector<8x2xf32>
    %c0_48 = arith.constant 0 : index
    %c0_49 = arith.constant 0 : index
    %73 = vector.load %arg12[%c0_48, %c0_49] : memref<8x1xf32, #tpu.memory_space<vmem>>, vector<8x1xf32>
    %c0_50 = arith.constant 0 : index
    %c0_51 = arith.constant 0 : index
    %74 = vector.load %arg2[%c0_50, %c0_51] : memref<1x2xf32, #tpu.memory_space<vmem>>, vector<1x2xf32>
    %75 = vector.broadcast %73 : vector<8x1xf32> to vector<8x2xf32>
    %76 = vector.broadcast %74 : vector<1x2xf32> to vector<8x2xf32>
    %77 = arith.mulf %75, %76 : vector<8x2xf32>
    %c0_52 = arith.constant 0 : index
    %c0_53 = arith.constant 0 : index
    %78 = vector.load %arg13[%c0_52, %c0_53] : memref<8x1xf32, #tpu.memory_space<vmem>>, vector<8x1xf32>
    %79 = vector.broadcast %78 : vector<8x1xf32> to vector<8x2xf32>
    %80 = arith.addf %77, %79 : vector<8x2xf32>
    %cst_54 = arith.constant 0.000000e+00 : f32
    %81 = vector.broadcast %cst_54 : f32 to vector<8x2xf32>
    %82 = arith.maximumf %80, %81 : vector<8x2xf32>
    %83 = arith.addf %72, %82 : vector<8x2xf32>
    %c0_55 = arith.constant 0 : index
    %c0_56 = arith.constant 0 : index
    %84 = vector.load %arg3[%c0_55, %c0_56] : memref<2x768xf32, #tpu.memory_space<vmem>>, vector<2x768xf32>
    %cst_57 = arith.constant dense<0.000000e+00> : vector<8x768xf32>
    %85 = tpu.matmul %83, %84, %cst_57 {dimension_numbers = #tpu.dot_dimension_numbers<[1], [0], [0], [1], [0, 0, 1, 1], [], []>} : vector<8x2xf32>, vector<2x768xf32>, vector<8x768xf32> -> vector<8x768xf32>
    %86 = arith.addf %64, %85 : vector<8x768xf32>
    %87 = arith.mulf %86, %2 : vector<8x768xf32>
    %c0_58 = arith.constant 0 : index
    %c128_59 = arith.constant 128 : index
    %88 = vector.load %arg21[%c0_58, %c128_59] : memref<8x1024xf32, #tpu.memory_space<vmem>>, vector<8x768xf32>
    tpu.vector_store %arg21[%c0_58, %c128_59], %87 {strides = array<i32>} : memref<8x1024xf32, #tpu.memory_space<vmem>>, vector<8x768xf32>,
    %c0_60 = arith.constant 0 : index
    %c109_61 = arith.constant 109 : index
    %89 = vector.load %arg21[%c0_60, %c109_61] : memref<8x1024xf32, #tpu.memory_space<vmem>>, vector<8x768xf32>
    %c0_62 = arith.constant 0 : index
    %c110_63 = arith.constant 110 : index
    %90 = vector.load %arg21[%c0_62, %c110_63] : memref<8x1024xf32, #tpu.memory_space<vmem>>, vector<8x768xf32>
    %91 = tpu.concatenate %89, %90 in 0 : vector<8x768xf32>, vector<8x768xf32> -> vector<16x768xf32>
    %92 = arith.truncf %91 : vector<16x768xf32> to vector<16x768xbf16>
    %c0_64 = arith.constant 0 : index
    %c0_65 = arith.constant 0 : index
    %93 = vector.load %arg23[%c0_64, %c0_65] : memref<128x768xbf16, #tpu.memory_space<vmem>>, vector<16x768xbf16>
    tpu.vector_store %arg23[%c0_64, %c0_65], %92 {strides = array<i32>} : memref<128x768xbf16, #tpu.memory_space<vmem>>, vector<16x768xbf16>,
    %c0_66 = arith.constant 0 : index
    %c111_67 = arith.constant 111 : index
    %94 = vector.load %arg21[%c0_66, %c111_67] : memref<8x1024xf32, #tpu.memory_space<vmem>>, vector<8x768xf32>
    %c0_68 = arith.constant 0 : index
    %c127_69 = arith.constant 127 : index
    %95 = vector.load %arg21[%c0_68, %c127_69] : memref<8x1024xf32, #tpu.memory_space<vmem>>, vector<8x768xf32>
    %96 = tpu.concatenate %94, %95 in 0 : vector<8x768xf32>, vector<8x768xf32> -> vector<16x768xf32>
    %97 = arith.truncf %96 : vector<16x768xf32> to vector<16x768xbf16>
    %c16_70 = arith.constant 16 : index
    %c0_71 = arith.constant 0 : index
    %98 = vector.load %arg23[%c16_70, %c0_71] : memref<128x768xbf16, #tpu.memory_space<vmem>>, vector<16x768xbf16>
    tpu.vector_store %arg23[%c16_70, %c0_71], %97 {strides = array<i32>} : memref<128x768xbf16, #tpu.memory_space<vmem>>, vector<16x768xbf16>,
    %c0_72 = arith.constant 0 : index
    %c128_73 = arith.constant 128 : index
    %99 = vector.load %arg21[%c0_72, %c128_73] : memref<8x1024xf32, #tpu.memory_space<vmem>>, vector<8x768xf32>
    %c0_74 = arith.constant 0 : index
    %c129_75 = arith.constant 129 : index
    %100 = vector.load %arg21[%c0_74, %c129_75] : memref<8x1024xf32, #tpu.memory_space<vmem>>, vector<8x768xf32>
    %101 = tpu.concatenate %99, %100 in 0 : vector<8x768xf32>, vector<8x768xf32> -> vector<16x768xf32>
    %102 = arith.truncf %101 : vector<16x768xf32> to vector<16x768xbf16>
    %c32_76 = arith.constant 32 : index
    %c0_77 = arith.constant 0 : index
    %103 = vector.load %arg23[%c32_76, %c0_77] : memref<128x768xbf16, #tpu.memory_space<vmem>>, vector<16x768xbf16>
    tpu.vector_store %arg23[%c32_76, %c0_77], %102 {strides = array<i32>} : memref<128x768xbf16, #tpu.memory_space<vmem>>, vector<16x768xbf16>,
    %c0_78 = arith.constant 0 : index
    %c145_79 = arith.constant 145 : index
    %104 = vector.load %arg21[%c0_78, %c145_79] : memref<8x1024xf32, #tpu.memory_space<vmem>>, vector<8x768xf32>
    %c0_80 = arith.constant 0 : index
    %c146_81 = arith.constant 146 : index
    %105 = vector.load %arg21[%c0_80, %c146_81] : memref<8x1024xf32, #tpu.memory_space<vmem>>, vector<8x768xf32>
    %106 = tpu.concatenate %104, %105 in 0 : vector<8x768xf32>, vector<8x768xf32> -> vector<16x768xf32>
    %107 = arith.truncf %106 : vector<16x768xf32> to vector<16x768xbf16>
    %c48_82 = arith.constant 48 : index
    %c0_83 = arith.constant 0 : index
    %108 = vector.load %arg23[%c48_82, %c0_83] : memref<128x768xbf16, #tpu.memory_space<vmem>>, vector<16x768xbf16>
    tpu.vector_store %arg23[%c48_82, %c0_83], %107 {strides = array<i32>} : memref<128x768xbf16, #tpu.memory_space<vmem>>, vector<16x768xbf16>,
    %c0_84 = arith.constant 0 : index
    %c147_85 = arith.constant 147 : index
    %109 = vector.load %arg21[%c0_84, %c147_85] : memref<8x1024xf32, #tpu.memory_space<vmem>>, vector<8x768xf32>
    %cst_86 = arith.constant 0.000000e+00 : f32
    %110 = vector.broadcast %cst_86 : f32 to vector<8x768xf32>
    %111 = tpu.concatenate %109, %110 in 0 : vector<8x768xf32>, vector<8x768xf32> -> vector<16x768xf32>
    %112 = arith.truncf %111 : vector<16x768xf32> to vector<16x768xbf16>
    %c64_87 = arith.constant 64 : index
    %c0_88 = arith.constant 0 : index
    %113 = vector.load %arg23[%c64_87, %c0_88] : memref<128x768xbf16, #tpu.memory_space<vmem>>, vector<16x768xbf16>
    tpu.vector_store %arg23[%c64_87, %c0_88], %112 {strides = array<i32>} : memref<128x768xbf16, #tpu.memory_space<vmem>>, vector<16x768xbf16>,
    %c0_89 = arith.constant 0 : index
    %c0_90 = arith.constant 0 : index
    %114 = vector.load %arg14[%c0_89, %c0_90] : memref<8x80xbf16, #tpu.memory_space<vmem>>, vector<8x80xbf16>
    %c0_91 = arith.constant 0 : index
    %c0_92 = arith.constant 0 : index
    %115 = vector.load %arg23[%c0_91, %c0_92] : memref<128x768xbf16, #tpu.memory_space<vmem>>, vector<80x768xbf16>
    %cst_93 = arith.constant dense<0.000000e+00> : vector<8x768xf32>
    %116 = tpu.matmul %114, %115, %cst_93 {dimension_numbers = #tpu.dot_dimension_numbers<[1], [0], [0], [1], [0, 0, 1, 1], [], []>} : vector<8x80xbf16>, vector<80x768xbf16>, vector<8x768xf32> -> vector<8x768xf32>
    %c0_94 = arith.constant 0 : index
    %c0_95 = arith.constant 0 : index
    %117 = vector.load %arg15[%c0_94, %c0_95] : memref<8x1xf32, #tpu.memory_space<vmem>>, vector<8x1xf32>
    %118 = vector.broadcast %117 : vector<8x1xf32> to vector<8x768xf32>
    %119 = arith.addf %116, %118 : vector<8x768xf32>
    %cst_96 = arith.constant 0.000000e+00 : f32
    %120 = vector.broadcast %cst_96 : f32 to vector<8x768xf32>
    %121 = arith.maximumf %119, %120 : vector<8x768xf32>
    %122 = arith.mulf %121, %2 : vector<8x768xf32>
    %123 = arith.mulf %122, %121 : vector<8x768xf32>
    %124 = tpu.concatenate %122, %123 in 0 : vector<8x768xf32>, vector<8x768xf32> -> vector<16x768xf32>
    %cst_97 = arith.constant dense<0.000000e+00> : vector<16xf32>
    %125 = vector.multi_reduction <add>, %124, %cst_97 [1] : vector<16x768xf32> to vector<16xf32>
    %126 = vector.shape_cast %125 : vector<16xf32> to vector<16x1xf32>
    %cst_98 = arith.constant 0.001953125 : f32
    %127 = vector.broadcast %cst_98 : f32 to vector<16x1xf32>
    %128 = arith.mulf %126, %127 : vector<16x1xf32>
    %129 = vector.extract_strided_slice %128 {offsets = [0, 0], sizes = [8, 1], strides = [1, 1]} : vector<16x1xf32> to vector<8x1xf32>
    %130 = vector.extract_strided_slice %128 {offsets = [8, 0], sizes = [8, 1], strides = [1, 1]} : vector<16x1xf32> to vector<8x1xf32>
    %131 = arith.mulf %129, %129 : vector<8x1xf32>
    %132 = arith.subf %130, %131 : vector<8x1xf32>
    %133 = vector.broadcast %129 : vector<8x1xf32> to vector<8x768xf32>
    %134 = arith.subf %121, %133 : vector<8x768xf32>
    %cst_99 = arith.constant 9.99999974E-6 : f32
    %135 = vector.broadcast %cst_99 : f32 to vector<8x1xf32>
    %136 = arith.addf %132, %135 : vector<8x1xf32>
    %137 = math.rsqrt %136 : vector<8x1xf32>
    %c0_100 = arith.constant 0 : index
    %c0_101 = arith.constant 0 : index
    %138 = vector.load %arg16[%c0_100, %c0_101] : memref<8x1xf32, #tpu.memory_space<vmem>>, vector<8x1xf32>
    %139 = arith.mulf %137, %138 : vector<8x1xf32>
    %140 = vector.broadcast %139 : vector<8x1xf32> to vector<8x768xf32>
    %141 = arith.mulf %134, %140 : vector<8x768xf32>
    %c0_102 = arith.constant 0 : index
    %c0_103 = arith.constant 0 : index
    %142 = vector.load %arg17[%c0_102, %c0_103] : memref<8x1xf32, #tpu.memory_space<vmem>>, vector<8x1xf32>
    %143 = vector.broadcast %142 : vector<8x1xf32> to vector<8x768xf32>
    %144 = arith.addf %141, %143 : vector<8x768xf32>
    %145 = arith.mulf %144, %2 : vector<8x768xf32>
    %c0_104 = arith.constant 0 : index
    %c128_105 = arith.constant 128 : index
    %146 = vector.load %arg22[%c0_104, %c128_105] : memref<8x1024xf32, #tpu.memory_space<vmem>>, vector<8x768xf32>
    tpu.vector_store %arg22[%c0_104, %c128_105], %145 {strides = array<i32>} : memref<8x1024xf32, #tpu.memory_space<vmem>>, vector<8x768xf32>,
    %c0_106 = arith.constant 0 : index
    %c128_107 = arith.constant 128 : index
    %147 = vector.load %arg22[%c0_106, %c128_107] : memref<8x1024xf32, #tpu.memory_space<vmem>>, vector<8x768xf32>
    %c0_108 = arith.constant 0 : index
    %c129_109 = arith.constant 129 : index
    %148 = vector.load %arg22[%c0_108, %c129_109] : memref<8x1024xf32, #tpu.memory_space<vmem>>, vector<8x768xf32>
    %149 = tpu.concatenate %147, %148 in 0 : vector<8x768xf32>, vector<8x768xf32> -> vector<16x768xf32>
    %150 = arith.truncf %149 : vector<16x768xf32> to vector<16x768xbf16>
    %c0_110 = arith.constant 0 : index
    %c0_111 = arith.constant 0 : index
    %151 = vector.load %arg23[%c0_110, %c0_111] : memref<128x768xbf16, #tpu.memory_space<vmem>>, vector<16x768xbf16>
    tpu.vector_store %arg23[%c0_110, %c0_111], %150 {strides = array<i32>} : memref<128x768xbf16, #tpu.memory_space<vmem>>, vector<16x768xbf16>,
    %c0_112 = arith.constant 0 : index
    %c130 = arith.constant 130 : index
    %152 = vector.load %arg22[%c0_112, %c130] : memref<8x1024xf32, #tpu.memory_space<vmem>>, vector<8x768xf32>
    %c0_113 = arith.constant 0 : index
    %c131 = arith.constant 131 : index
    %153 = vector.load %arg22[%c0_113, %c131] : memref<8x1024xf32, #tpu.memory_space<vmem>>, vector<8x768xf32>
    %154 = tpu.concatenate %152, %153 in 0 : vector<8x768xf32>, vector<8x768xf32> -> vector<16x768xf32>
    %155 = arith.truncf %154 : vector<16x768xf32> to vector<16x768xbf16>
    %c16_114 = arith.constant 16 : index
    %c0_115 = arith.constant 0 : index
    %156 = vector.load %arg23[%c16_114, %c0_115] : memref<128x768xbf16, #tpu.memory_space<vmem>>, vector<16x768xbf16>
    tpu.vector_store %arg23[%c16_114, %c0_115], %155 {strides = array<i32>} : memref<128x768xbf16, #tpu.memory_space<vmem>>, vector<16x768xbf16>,
    %c0_116 = arith.constant 0 : index
    %c146_117 = arith.constant 146 : index
    %157 = vector.load %arg22[%c0_116, %c146_117] : memref<8x1024xf32, #tpu.memory_space<vmem>>, vector<8x768xf32>
    %c0_118 = arith.constant 0 : index
    %c147_119 = arith.constant 147 : index
    %158 = vector.load %arg22[%c0_118, %c147_119] : memref<8x1024xf32, #tpu.memory_space<vmem>>, vector<8x768xf32>
    %159 = tpu.concatenate %157, %158 in 0 : vector<8x768xf32>, vector<8x768xf32> -> vector<16x768xf32>
    %160 = arith.truncf %159 : vector<16x768xf32> to vector<16x768xbf16>
    %c32_120 = arith.constant 32 : index
    %c0_121 = arith.constant 0 : index
    %161 = vector.load %arg23[%c32_120, %c0_121] : memref<128x768xbf16, #tpu.memory_space<vmem>>, vector<16x768xbf16>
    tpu.vector_store %arg23[%c32_120, %c0_121], %160 {strides = array<i32>} : memref<128x768xbf16, #tpu.memory_space<vmem>>, vector<16x768xbf16>,
    %c0_122 = arith.constant 0 : index
    %c148 = arith.constant 148 : index
    %162 = vector.load %arg22[%c0_122, %c148] : memref<8x1024xf32, #tpu.memory_space<vmem>>, vector<8x768xf32>
    %c0_123 = arith.constant 0 : index
    %c149 = arith.constant 149 : index
    %163 = vector.load %arg22[%c0_123, %c149] : memref<8x1024xf32, #tpu.memory_space<vmem>>, vector<8x768xf32>
    %164 = tpu.concatenate %162, %163 in 0 : vector<8x768xf32>, vector<8x768xf32> -> vector<16x768xf32>
    %165 = arith.truncf %164 : vector<16x768xf32> to vector<16x768xbf16>
    %c48_124 = arith.constant 48 : index
    %c0_125 = arith.constant 0 : index
    %166 = vector.load %arg23[%c48_124, %c0_125] : memref<128x768xbf16, #tpu.memory_space<vmem>>, vector<16x768xbf16>
    tpu.vector_store %arg23[%c48_124, %c0_125], %165 {strides = array<i32>} : memref<128x768xbf16, #tpu.memory_space<vmem>>, vector<16x768xbf16>,
    %c0_126 = arith.constant 0 : index
    %c164 = arith.constant 164 : index
    %167 = vector.load %arg22[%c0_126, %c164] : memref<8x1024xf32, #tpu.memory_space<vmem>>, vector<8x768xf32>
    %c0_127 = arith.constant 0 : index
    %c165 = arith.constant 165 : index
    %168 = vector.load %arg22[%c0_127, %c165] : memref<8x1024xf32, #tpu.memory_space<vmem>>, vector<8x768xf32>
    %169 = tpu.concatenate %167, %168 in 0 : vector<8x768xf32>, vector<8x768xf32> -> vector<16x768xf32>
    %170 = arith.truncf %169 : vector<16x768xf32> to vector<16x768xbf16>
    %c64_128 = arith.constant 64 : index
    %c0_129 = arith.constant 0 : index
    %171 = vector.load %arg23[%c64_128, %c0_129] : memref<128x768xbf16, #tpu.memory_space<vmem>>, vector<16x768xbf16>
    tpu.vector_store %arg23[%c64_128, %c0_129], %170 {strides = array<i32>} : memref<128x768xbf16, #tpu.memory_space<vmem>>, vector<16x768xbf16>,
    %c0_130 = arith.constant 0 : index
    %c166 = arith.constant 166 : index
    %172 = vector.load %arg22[%c0_130, %c166] : memref<8x1024xf32, #tpu.memory_space<vmem>>, vector<8x768xf32>
    %c0_131 = arith.constant 0 : index
    %c167 = arith.constant 167 : index
    %173 = vector.load %arg22[%c0_131, %c167] : memref<8x1024xf32, #tpu.memory_space<vmem>>, vector<8x768xf32>
    %174 = tpu.concatenate %172, %173 in 0 : vector<8x768xf32>, vector<8x768xf32> -> vector<16x768xf32>
    %175 = arith.truncf %174 : vector<16x768xf32> to vector<16x768xbf16>
    %c80 = arith.constant 80 : index
    %c0_132 = arith.constant 0 : index
    %176 = vector.load %arg23[%c80, %c0_132] : memref<128x768xbf16, #tpu.memory_space<vmem>>, vector<16x768xbf16>
    tpu.vector_store %arg23[%c80, %c0_132], %175 {strides = array<i32>} : memref<128x768xbf16, #tpu.memory_space<vmem>>, vector<16x768xbf16>,
    %c0_133 = arith.constant 0 : index
    %c182 = arith.constant 182 : index
    %177 = vector.load %arg22[%c0_133, %c182] : memref<8x1024xf32, #tpu.memory_space<vmem>>, vector<8x768xf32>
    %c0_134 = arith.constant 0 : index
    %c183 = arith.constant 183 : index
    %178 = vector.load %arg22[%c0_134, %c183] : memref<8x1024xf32, #tpu.memory_space<vmem>>, vector<8x768xf32>
    %179 = tpu.concatenate %177, %178 in 0 : vector<8x768xf32>, vector<8x768xf32> -> vector<16x768xf32>
    %180 = arith.truncf %179 : vector<16x768xf32> to vector<16x768xbf16>
    %c96 = arith.constant 96 : index
    %c0_135 = arith.constant 0 : index
    %181 = vector.load %arg23[%c96, %c0_135] : memref<128x768xbf16, #tpu.memory_space<vmem>>, vector<16x768xbf16>
    tpu.vector_store %arg23[%c96, %c0_135], %180 {strides = array<i32>} : memref<128x768xbf16, #tpu.memory_space<vmem>>, vector<16x768xbf16>,
    %c0_136 = arith.constant 0 : index
    %c184 = arith.constant 184 : index
    %182 = vector.load %arg22[%c0_136, %c184] : memref<8x1024xf32, #tpu.memory_space<vmem>>, vector<8x768xf32>
    %c0_137 = arith.constant 0 : index
    %c185 = arith.constant 185 : index
    %183 = vector.load %arg22[%c0_137, %c185] : memref<8x1024xf32, #tpu.memory_space<vmem>>, vector<8x768xf32>
    %184 = tpu.concatenate %182, %183 in 0 : vector<8x768xf32>, vector<8x768xf32> -> vector<16x768xf32>
    %185 = arith.truncf %184 : vector<16x768xf32> to vector<16x768xbf16>
    %c112 = arith.constant 112 : index
    %c0_138 = arith.constant 0 : index
    %186 = vector.load %arg23[%c112, %c0_138] : memref<128x768xbf16, #tpu.memory_space<vmem>>, vector<16x768xbf16>
    tpu.vector_store %arg23[%c112, %c0_138], %185 {strides = array<i32>} : memref<128x768xbf16, #tpu.memory_space<vmem>>, vector<16x768xbf16>,
    %c0_139 = arith.constant 0 : index
    %c0_140 = arith.constant 0 : index
    %187 = vector.load %arg18[%c0_139, %c0_140] : memref<8x128xbf16, #tpu.memory_space<vmem>>, vector<8x128xbf16>
    %c0_141 = arith.constant 0 : index
    %c0_142 = arith.constant 0 : index
    %188 = vector.load %arg23[%c0_141, %c0_142] : memref<128x768xbf16, #tpu.memory_space<vmem>>, vector<128x768xbf16>
    %cst_143 = arith.constant dense<0.000000e+00> : vector<8x768xf32>
    %189 = tpu.matmul %187, %188, %cst_143 {dimension_numbers = #tpu.dot_dimension_numbers<[1], [0], [0], [1], [0, 0, 1, 1], [], []>} : vector<8x128xbf16>, vector<128x768xbf16>, vector<8x768xf32> -> vector<8x768xf32>
    %c0_144 = arith.constant 0 : index
    %c0_145 = arith.constant 0 : index
    %190 = vector.load %arg19[%c0_144, %c0_145] : memref<8x1xf32, #tpu.memory_space<vmem>>, vector<8x1xf32>
    %191 = vector.broadcast %190 : vector<8x1xf32> to vector<8x768xf32>
    %192 = arith.addf %189, %191 : vector<8x768xf32>
    %c0_146 = arith.constant 0 : index
    %c0_147 = arith.constant 0 : index
    %193 = vector.load %arg5[%c0_146, %c0_147] : memref<768x128xf32, #tpu.memory_space<vmem>>, vector<768x128xf32>
    %cst_148 = arith.constant dense<0.000000e+00> : vector<8x128xf32>
    %194 = tpu.matmul %192, %193, %cst_148 {dimension_numbers = #tpu.dot_dimension_numbers<[1], [0], [0], [1], [0, 0, 1, 1], [], []>} : vector<8x768xf32>, vector<768x128xf32>, vector<8x128xf32> -> vector<8x128xf32>
    %c0_149 = arith.constant 0 : index
    %c0_150 = arith.constant 0 : index
    %195 = vector.load %arg20[%c0_149, %c0_150] : memref<8x128xf32, #tpu.memory_space<vmem>>, vector<8x128xf32>
    tpu.vector_store %arg20[%c0_149, %c0_150], %194 {strides = array<i32>} : memref<8x128xf32, #tpu.memory_space<vmem>>, vector<8x128xf32>,
    return
  }
}

</mosaic_0001>

<llo_original>
// kernel: tpu_custom_call.1
$region0: #{tpu_custom_call.1}
  #allocation0 [shape = 'u32[]', space=smem, size = 0x4, offset = 0x4, fixed_abs, tag = 'smem constant byte address 0x4 - core index']
  #allocation1 [shape = 'u32[144,128]{1,0:T(1,128)}', space=vmem, size = 0x12000, scoped, tag = 'internal scratch']
  #allocation2 [shape = 'f32[8,1024]{1,0:T(8,128)}', space=vmem, size = 0x8000, scoped, tag = 'scratch operand']
  #allocation3 [shape = 'f32[8,1024]{1,0:T(8,128)}', space=vmem, size = 0x8000, scoped, tag = 'scratch operand']
  #allocation4 [shape = 'bf16[128,768]{1,0:T(16,128)(2,1)}', space=vmem, size = 0x30000, scoped, tag = 'scratch operand']
  %s0 = inlined_call_operand.vmem [shape: f32[8,1024], index: 0, kind: input, shape index: {}]
  %s1 = inlined_call_operand.vmem [shape: f32[32,2], index: 1, kind: input, shape index: {}]
  %s2 = inlined_call_operand.vmem [shape: f32[1,2], index: 2, kind: input, shape index: {}]
  %s3 = inlined_call_operand.vmem [shape: f32[2,768], index: 3, kind: input, shape index: {}]
  %s4 = inlined_call_operand.vmem [shape: f32[1,768], index: 4, kind: input, shape index: {}]
  %s5 = inlined_call_operand.hbm [shape: f32[768,128], index: 5, kind: input, shape index: {}]
  %s6 = inlined_call_operand.vmem [shape: bf16[8,80], index: 6, kind: input, shape index: {}]
  %s7 = inlined_call_operand.vmem [shape: f32[8,1], index: 7, kind: input, shape index: {}]
  %s8 = inlined_call_operand.vmem [shape: f32[8,1], index: 8, kind: input, shape index: {}]
  %s9 = inlined_call_operand.vmem [shape: f32[8,1], index: 9, kind: input, shape index: {}]
  %s10 = inlined_call_operand.vmem [shape: f32[8,32], index: 10, kind: input, shape index: {}]
  %s11 = inlined_call_operand.vmem [shape: f32[8,1], index: 11, kind: input, shape index: {}]
  %s12 = inlined_call_operand.vmem [shape: f32[8,1], index: 12, kind: input, shape index: {}]
  %s13 = inlined_call_operand.vmem [shape: f32[8,1], index: 13, kind: input, shape index: {}]
  %s14 = inlined_call_operand.vmem [shape: bf16[8,80], index: 14, kind: input, shape index: {}]
  %s15 = inlined_call_operand.vmem [shape: f32[8,1], index: 15, kind: input, shape index: {}]
  %s16 = inlined_call_operand.vmem [shape: f32[8,1], index: 16, kind: input, shape index: {}]
  %s17 = inlined_call_operand.vmem [shape: f32[8,1], index: 17, kind: input, shape index: {}]
  %s18 = inlined_call_operand.vmem [shape: bf16[8,128], index: 18, kind: input, shape index: {}]
  %s19 = inlined_call_operand.vmem [shape: f32[8,1], index: 19, kind: input, shape index: {}]
  %s20 = inlined_call_operand.hbm [shape: f32[8,128], index: 20, kind: output, shape index: {}]
  %s21 = sld [smem:[#allocation0]]
  $region94: #{tpu_custom_call.1} parent=0
    _
  %s23 = ssub.s32 1, %s21
  %s24 = scalar_select 0, %s23, %s21
  $region1: #{tpu_custom_call.1} parent=0
    #allocation5 [shape = 'u8[393216]{0}', space=vmem, size = 0x60000, scoped, tag = 'input window, operand 5, single buffered']
    #allocation6 [shape = 's32[1]{0}', space=sflag, size = 0x4, scoped, tag = 'scoped memory for tpu_custom_call.1']
    #allocation7 [shape = 's32[1]{0}', space=sflag, size = 0x4, scoped, tag = 'scoped memory for tpu_custom_call.1']
    #allocation8 [shape = 'u8[4096]{0}', space=vmem, size = 0x1000, scoped, tag = 'output window, operand 0, single buffered']
    %25 = vsyncpa [#allocation6], 0
    %26 = vsyncpa [#allocation7], 0
    // Predicated region
    $region2: #{tpu_custom_call.1} parent=1 // pred_check
      _
    $region3: #{tpu_custom_call.1} parent=1 // pred_check_branch
      %28 = sbr.rel (0) target = $region5
    $region4: #{tpu_custom_call.1} parent=1 // pred_region
      _
    $region5: #{tpu_custom_call.1} parent=1 // pred_fallthru
      _
    // Predicated region
    $region6: #{tpu_custom_call.1} parent=1 // pred_check
      _
    $region7: #{tpu_custom_call.1} parent=1 // pred_check_branch
      %30 = sbr.rel (0) target = $region9
    $region8: #{tpu_custom_call.1} parent=1 // pred_region
      _
    $region9: #{tpu_custom_call.1} parent=1 // pred_fallthru
      _
    // Predicated region
    $region10: #{tpu_custom_call.1} parent=1 // pred_check
      _
    $region11: #{tpu_custom_call.1} parent=1 // pred_check_branch
      %32 = sbr.rel (0) target = $region13
    $region12: #{tpu_custom_call.1} parent=1 // pred_region
      _
    $region13: #{tpu_custom_call.1} parent=1 // pred_fallthru
      _
    // Predicated region
    $region14: #{tpu_custom_call.1} parent=1 // pred_check
      _
    $region15: #{tpu_custom_call.1} parent=1 // pred_check_branch
      %34 = sbr.rel (0) target = $region17
    $region16: #{tpu_custom_call.1} parent=1 // pred_region
      _
    $region17: #{tpu_custom_call.1} parent=1 // pred_fallthru
      _
    // Predicated region
    $region18: #{tpu_custom_call.1} parent=1 // pred_check
      _
    $region19: #{tpu_custom_call.1} parent=1 // pred_check_branch
      %36 = sbr.rel (0) target = $region21
    $region20: #{tpu_custom_call.1} parent=1 // pred_region
      _
    $region21: #{tpu_custom_call.1} parent=1 // pred_fallthru
      _
    // Predicated region
    $region22: #{tpu_custom_call.1} parent=1 // pred_check
      _
    $region23: #{tpu_custom_call.1} parent=1 // pred_check_branch
      %38 = sbr.rel (0) target = $region25
    $region24: #{tpu_custom_call.1} parent=1 // pred_region
      %s40 = ssub.s32 12288, 12288
      %41 = vsyncadd [#allocation6], %s40
      %s42 = sshll.u32 [#allocation5], 4
      %s43 = int_to_ptr.vmem [resolvable:$true] %s42
      %48 = dma.hbm_to_vmem [thread:$0]  %s5, 12288, %s43, [#allocation6], 128, 128, 8
    $region25: #{tpu_custom_call.1} parent=1 // pred_fallthru
      _
    // Predicated region
    $region26: #{tpu_custom_call.1} parent=1 // pred_check
      _
    $region27: #{tpu_custom_call.1} parent=1 // pred_check_branch
      %50 = sbr.rel (0) target = $region29
    $region28: #{tpu_custom_call.1} parent=1 // pred_region
      _
    $region29: #{tpu_custom_call.1} parent=1 // pred_fallthru
      _
    // Predicated region
    $region30: #{tpu_custom_call.1} parent=1 // pred_check
      _
    $region31: #{tpu_custom_call.1} parent=1 // pred_check_branch
      %52 = sbr.rel (0) target = $region33
    $region32: #{tpu_custom_call.1} parent=1 // pred_region
      _
    $region33: #{tpu_custom_call.1} parent=1 // pred_fallthru
      _
    // Predicated region
    $region34: #{tpu_custom_call.1} parent=1 // pred_check
      _
    $region35: #{tpu_custom_call.1} parent=1 // pred_check_branch
      %54 = sbr.rel (0) target = $region37
    $region36: #{tpu_custom_call.1} parent=1 // pred_region
      _
    $region37: #{tpu_custom_call.1} parent=1 // pred_fallthru
      _
    // Predicated region
    $region38: #{tpu_custom_call.1} parent=1 // pred_check
      _
    $region39: #{tpu_custom_call.1} parent=1 // pred_check_branch
      %56 = sbr.rel (0) target = $region41
    $region40: #{tpu_custom_call.1} parent=1 // pred_region
      _
    $region41: #{tpu_custom_call.1} parent=1 // pred_fallthru
      _
    // Predicated region
    $region42: #{tpu_custom_call.1} parent=1 // pred_check
      _
    $region43: #{tpu_custom_call.1} parent=1 // pred_check_branch
      %58 = sbr.rel (0) target = $region45
    $region44: #{tpu_custom_call.1} parent=1 // pred_region
      _
    $region45: #{tpu_custom_call.1} parent=1 // pred_fallthru
      _
    // Predicated region
    $region46: #{tpu_custom_call.1} parent=1 // pred_check
      _
    $region47: #{tpu_custom_call.1} parent=1 // pred_check_branch
      %60 = sbr.rel (0) target = $region49
    $region48: #{tpu_custom_call.1} parent=1 // pred_region
      _
    $region49: #{tpu_custom_call.1} parent=1 // pred_fallthru
      _
    // Predicated region
    $region50: #{tpu_custom_call.1} parent=1 // pred_check
      _
    $region51: #{tpu_custom_call.1} parent=1 // pred_check_branch
      %62 = sbr.rel (0) target = $region53
    $region52: #{tpu_custom_call.1} parent=1 // pred_region
      _
    $region53: #{tpu_custom_call.1} parent=1 // pred_fallthru
      _
    // Predicated region
    $region54: #{tpu_custom_call.1} parent=1 // pred_check
      _
    $region55: #{tpu_custom_call.1} parent=1 // pred_check_branch
      %64 = sbr.rel (0) target = $region57
    $region56: #{tpu_custom_call.1} parent=1 // pred_region
      _
    $region57: #{tpu_custom_call.1} parent=1 // pred_fallthru
      _
    // Predicated region
    $region58: #{tpu_custom_call.1} parent=1 // pred_check
      _
    $region59: #{tpu_custom_call.1} parent=1 // pred_check_branch
      %66 = sbr.rel (0) target = $region61
    $region60: #{tpu_custom_call.1} parent=1 // pred_region
      _
    $region61: #{tpu_custom_call.1} parent=1 // pred_fallthru
      _
    // Predicated region
    $region62: #{tpu_custom_call.1} parent=1 // pred_check
      _
    $region63: #{tpu_custom_call.1} parent=1 // pred_check_branch
      %68 = sbr.rel (0) target = $region65
    $region64: #{tpu_custom_call.1} parent=1 // pred_region
      _
    $region65: #{tpu_custom_call.1} parent=1 // pred_fallthru
      _
    // Predicated region
    $region66: #{tpu_custom_call.1} parent=1 // pred_check
      _
    $region67: #{tpu_custom_call.1} parent=1 // pred_check_branch
      %70 = sbr.rel (0) target = $region69
    $region68: #{tpu_custom_call.1} parent=1 // pred_region
      _
    $region69: #{tpu_custom_call.1} parent=1 // pred_fallthru
      _
    // Predicated region
    $region70: #{tpu_custom_call.1} parent=1 // pred_check
      _
    $region71: #{tpu_custom_call.1} parent=1 // pred_check_branch
      %72 = sbr.rel (0) target = $region73
    $region72: #{tpu_custom_call.1} parent=1 // pred_region
      _
    $region73: #{tpu_custom_call.1} parent=1 // pred_fallthru
      _
    // Predicated region
    $region74: #{tpu_custom_call.1} parent=1 // pred_check
      _
    $region75: #{tpu_custom_call.1} parent=1 // pred_check_branch
      %74 = sbr.rel (0) target = $region77
    $region76: #{tpu_custom_call.1} parent=1 // pred_region
      _
    $region77: #{tpu_custom_call.1} parent=1 // pred_fallthru
      _
    // Predicated region
    $region78: #{tpu_custom_call.1} parent=1 // pred_check
      _
    $region79: #{tpu_custom_call.1} parent=1 // pred_check_branch
      %76 = sbr.rel (0) target = $region81
    $region80: #{tpu_custom_call.1} parent=1 // pred_region
      _
    $region81: #{tpu_custom_call.1} parent=1 // pred_fallthru
      _
    // Predicated region
    $region82: #{tpu_custom_call.1} parent=1 // pred_check
      _
    $region83: #{tpu_custom_call.1} parent=1 // pred_check_branch
      %78 = sbr.rel (0) target = $region85
    $region84: #{tpu_custom_call.1} parent=1 // pred_region
      %79 = dma.done [#allocation6], 12288
    $region85: #{tpu_custom_call.1} parent=1 // pred_fallthru
      _
    %v81 = vld [vmem:[%s4] sm:$0x3f]
    %v83 = vlaneseq
    %v84 = vshrl.u32 %v83, 7
    %v85 = vsub.s32 0, %v84
    %v86 = vrot.slane %v81, %v85
    %v87 = vlaneseq
    %v88 = vshrl.u32 %v87, 7
    %v89 = vsub.s32 1, %v88
    %v90 = vrot.slane %v81, %v89
    %v91 = vlaneseq
    %v92 = vshrl.u32 %v91, 7
    %v93 = vsub.s32 2, %v92
    %v94 = vrot.slane %v81, %v93
    %v95 = vlaneseq
    %v96 = vshrl.u32 %v95, 7
    %v97 = vsub.s32 3, %v96
    %v98 = vrot.slane %v81, %v97
    %v99 = vlaneseq
    %v100 = vshrl.u32 %v99, 7
    %v101 = vsub.s32 4, %v100
    %v102 = vrot.slane %v81, %v101
    %v103 = vlaneseq
    %v104 = vshrl.u32 %v103, 7
    %v105 = vsub.s32 5, %v104
    %v106 = vrot.slane %v81, %v105
    %113 = vst [vmem:[#allocation2] sm:$0xff] 0.0
    %114 = vst [vmem:[#allocation2 + $0x38] sm:$0xff] 0.0
    %115 = vst [vmem:[#allocation3] sm:$0xff] 0.0
    %116 = vst [vmem:[#allocation3 + $0x38] sm:$0xff] 0.0
    %v117 = vld [vmem:[%s0] sm:$0xff]
    %v118 = vld [vmem:[%s0 + $0x8] sm:$0xff]
    %v119 = vld [vmem:[%s0 + $0x10] sm:$0xff]
    %v120 = vld [vmem:[%s0 + $0x18] sm:$0xff]
    %v121 = vld [vmem:[%s0 + $0x20] sm:$0xff]
    %v122 = vld [vmem:[%s0 + $0x28] sm:$0xff]
    %v123 = vld [vmem:[%s0 + $0x30] sm:$0xff]
    %131 = vrot.lane.b32.xlu0 %v117, 127
    %v132 = vpop.permute.xlu0 %131
    %133 = vrot.lane.b32.xlu0 %v118, 127
    %v134 = vpop.permute.xlu0 %133
    %135 = vrot.lane.b32.xlu0 %v119, 127
    %v136 = vpop.permute.xlu0 %135
    %137 = vrot.lane.b32.xlu0 %v120, 127
    %v138 = vpop.permute.xlu0 %137
    %139 = vrot.lane.b32.xlu0 %v121, 127
    %v140 = vpop.permute.xlu0 %139
    %141 = vrot.lane.b32.xlu0 %v122, 127
    %v142 = vpop.permute.xlu0 %141
    %143 = vrot.lane.b32.xlu0 %v123, 127
    %v144 = vpop.permute.xlu0 %143
    %vm145 = vcmask 1039360
    %v146 = vsel %vm145, %v132, %v134
    %v147 = vsel %vm145, %v134, %v136
    %v148 = vsel %vm145, %v136, %v138
    %v149 = vsel %vm145, %v138, %v140
    %v150 = vsel %vm145, %v140, %v142
    %v151 = vsel %vm145, %v142, %v144
    %v159 = vpack.c.bf16 %v146, %v117
    %v160 = vpack.c.bf16 %v147, %v118
    %v161 = vpack.c.bf16 %v148, %v119
    %v162 = vpack.c.bf16 %v149, %v120
    %v163 = vpack.c.bf16 %v150, %v121
    %v164 = vpack.c.bf16 %v151, %v122
    %v165 = vpack.c.bf16 %v144, %v123
    %173 = vrot.lane.b32.xlu0 %v159, 19
    %v174 = vpop.permute.xlu0 %173
    %175 = vrot.lane.b32.xlu0 %v160, 19
    %v176 = vpop.permute.xlu0 %175
    %177 = vrot.lane.b32.xlu0 %v161, 19
    %v178 = vpop.permute.xlu0 %177
    %179 = vrot.lane.b32.xlu0 %v162, 19
    %v180 = vpop.permute.xlu0 %179
    %181 = vrot.lane.b32.xlu0 %v163, 19
    %v182 = vpop.permute.xlu0 %181
    %183 = vrot.lane.b32.xlu0 %v164, 19
    %v184 = vpop.permute.xlu0 %183
    %185 = vrot.lane.b32.xlu0 %v165, 19
    %v186 = vpop.permute.xlu0 %185
    %vm187 = vcmask 154624
    %v188 = vsel %vm187, %v174, %v176
    %v189 = vsel %vm187, %v176, %v178
    %v190 = vsel %vm187, %v178, %v180
    %v191 = vsel %vm187, %v180, %v182
    %v192 = vsel %vm187, %v182, %v184
    %v193 = vsel %vm187, %v184, %v186
    %200 = vst [vmem:[#allocation4] sm:$0xff] %v188
    %201 = vst [vmem:[#allocation4 + $0x8] sm:$0xff] %v189
    %202 = vst [vmem:[#allocation4 + $0x10] sm:$0xff] %v190
    %203 = vst [vmem:[#allocation4 + $0x18] sm:$0xff] %v191
    %204 = vst [vmem:[#allocation4 + $0x20] sm:$0xff] %v192
    %205 = vst [vmem:[#allocation4 + $0x28] sm:$0xff] %v193
    %v206 = vld [vmem:[%s0] sm:$0xff]
    %v207 = vld [vmem:[%s0 + $0x8] sm:$0xff]
    %v208 = vld [vmem:[%s0 + $0x10] sm:$0xff]
    %v209 = vld [vmem:[%s0 + $0x18] sm:$0xff]
    %v210 = vld [vmem:[%s0 + $0x20] sm:$0xff]
    %v211 = vld [vmem:[%s0 + $0x28] sm:$0xff]
    %v212 = vld [vmem:[%s0 + $0x30] sm:$0xff]
    %220 = vrot.lane.b32.xlu0 %v206, 112
    %v221 = vpop.permute.xlu0 %220
    %222 = vrot.lane.b32.xlu0 %v207, 112
    %v223 = vpop.permute.xlu0 %222
    %224 = vrot.lane.b32.xlu0 %v208, 112
    %v225 = vpop.permute.xlu0 %224
    %226 = vrot.lane.b32.xlu0 %v209, 112
    %v227 = vpop.permute.xlu0 %226
    %228 = vrot.lane.b32.xlu0 %v210, 112
    %v229 = vpop.permute.xlu0 %228
    %230 = vrot.lane.b32.xlu0 %v211, 112
    %v231 = vpop.permute.xlu0 %230
    %232 = vrot.lane.b32.xlu0 %v212, 112
    %v233 = vpop.permute.xlu0 %232
    %vm234 = vcmask 916480
    %v235 = vsel %vm234, %v221, %v223
    %v236 = vsel %vm234, %v223, %v225
    %v237 = vsel %vm234, %v225, %v227
    %v238 = vsel %vm234, %v227, %v229
    %v239 = vsel %vm234, %v229, %v231
    %v240 = vsel %vm234, %v231, %v233
    %v248 = vpack.c.bf16 %v235, %v206
    %v249 = vpack.c.bf16 %v236, %v207
    %v250 = vpack.c.bf16 %v237, %v208
    %v251 = vpack.c.bf16 %v238, %v209
    %v252 = vpack.c.bf16 %v239, %v210
    %v253 = vpack.c.bf16 %v240, %v211
    %v254 = vpack.c.bf16 %v233, %v212
    %262 = vrot.lane.b32.xlu0 %v248, 17
    %v263 = vpop.permute.xlu0 %262
    %264 = vrot.lane.b32.xlu0 %v249, 17
    %v265 = vpop.permute.xlu0 %264
    %266 = vrot.lane.b32.xlu0 %v250, 17
    %v267 = vpop.permute.xlu0 %266
    %268 = vrot.lane.b32.xlu0 %v251, 17
    %v269 = vpop.permute.xlu0 %268
    %270 = vrot.lane.b32.xlu0 %v252, 17
    %v271 = vpop.permute.xlu0 %270
    %272 = vrot.lane.b32.xlu0 %v253, 17
    %v273 = vpop.permute.xlu0 %272
    %274 = vrot.lane.b32.xlu0 %v254, 17
    %v275 = vpop.permute.xlu0 %274
    %vm276 = vcmask 138240
    %v277 = vsel %vm276, %v263, %v265
    %v278 = vsel %vm276, %v265, %v267
    %v279 = vsel %vm276, %v267, %v269
    %v280 = vsel %vm276, %v269, %v271
    %v281 = vsel %vm276, %v271, %v273
    %v282 = vsel %vm276, %v273, %v275
    %289 = vst [vmem:[#allocation4 + $0x30] sm:$0xff] %v277
    %290 = vst [vmem:[#allocation4 + $0x38] sm:$0xff] %v278
    %291 = vst [vmem:[#allocation4 + $0x40] sm:$0xff] %v279
    %292 = vst [vmem:[#allocation4 + $0x48] sm:$0xff] %v280
    %293 = vst [vmem:[#allocation4 + $0x50] sm:$0xff] %v281
    %294 = vst [vmem:[#allocation4 + $0x58] sm:$0xff] %v282
    %v295 = vld [vmem:[%s0 + $0x8] sm:$0xff]
    %v296 = vld [vmem:[%s0 + $0x10] sm:$0xff]
    %v297 = vld [vmem:[%s0 + $0x18] sm:$0xff]
    %v298 = vld [vmem:[%s0 + $0x20] sm:$0xff]
    %v299 = vld [vmem:[%s0 + $0x28] sm:$0xff]
    %v300 = vld [vmem:[%s0 + $0x30] sm:$0xff]
    %v301 = vld [vmem:[%s0 + $0x8] sm:$0xff]
    %v302 = vld [vmem:[%s0 + $0x10] sm:$0xff]
    %v303 = vld [vmem:[%s0 + $0x18] sm:$0xff]
    %v304 = vld [vmem:[%s0 + $0x20] sm:$0xff]
    %v305 = vld [vmem:[%s0 + $0x28] sm:$0xff]
    %v306 = vld [vmem:[%s0 + $0x30] sm:$0xff]
    %v307 = vld [vmem:[%s0 + $0x38] sm:$0xff]
    %315 = vrot.lane.b32.xlu0 %v301, 127
    %v316 = vpop.permute.xlu0 %315
    %317 = vrot.lane.b32.xlu0 %v302, 127
    %v318 = vpop.permute.xlu0 %317
    %319 = vrot.lane.b32.xlu0 %v303, 127
    %v320 = vpop.permute.xlu0 %319
    %321 = vrot.lane.b32.xlu0 %v304, 127
    %v322 = vpop.permute.xlu0 %321
    %323 = vrot.lane.b32.xlu0 %v305, 127
    %v324 = vpop.permute.xlu0 %323
    %325 = vrot.lane.b32.xlu0 %v306, 127
    %v326 = vpop.permute.xlu0 %325
    %327 = vrot.lane.b32.xlu0 %v307, 127
    %v328 = vpop.permute.xlu0 %327
    %v329 = vsel %vm145, %v316, %v318
    %v330 = vsel %vm145, %v318, %v320
    %v331 = vsel %vm145, %v320, %v322
    %v332 = vsel %vm145, %v322, %v324
    %v333 = vsel %vm145, %v324, %v326
    %v334 = vsel %vm145, %v326, %v328
    %v341 = vpack.c.bf16 %v329, %v295
    %v342 = vpack.c.bf16 %v330, %v296
    %v343 = vpack.c.bf16 %v331, %v297
    %v344 = vpack.c.bf16 %v332, %v298
    %v345 = vpack.c.bf16 %v333, %v299
    %v346 = vpack.c.bf16 %v334, %v300
    %347 = vst [vmem:[#allocation4 + $0x60] sm:$0xff] %v341
    %348 = vst [vmem:[#allocation4 + $0x68] sm:$0xff] %v342
    %349 = vst [vmem:[#allocation4 + $0x70] sm:$0xff] %v343
    %350 = vst [vmem:[#allocation4 + $0x78] sm:$0xff] %v344
    %351 = vst [vmem:[#allocation4 + $0x80] sm:$0xff] %v345
    %352 = vst [vmem:[#allocation4 + $0x88] sm:$0xff] %v346
    %v353 = vld [vmem:[%s0 + $0x8] sm:$0xff]
    %v354 = vld [vmem:[%s0 + $0x10] sm:$0xff]
    %v355 = vld [vmem:[%s0 + $0x18] sm:$0xff]
    %v356 = vld [vmem:[%s0 + $0x20] sm:$0xff]
    %v357 = vld [vmem:[%s0 + $0x28] sm:$0xff]
    %v358 = vld [vmem:[%s0 + $0x30] sm:$0xff]
    %v359 = vld [vmem:[%s0 + $0x38] sm:$0xff]
    %367 = vrot.lane.b32.xlu0 %v353, 127
    %v368 = vpop.permute.xlu0 %367
    %369 = vrot.lane.b32.xlu0 %v354, 127
    %v370 = vpop.permute.xlu0 %369
    %371 = vrot.lane.b32.xlu0 %v355, 127
    %v372 = vpop.permute.xlu0 %371
    %373 = vrot.lane.b32.xlu0 %v356, 127
    %v374 = vpop.permute.xlu0 %373
    %375 = vrot.lane.b32.xlu0 %v357, 127
    %v376 = vpop.permute.xlu0 %375
    %377 = vrot.lane.b32.xlu0 %v358, 127
    %v378 = vpop.permute.xlu0 %377
    %379 = vrot.lane.b32.xlu0 %v359, 127
    %v380 = vpop.permute.xlu0 %379
    %v381 = vsel %vm145, %v368, %v370
    %v382 = vsel %vm145, %v370, %v372
    %v383 = vsel %vm145, %v372, %v374
    %v384 = vsel %vm145, %v374, %v376
    %v385 = vsel %vm145, %v376, %v378
    %v386 = vsel %vm145, %v378, %v380
    %v394 = vpack.c.bf16 %v381, %v353
    %v395 = vpack.c.bf16 %v382, %v354
    %v396 = vpack.c.bf16 %v383, %v355
    %v397 = vpack.c.bf16 %v384, %v356
    %v398 = vpack.c.bf16 %v385, %v357
    %v399 = vpack.c.bf16 %v386, %v358
    %v400 = vpack.c.bf16 %v380, %v359
    %408 = vrot.lane.b32.xlu0 %v394, 111
    %v409 = vpop.permute.xlu0 %408
    %410 = vrot.lane.b32.xlu0 %v395, 111
    %v411 = vpop.permute.xlu0 %410
    %412 = vrot.lane.b32.xlu0 %v396, 111
    %v413 = vpop.permute.xlu0 %412
    %414 = vrot.lane.b32.xlu0 %v397, 111
    %v415 = vpop.permute.xlu0 %414
    %416 = vrot.lane.b32.xlu0 %v398, 111
    %v417 = vpop.permute.xlu0 %416
    %418 = vrot.lane.b32.xlu0 %v399, 111
    %v419 = vpop.permute.xlu0 %418
    %420 = vrot.lane.b32.xlu0 %v400, 111
    %v421 = vpop.permute.xlu0 %420
    %vm422 = vcmask 908288
    %v423 = vsel %vm422, %v409, %v411
    %v424 = vsel %vm422, %v411, %v413
    %v425 = vsel %vm422, %v413, %v415
    %v426 = vsel %vm422, %v415, %v417
    %v427 = vsel %vm422, %v417, %v419
    %v428 = vsel %vm422, %v419, %v421
    %435 = vst [vmem:[#allocation4 + $0x90] sm:$0xff] %v423
    %436 = vst [vmem:[#allocation4 + $0x98] sm:$0xff] %v424
    %437 = vst [vmem:[#allocation4 + $0xa0] sm:$0xff] %v425
    %438 = vst [vmem:[#allocation4 + $0xa8] sm:$0xff] %v426
    %439 = vst [vmem:[#allocation4 + $0xb0] sm:$0xff] %v427
    %440 = vst [vmem:[#allocation4 + $0xb8] sm:$0xff] %v428
    %v441 = vld [vmem:[%s0 + $0x8] sm:$0xff]
    %v442 = vld [vmem:[%s0 + $0x10] sm:$0xff]
    %v443 = vld [vmem:[%s0 + $0x18] sm:$0xff]
    %v444 = vld [vmem:[%s0 + $0x20] sm:$0xff]
    %v445 = vld [vmem:[%s0 + $0x28] sm:$0xff]
    %v446 = vld [vmem:[%s0 + $0x30] sm:$0xff]
    %v447 = vld [vmem:[%s0 + $0x38] sm:$0xff]
    %v448 = vpack.c.bf16 0.0, %v441
    %v449 = vpack.c.bf16 0.0, %v442
    %v450 = vpack.c.bf16 0.0, %v443
    %v451 = vpack.c.bf16 0.0, %v444
    %v452 = vpack.c.bf16 0.0, %v445
    %v453 = vpack.c.bf16 0.0, %v446
    %v454 = vpack.c.bf16 0.0, %v447
    %462 = vrot.lane.b32.xlu0 %v448, 109
    %v463 = vpop.permute.xlu0 %462
    %464 = vrot.lane.b32.xlu0 %v449, 109
    %v465 = vpop.permute.xlu0 %464
    %466 = vrot.lane.b32.xlu0 %v450, 109
    %v467 = vpop.permute.xlu0 %466
    %468 = vrot.lane.b32.xlu0 %v451, 109
    %v469 = vpop.permute.xlu0 %468
    %470 = vrot.lane.b32.xlu0 %v452, 109
    %v471 = vpop.permute.xlu0 %470
    %472 = vrot.lane.b32.xlu0 %v453, 109
    %v473 = vpop.permute.xlu0 %472
    %474 = vrot.lane.b32.xlu0 %v454, 109
    %v475 = vpop.permute.xlu0 %474
    %vm476 = vcmask 891904
    %v477 = vsel %vm476, %v463, %v465
    %v478 = vsel %vm476, %v465, %v467
    %v479 = vsel %vm476, %v467, %v469
    %v480 = vsel %vm476, %v469, %v471
    %v481 = vsel %vm476, %v471, %v473
    %v482 = vsel %vm476, %v473, %v475
    %489 = vst [vmem:[#allocation4 + $0xc0] sm:$0xff] %v477
    %490 = vst [vmem:[#allocation4 + $0xc8] sm:$0xff] %v478
    %491 = vst [vmem:[#allocation4 + $0xd0] sm:$0xff] %v479
    %492 = vst [vmem:[#allocation4 + $0xd8] sm:$0xff] %v480
    %493 = vst [vmem:[#allocation4 + $0xe0] sm:$0xff] %v481
    %494 = vst [vmem:[#allocation4 + $0xe8] sm:$0xff] %v482
    %v495 = vld [vmem:[%s6] sm:$0xf]
    %v496 = vld [vmem:[#allocation4] sm:$0xff]
    %v497 = vld [vmem:[#allocation4 + $0x8] sm:$0xff]
    %v498 = vld [vmem:[#allocation4 + $0x10] sm:$0xff]
    %v499 = vld [vmem:[#allocation4 + $0x18] sm:$0xff]
    %v500 = vld [vmem:[#allocation4 + $0x20] sm:$0xff]
    %v501 = vld [vmem:[#allocation4 + $0x28] sm:$0xff]
    %v502 = vld [vmem:[#allocation4 + $0x30] sm:$0xff]
    %v503 = vld [vmem:[#allocation4 + $0x38] sm:$0xff]
    %v504 = vld [vmem:[#allocation4 + $0x40] sm:$0xff]
    %v505 = vld [vmem:[#allocation4 + $0x48] sm:$0xff]
    %v506 = vld [vmem:[#allocation4 + $0x50] sm:$0xff]
    %v507 = vld [vmem:[#allocation4 + $0x58] sm:$0xff]
    %v508 = vld [vmem:[#allocation4 + $0x60] sm:$0xff]
    %v509 = vld [vmem:[#allocation4 + $0x68] sm:$0xff]
    %v510 = vld [vmem:[#allocation4 + $0x70] sm:$0xff]
    %v511 = vld [vmem:[#allocation4 + $0x78] sm:$0xff]
    %v512 = vld [vmem:[#allocation4 + $0x80] sm:$0xff]
    %v513 = vld [vmem:[#allocation4 + $0x88] sm:$0xff]
    %v514 = vld [vmem:[#allocation4 + $0x90] sm:$0xff]
    %v515 = vld [vmem:[#allocation4 + $0x98] sm:$0xff]
    %v516 = vld [vmem:[#allocation4 + $0xa0] sm:$0xff]
    %v517 = vld [vmem:[#allocation4 + $0xa8] sm:$0xff]
    %v518 = vld [vmem:[#allocation4 + $0xb0] sm:$0xff]
    %v519 = vld [vmem:[#allocation4 + $0xb8] sm:$0xff]
    %v520 = vld [vmem:[#allocation4 + $0xc0] sm:$0xff]
    %v521 = vld [vmem:[#allocation4 + $0xc8] sm:$0xff]
    %v522 = vld [vmem:[#allocation4 + $0xd0] sm:$0xff]
    %v523 = vld [vmem:[#allocation4 + $0xd8] sm:$0xff]
    %v524 = vld [vmem:[#allocation4 + $0xe0] sm:$0xff]
    %v525 = vld [vmem:[#allocation4 + $0xe8] sm:$0xff]
    %v526 = vld [vmem:[%s7] sm:$0xff]
    %528 = vset.pattern.permute.xlu0 0
    %529 = vperm.xlu0 %528, %v526
    %v530 = vpop.permute.xlu0 %529
    %vm532 = vcmask 654336
    %v534 = vsel %vm532, %v495, 0
    %536 = vmatprep.subr.bf16.mxu0 %v497
    %537 = vmatpush1.bf16.msra.mxu0 %v496
    %538 = vmatprep.subr.bf16.mxu0 %v503
    %539 = vmatpush1.bf16.msra.mxu0 %v502
    %540 = vmatprep.subr.bf16.mxu0 %v509
    %541 = vmatpush1.bf16.msra.mxu0 %v508
    %542 = vmatprep.subr.bf16.mxu0 %v515
    %543 = vmatpush1.bf16.msra.mxu0 %v514
    %544 = vmatprep.subr.bf16.mxu0 %v521
    %545 = vmatpush1.bf16.msra.mxu0 %v520
    %546 = vmatprep.subr.bf16.mxu0 0
    %547 = vmatpush1.bf16.msra.mxu0 0
    %548 = vmatprep.subr.bf16.mxu0 0
    %549 = vmatpush1.bf16.msra.mxu0 0
    %550 = vmatprep.subr.bf16.mxu0 0
    %551 = vmatpush1.bf16.msra.mxu0 0
    %552 = vmatprep.subr.bf16.mxu0 0
    %553 = vmatpush1.bf16.msra.mxu0 0
    %554 = vmatprep.subr.bf16.mxu0 0
    %555 = vmatpush1.bf16.msra.mxu0 0
    %556 = vmatprep.subr.bf16.mxu0 0
    %557 = vmatpush1.bf16.msra.mxu0 0
    %558 = vmatprep.subr.bf16.mxu0 0
    %559 = vmatpush1.bf16.msra.mxu0 0
    %560 = vmatprep.subr.bf16.mxu0 0
    %561 = vmatpush1.bf16.msra.mxu0 0
    %562 = vmatprep.subr.bf16.mxu0 0
    %563 = vmatpush1.bf16.msra.mxu0 0
    %564 = vmatprep.subr.bf16.mxu0 0
    %565 = vmatpush1.bf16.msra.mxu0 0
    %566 = vmatprep.subr.bf16.mxu0 0
    %567 = vmatpush1.bf16.msra.mxu0 0
    %568 = vmatprep.mubr.bf16.mxu0 0
    %569 = vmatmul.mubr.bf16.gmra.mrb[0].mxu0 %v534
    %v570 = vpop.f32.mrb[0].mxu0
    %v571 = vadd.f32 %v530, %v570
    %v572 = vpop.f32.mrb[0].mxu0
    %v573 = vadd.f32 %v530, %v572
    %v574 = vpop.f32.mrb[0].mxu0
    %v575 = vpop.f32.mrb[0].mxu0
    %576 = vdwg.mxu0
    %577 = vmatprep.subr.bf16.mxu0 %v499
    %578 = vmatpush1.bf16.msra.mxu0 %v498
    %579 = vmatprep.subr.bf16.mxu0 %v505
    %580 = vmatpush1.bf16.msra.mxu0 %v504
    %581 = vmatprep.subr.bf16.mxu0 %v511
    %582 = vmatpush1.bf16.msra.mxu0 %v510
    %583 = vmatprep.subr.bf16.mxu0 %v517
    %584 = vmatpush1.bf16.msra.mxu0 %v516
    %585 = vmatprep.subr.bf16.mxu0 %v523
    %586 = vmatpush1.bf16.msra.mxu0 %v522
    %587 = vmatprep.subr.bf16.mxu0 0
    %588 = vmatpush1.bf16.msra.mxu0 0
    %589 = vmatprep.subr.bf16.mxu0 0
    %590 = vmatpush1.bf16.msra.mxu0 0
    %591 = vmatprep.subr.bf16.mxu0 0
    %592 = vmatpush1.bf16.msra.mxu0 0
    %593 = vmatprep.subr.bf16.mxu0 0
    %594 = vmatpush1.bf16.msra.mxu0 0
    %595 = vmatprep.subr.bf16.mxu0 0
    %596 = vmatpush1.bf16.msra.mxu0 0
    %597 = vmatprep.subr.bf16.mxu0 0
    %598 = vmatpush1.bf16.msra.mxu0 0
    %599 = vmatprep.subr.bf16.mxu0 0
    %600 = vmatpush1.bf16.msra.mxu0 0
    %601 = vmatprep.subr.bf16.mxu0 0
    %602 = vmatpush1.bf16.msra.mxu0 0
    %603 = vmatprep.subr.bf16.mxu0 0
    %604 = vmatpush1.bf16.msra.mxu0 0
    %605 = vmatprep.subr.bf16.mxu0 0
    %606 = vmatpush1.bf16.msra.mxu0 0
    %607 = vmatprep.subr.bf16.mxu0 0
    %608 = vmatpush1.bf16.msra.mxu0 0
    %609 = vmatprep.mubr.bf16.mxu0 0
    %610 = vmatmul.mubr.bf16.gmra.mrb[0].mxu0 %v534
    %v611 = vpop.f32.mrb[0].mxu0
    %v612 = vadd.f32 %v530, %v611
    %v613 = vpop.f32.mrb[0].mxu0
    %v614 = vadd.f32 %v530, %v613
    %v615 = vpop.f32.mrb[0].mxu0
    %v616 = vpop.f32.mrb[0].mxu0
    %617 = vdwg.mxu0
    %618 = vmatprep.subr.bf16.mxu0 %v501
    %619 = vmatpush1.bf16.msra.mxu0 %v500
    %620 = vmatprep.subr.bf16.mxu0 %v507
    %621 = vmatpush1.bf16.msra.mxu0 %v506
    %622 = vmatprep.subr.bf16.mxu0 %v513
    %623 = vmatpush1.bf16.msra.mxu0 %v512
    %624 = vmatprep.subr.bf16.mxu0 %v519
    %625 = vmatpush1.bf16.msra.mxu0 %v518
    %626 = vmatprep.subr.bf16.mxu0 %v525
    %627 = vmatpush1.bf16.msra.mxu0 %v524
    %628 = vmatprep.subr.bf16.mxu0 0
    %629 = vmatpush1.bf16.msra.mxu0 0
    %630 = vmatprep.subr.bf16.mxu0 0
    %631 = vmatpush1.bf16.msra.mxu0 0
    %632 = vmatprep.subr.bf16.mxu0 0
    %633 = vmatpush1.bf16.msra.mxu0 0
    %634 = vmatprep.subr.bf16.mxu0 0
    %635 = vmatpush1.bf16.msra.mxu0 0
    %636 = vmatprep.subr.bf16.mxu0 0
    %637 = vmatpush1.bf16.msra.mxu0 0
    %638 = vmatprep.subr.bf16.mxu0 0
    %639 = vmatpush1.bf16.msra.mxu0 0
    %640 = vmatprep.subr.bf16.mxu0 0
    %641 = vmatpush1.bf16.msra.mxu0 0
    %642 = vmatprep.subr.bf16.mxu0 0
    %643 = vmatpush1.bf16.msra.mxu0 0
    %644 = vmatprep.subr.bf16.mxu0 0
    %645 = vmatpush1.bf16.msra.mxu0 0
    %646 = vmatprep.subr.bf16.mxu0 0
    %647 = vmatpush1.bf16.msra.mxu0 0
    %648 = vmatprep.subr.bf16.mxu0 0
    %649 = vmatpush1.bf16.msra.mxu0 0
    %650 = vmatprep.mubr.bf16.mxu0 0
    %651 = vmatmul.mubr.bf16.gmra.mrb[0].mxu0 %v534
    %v652 = vpop.f32.mrb[0].mxu0
    %v653 = vadd.f32 %v530, %v652
    %v654 = vpop.f32.mrb[0].mxu0
    %v655 = vadd.f32 %v530, %v654
    %v656 = vpop.f32.mrb[0].mxu0
    %v657 = vpop.f32.mrb[0].mxu0
    %658 = vdwg.mxu0
    %v659 = vmax.f32 %v571, 0.0
    %v660 = vmax.f32 %v573, 0.0
    %v661 = vmax.f32 %v612, 0.0
    %v662 = vmax.f32 %v614, 0.0
    %v663 = vmax.f32 %v653, 0.0
    %v664 = vmax.f32 %v655, 0.0
    %v665 = vmul.f32 %v659, %v86
    %v666 = vmul.f32 %v660, %v90
    %v667 = vmul.f32 %v661, %v94
    %v668 = vmul.f32 %v662, %v98
    %v669 = vmul.f32 %v663, %v102
    %v670 = vmul.f32 %v664, %v106
    %v671 = vmul.f32 %v665, %v659
    %v672 = vmul.f32 %v666, %v660
    %v673 = vmul.f32 %v667, %v661
    %v674 = vmul.f32 %v668, %v662
    %v675 = vmul.f32 %v669, %v663
    %v676 = vmul.f32 %v670, %v664
    %v677 = vadd.f32 %v665, %v666
    %v678 = vadd.f32 %v677, %v667
    %v679 = vadd.f32 %v678, %v668
    %v680 = vadd.f32 %v679, %v669
    %v681 = vadd.f32 %v680, %v670
    %682 = vadd.xlane.f32.xlu0 %v681
    %v683 = vpop.xlane.xlu0 %682
    %v684 = vadd.f32 %v671, %v672
    %v685 = vadd.f32 %v684, %v673
    %v686 = vadd.f32 %v685, %v674
    %v687 = vadd.f32 %v686, %v675
    %v688 = vadd.f32 %v687, %v676
    %689 = vadd.xlane.f32.xlu0 %v688
    %v690 = vpop.xlane.xlu0 %689
    %v691 = vmul.f32 %v683, 0.001953125
    %v692 = vmul.f32 %v690, 0.001953125
    %v693 = vmul.f32 %v691, %v691
    %v694 = vsub.f32 %v692, %v693
    %v695 = vsub.f32 %v659, %v691
    %v696 = vsub.f32 %v660, %v691
    %v697 = vsub.f32 %v661, %v691
    %v698 = vsub.f32 %v662, %v691
    %v699 = vsub.f32 %v663, %v691
    %v700 = vsub.f32 %v664, %v691
    %v701 = vadd.f32 %v694, 1e-05
    %v702 = vrsqrt.pop %v701
    %v703 = vld [vmem:[%s8] sm:$0xff]
    %v704 = vmul.f32 %v702, %v703
    %706 = vset.pattern.permute.xlu0 0
    %707 = vperm.xlu0 %706, %v704
    %v708 = vpop.permute.xlu0 %707
    %v710 = vmul.f32 %v695, %v708
    %v711 = vmul.f32 %v696, %v708
    %v712 = vmul.f32 %v697, %v708
    %v713 = vmul.f32 %v698, %v708
    %v714 = vmul.f32 %v699, %v708
    %v715 = vmul.f32 %v700, %v708
    %v716 = vld [vmem:[%s9] sm:$0xff]
    %718 = vset.pattern.permute.xlu0 0
    %719 = vperm.xlu0 %718, %v716
    %v720 = vpop.permute.xlu0 %719
    %v722 = vadd.f32 %v710, %v720
    %v723 = vadd.f32 %v711, %v720
    %v724 = vadd.f32 %v712, %v720
    %v725 = vadd.f32 %v713, %v720
    %v726 = vadd.f32 %v714, %v720
    %v727 = vadd.f32 %v715, %v720
    %v728 = vld [vmem:[%s10] sm:$0xff]
    %v729 = vld [vmem:[%s1] sm:$0xff]
    %v730 = vld [vmem:[%s1 + $0x8] sm:$0xff]
    %v731 = vld [vmem:[%s1 + $0x10] sm:$0xff]
    %v732 = vld [vmem:[%s1 + $0x18] sm:$0xff]
    %v733 = vld [vmem:[%s11] sm:$0xff]
    %735 = vset.pattern.permute.xlu0 0
    %736 = vperm.xlu0 %735, %v733
    %v737 = vpop.permute.xlu0 %736
    %vm739 = vcmask 261120
    %v741 = vsel %vm739, %v728, 0
    %743 = vmatprep.subr.mxu0 0.0
    %744 = vmatpush1.msra.mxu0 %v729
    %745 = vmatprep.subr.mxu0 0.0
    %746 = vmatpush1.msra.mxu0 %v730
    %747 = vmatprep.subr.mxu0 0.0
    %748 = vmatpush1.msra.mxu0 %v731
    %749 = vmatprep.subr.mxu0 0.0
    %750 = vmatpush1.msra.mxu0 %v732
    %751 = vmatprep.subr.mxu0 0.0
    %752 = vmatpush1.msra.mxu0 0.0
    %753 = vmatprep.subr.mxu0 0.0
    %754 = vmatpush1.msra.mxu0 0.0
    %755 = vmatprep.subr.mxu0 0.0
    %756 = vmatpush1.msra.mxu0 0.0
    %757 = vmatprep.subr.mxu0 0.0
    %758 = vmatpush1.msra.mxu0 0.0
    %759 = vmatprep.subr.mxu0 0.0
    %760 = vmatpush1.msra.mxu0 0.0
    %761 = vmatprep.subr.mxu0 0.0
    %762 = vmatpush1.msra.mxu0 0.0
    %763 = vmatprep.subr.mxu0 0.0
    %764 = vmatpush1.msra.mxu0 0.0
    %765 = vmatprep.subr.mxu0 0.0
    %766 = vmatpush1.msra.mxu0 0.0
    %767 = vmatprep.subr.mxu0 0.0
    %768 = vmatpush1.msra.mxu0 0.0
    %769 = vmatprep.subr.mxu0 0.0
    %770 = vmatpush1.msra.mxu0 0.0
    %771 = vmatprep.subr.mxu0 0.0
    %772 = vmatpush1.msra.mxu0 0.0
    %773 = vmatprep.subr.mxu0 0.0
    %774 = vmatpush1.msra.mxu0 0.0
    %775 = vmatprep.subr.mxu0 0.0
    %776 = vmatpush1.msra.mxu0 0.0
    %777 = vmatprep.subr.mxu0 0.0
    %778 = vmatpush1.msra.mxu0 0.0
    %779 = vmatprep.subr.mxu0 0.0
    %780 = vmatpush1.msra.mxu0 0.0
    %781 = vmatprep.subr.mxu0 0.0
    %782 = vmatpush1.msra.mxu0 0.0
    %783 = vmatprep.subr.mxu0 0.0
    %784 = vmatpush1.msra.mxu0 0.0
    %785 = vmatprep.subr.mxu0 0.0
    %786 = vmatpush1.msra.mxu0 0.0
    %787 = vmatprep.subr.mxu0 0.0
    %788 = vmatpush1.msra.mxu0 0.0
    %789 = vmatprep.subr.mxu0 0.0
    %790 = vmatpush1.msra.mxu0 0.0
    %791 = vmatprep.subr.mxu0 0.0
    %792 = vmatpush1.msra.mxu0 0.0
    %793 = vmatprep.subr.mxu0 0.0
    %794 = vmatpush1.msra.mxu0 0.0
    %795 = vmatprep.subr.mxu0 0.0
    %796 = vmatpush1.msra.mxu0 0.0
    %797 = vmatprep.subr.mxu0 0.0
    %798 = vmatpush1.msra.mxu0 0.0
    %799 = vmatprep.subr.mxu0 0.0
    %800 = vmatpush1.msra.mxu0 0.0
    %801 = vmatprep.subr.mxu0 0.0
    %802 = vmatpush1.msra.mxu0 0.0
    %803 = vmatprep.subr.mxu0 0.0
    %804 = vmatpush1.msra.mxu0 0.0
    %805 = vmatprep.subr.mxu0 0.0
    %806 = vmatpush1.msra.mxu0 0.0
    %807 = vmatprep.mubr.f32.mxu0 0.0
    %808 = vmatmul.mubr.f32.gmra.mrb[0].mxu0 %v741
    %v809 = vpop.f32.mrb[0].mxu0
    %v810 = vadd.f32 %v737, %v809
    %v811 = vpop.f32.mrb[0].mxu0
    %812 = vdwg.mxu0
    %v813 = vmax.f32 %v810, 0.0
    %v814 = vld [vmem:[%s12] sm:$0xff]
    %v815 = vld [vmem:[%s2] sm:$0x1]
    %817 = vset.pattern.permute.xlu0 0
    %818 = vperm.xlu0 %817, %v814
    %v819 = vpop.permute.xlu0 %818
    %v822 = vlaneseq
    %v823 = vshrl.u32 %v822, 7
    %v824 = vsub.s32 0, %v823
    %v825 = vrot.slane %v815, %v824
    %v827 = vmul.f32 %v819, %v825
    %v828 = vld [vmem:[%s13] sm:$0xff]
    %830 = vset.pattern.permute.xlu0 0
    %831 = vperm.xlu0 %830, %v828
    %v832 = vpop.permute.xlu0 %831
    %v834 = vadd.f32 %v827, %v832
    %v835 = vmax.f32 %v834, 0.0
    %v836 = vadd.f32 %v813, %v835
    %v837 = vld [vmem:[%s3] sm:$0xff]
    %v838 = vld [vmem:[%s3 + $0x8] sm:$0xf]
    %v841 = vcombine.high %v837, %v837
    %v843 = vunpack.c.l.s4 1983009808
    %v844 = vunpack.c.0.s8 %v843
    %v845 = vlaneseq
    %v846 = vshrl.u32 %v845, 7
    %v847 = vsub.s32 %v844, %v846
    %v848 = vrot.slane %v837, %v847
    %v850 = vunpack.c.l.s4 1983009808
    %v851 = vunpack.c.0.s8 %v850
    %v852 = vlaneseq
    %v853 = vshrl.u32 %v852, 7
    %v854 = vsub.s32 %v851, %v853
    %v855 = vrot.slane %v841, %v854
    %v856 = vcombine.high %v848, %v848
    %v857 = vcombine.high %v855, %v855
    %v859 = vunpack.c.l.s4 1983009808
    %v860 = vunpack.c.0.s8 %v859
    %v861 = vlaneseq
    %v862 = vshrl.u32 %v861, 7
    %v863 = vsub.s32 %v860, %v862
    %v864 = vrot.slane %v838, %v863
    %v865 = vcombine.high %v864, %v864
    %vm866 = vcmask 15360
    %v868 = vsel %vm866, %v836, 0
    %vm870 = vcmask 1041408
    %v871 = vsel %vm870, %v848, 0
    %v873 = vsel %vm870, %v856, 0
    %v875 = vsel %vm870, %v855, 0
    %v877 = vsel %vm870, %v857, 0
    %v879 = vsel %vm870, %v864, 0
    %v881 = vsel %vm870, %v865, 0
    %883 = vmatprep.subr.mxu0 %v873
    %884 = vmatpush1.msra.mxu0 %v871
    %885 = vmatprep.subr.mxu0 0.0
    %886 = vmatpush1.msra.mxu0 0.0
    %887 = vmatprep.subr.mxu0 0.0
    %888 = vmatpush1.msra.mxu0 0.0
    %889 = vmatprep.subr.mxu0 0.0
    %890 = vmatpush1.msra.mxu0 0.0
    %891 = vmatprep.subr.mxu0 0.0
    %892 = vmatpush1.msra.mxu0 0.0
    %893 = vmatprep.subr.mxu0 0.0
    %894 = vmatpush1.msra.mxu0 0.0
    %895 = vmatprep.subr.mxu0 0.0
    %896 = vmatpush1.msra.mxu0 0.0
    %897 = vmatprep.subr.mxu0 0.0
    %898 = vmatpush1.msra.mxu0 0.0
    %899 = vmatprep.subr.mxu0 0.0
    %900 = vmatpush1.msra.mxu0 0.0
    %901 = vmatprep.subr.mxu0 0.0
    %902 = vmatpush1.msra.mxu0 0.0
    %903 = vmatprep.subr.mxu0 0.0
    %904 = vmatpush1.msra.mxu0 0.0
    %905 = vmatprep.subr.mxu0 0.0
    %906 = vmatpush1.msra.mxu0 0.0
    %907 = vmatprep.subr.mxu0 0.0
    %908 = vmatpush1.msra.mxu0 0.0
    %909 = vmatprep.subr.mxu0 0.0
    %910 = vmatpush1.msra.mxu0 0.0
    %911 = vmatprep.subr.mxu0 0.0
    %912 = vmatpush1.msra.mxu0 0.0
    %913 = vmatprep.subr.mxu0 0.0
    %914 = vmatpush1.msra.mxu0 0.0
    %915 = vmatprep.subr.mxu0 0.0
    %916 = vmatpush1.msra.mxu0 0.0
    %917 = vmatprep.subr.mxu0 0.0
    %918 = vmatpush1.msra.mxu0 0.0
    %919 = vmatprep.subr.mxu0 0.0
    %920 = vmatpush1.msra.mxu0 0.0
    %921 = vmatprep.subr.mxu0 0.0
    %922 = vmatpush1.msra.mxu0 0.0
    %923 = vmatprep.subr.mxu0 0.0
    %924 = vmatpush1.msra.mxu0 0.0
    %925 = vmatprep.subr.mxu0 0.0
    %926 = vmatpush1.msra.mxu0 0.0
    %927 = vmatprep.subr.mxu0 0.0
    %928 = vmatpush1.msra.mxu0 0.0
    %929 = vmatprep.subr.mxu0 0.0
    %930 = vmatpush1.msra.mxu0 0.0
    %931 = vmatprep.subr.mxu0 0.0
    %932 = vmatpush1.msra.mxu0 0.0
    %933 = vmatprep.subr.mxu0 0.0
    %934 = vmatpush1.msra.mxu0 0.0
    %935 = vmatprep.subr.mxu0 0.0
    %936 = vmatpush1.msra.mxu0 0.0
    %937 = vmatprep.subr.mxu0 0.0
    %938 = vmatpush1.msra.mxu0 0.0
    %939 = vmatprep.subr.mxu0 0.0
    %940 = vmatpush1.msra.mxu0 0.0
    %941 = vmatprep.subr.mxu0 0.0
    %942 = vmatpush1.msra.mxu0 0.0
    %943 = vmatprep.subr.mxu0 0.0
    %944 = vmatpush1.msra.mxu0 0.0
    %945 = vmatprep.subr.mxu0 0.0
    %946 = vmatpush1.msra.mxu0 0.0
    %947 = vmatprep.mubr.f32.mxu0 0.0
    %948 = vmatmul.mubr.f32.gmra.mrb[0].mxu0 %v868
    %v949 = vpop.f32.mrb[0].mxu0
    %v950 = vadd.f32 0.0, %v949
    %v951 = vpop.f32.mrb[0].mxu0
    %v952 = vadd.f32 0.0, %v951
    %953 = vdwg.mxu0
    %954 = vmatprep.subr.mxu0 %v877
    %955 = vmatpush1.msra.mxu0 %v875
    %956 = vmatprep.subr.mxu0 0.0
    %957 = vmatpush1.msra.mxu0 0.0
    %958 = vmatprep.subr.mxu0 0.0
    %959 = vmatpush1.msra.mxu0 0.0
    %960 = vmatprep.subr.mxu0 0.0
    %961 = vmatpush1.msra.mxu0 0.0
    %962 = vmatprep.subr.mxu0 0.0
    %963 = vmatpush1.msra.mxu0 0.0
    %964 = vmatprep.subr.mxu0 0.0
    %965 = vmatpush1.msra.mxu0 0.0
    %966 = vmatprep.subr.mxu0 0.0
    %967 = vmatpush1.msra.mxu0 0.0
    %968 = vmatprep.subr.mxu0 0.0
    %969 = vmatpush1.msra.mxu0 0.0
    %970 = vmatprep.subr.mxu0 0.0
    %971 = vmatpush1.msra.mxu0 0.0
    %972 = vmatprep.subr.mxu0 0.0
    %973 = vmatpush1.msra.mxu0 0.0
    %974 = vmatprep.subr.mxu0 0.0
    %975 = vmatpush1.msra.mxu0 0.0
    %976 = vmatprep.subr.mxu0 0.0
    %977 = vmatpush1.msra.mxu0 0.0
    %978 = vmatprep.subr.mxu0 0.0
    %979 = vmatpush1.msra.mxu0 0.0
    %980 = vmatprep.subr.mxu0 0.0
    %981 = vmatpush1.msra.mxu0 0.0
    %982 = vmatprep.subr.mxu0 0.0
    %983 = vmatpush1.msra.mxu0 0.0
    %984 = vmatprep.subr.mxu0 0.0
    %985 = vmatpush1.msra.mxu0 0.0
    %986 = vmatprep.subr.mxu0 0.0
    %987 = vmatpush1.msra.mxu0 0.0
    %988 = vmatprep.subr.mxu0 0.0
    %989 = vmatpush1.msra.mxu0 0.0
    %990 = vmatprep.subr.mxu0 0.0
    %991 = vmatpush1.msra.mxu0 0.0
    %992 = vmatprep.subr.mxu0 0.0
    %993 = vmatpush1.msra.mxu0 0.0
    %994 = vmatprep.subr.mxu0 0.0
    %995 = vmatpush1.msra.mxu0 0.0
    %996 = vmatprep.subr.mxu0 0.0
    %997 = vmatpush1.msra.mxu0 0.0
    %998 = vmatprep.subr.mxu0 0.0
    %999 = vmatpush1.msra.mxu0 0.0
    %1000 = vmatprep.subr.mxu0 0.0
    %1001 = vmatpush1.msra.mxu0 0.0
    %1002 = vmatprep.subr.mxu0 0.0
    %1003 = vmatpush1.msra.mxu0 0.0
    %1004 = vmatprep.subr.mxu0 0.0
    %1005 = vmatpush1.msra.mxu0 0.0
    %1006 = vmatprep.subr.mxu0 0.0
    %1007 = vmatpush1.msra.mxu0 0.0
    %1008 = vmatprep.subr.mxu0 0.0
    %1009 = vmatpush1.msra.mxu0 0.0
    %1010 = vmatprep.subr.mxu0 0.0
    %1011 = vmatpush1.msra.mxu0 0.0
    %1012 = vmatprep.subr.mxu0 0.0
    %1013 = vmatpush1.msra.mxu0 0.0
    %1014 = vmatprep.subr.mxu0 0.0
    %1015 = vmatpush1.msra.mxu0 0.0
    %1016 = vmatprep.subr.mxu0 0.0
    %1017 = vmatpush1.msra.mxu0 0.0
    %1018 = vmatprep.mubr.f32.mxu0 0.0
    %1019 = vmatmul.mubr.f32.gmra.mrb[0].mxu0 %v868
    %v1020 = vpop.f32.mrb[0].mxu0
    %v1021 = vadd.f32 0.0, %v1020
    %v1022 = vpop.f32.mrb[0].mxu0
    %v1023 = vadd.f32 0.0, %v1022
    %1024 = vdwg.mxu0
    %1025 = vmatprep.subr.mxu0 %v881
    %1026 = vmatpush1.msra.mxu0 %v879
    %1027 = vmatprep.subr.mxu0 0.0
    %1028 = vmatpush1.msra.mxu0 0.0
    %1029 = vmatprep.subr.mxu0 0.0
    %1030 = vmatpush1.msra.mxu0 0.0
    %1031 = vmatprep.subr.mxu0 0.0
    %1032 = vmatpush1.msra.mxu0 0.0
    %1033 = vmatprep.subr.mxu0 0.0
    %1034 = vmatpush1.msra.mxu0 0.0
    %1035 = vmatprep.subr.mxu0 0.0
    %1036 = vmatpush1.msra.mxu0 0.0
    %1037 = vmatprep.subr.mxu0 0.0
    %1038 = vmatpush1.msra.mxu0 0.0
    %1039 = vmatprep.subr.mxu0 0.0
    %1040 = vmatpush1.msra.mxu0 0.0
    %1041 = vmatprep.subr.mxu0 0.0
    %1042 = vmatpush1.msra.mxu0 0.0
    %1043 = vmatprep.subr.mxu0 0.0
    %1044 = vmatpush1.msra.mxu0 0.0
    %1045 = vmatprep.subr.mxu0 0.0
    %1046 = vmatpush1.msra.mxu0 0.0
    %1047 = vmatprep.subr.mxu0 0.0
    %1048 = vmatpush1.msra.mxu0 0.0
    %1049 = vmatprep.subr.mxu0 0.0
    %1050 = vmatpush1.msra.mxu0 0.0
    %1051 = vmatprep.subr.mxu0 0.0
    %1052 = vmatpush1.msra.mxu0 0.0
    %1053 = vmatprep.subr.mxu0 0.0
    %1054 = vmatpush1.msra.mxu0 0.0
    %1055 = vmatprep.subr.mxu0 0.0
    %1056 = vmatpush1.msra.mxu0 0.0
    %1057 = vmatprep.subr.mxu0 0.0
    %1058 = vmatpush1.msra.mxu0 0.0
    %1059 = vmatprep.subr.mxu0 0.0
    %1060 = vmatpush1.msra.mxu0 0.0
    %1061 = vmatprep.subr.mxu0 0.0
    %1062 = vmatpush1.msra.mxu0 0.0
    %1063 = vmatprep.subr.mxu0 0.0
    %1064 = vmatpush1.msra.mxu0 0.0
    %1065 = vmatprep.subr.mxu0 0.0
    %1066 = vmatpush1.msra.mxu0 0.0
    %1067 = vmatprep.subr.mxu0 0.0
    %1068 = vmatpush1.msra.mxu0 0.0
    %1069 = vmatprep.subr.mxu0 0.0
    %1070 = vmatpush1.msra.mxu0 0.0
    %1071 = vmatprep.subr.mxu0 0.0
    %1072 = vmatpush1.msra.mxu0 0.0
    %1073 = vmatprep.subr.mxu0 0.0
    %1074 = vmatpush1.msra.mxu0 0.0
    %1075 = vmatprep.subr.mxu0 0.0
    %1076 = vmatpush1.msra.mxu0 0.0
    %1077 = vmatprep.subr.mxu0 0.0
    %1078 = vmatpush1.msra.mxu0 0.0
    %1079 = vmatprep.subr.mxu0 0.0
    %1080 = vmatpush1.msra.mxu0 0.0
    %1081 = vmatprep.subr.mxu0 0.0
    %1082 = vmatpush1.msra.mxu0 0.0
    %1083 = vmatprep.subr.mxu0 0.0
    %1084 = vmatpush1.msra.mxu0 0.0
    %1085 = vmatprep.subr.mxu0 0.0
    %1086 = vmatpush1.msra.mxu0 0.0
    %1087 = vmatprep.subr.mxu0 0.0
    %1088 = vmatpush1.msra.mxu0 0.0
    %1089 = vmatprep.mubr.f32.mxu0 0.0
    %1090 = vmatmul.mubr.f32.gmra.mrb[0].mxu0 %v868
    %v1091 = vpop.f32.mrb[0].mxu0
    %v1092 = vadd.f32 0.0, %v1091
    %v1093 = vpop.f32.mrb[0].mxu0
    %v1094 = vadd.f32 0.0, %v1093
    %1095 = vdwg.mxu0
    %v1096 = vadd.f32 %v722, %v950
    %v1097 = vadd.f32 %v723, %v952
    %v1098 = vadd.f32 %v724, %v1021
    %v1099 = vadd.f32 %v725, %v1023
    %v1100 = vadd.f32 %v726, %v1092
    %v1101 = vadd.f32 %v727, %v1094
    %v1102 = vmul.f32 %v1096, %v86
    %v1103 = vmul.f32 %v1097, %v90
    %v1104 = vmul.f32 %v1098, %v94
    %v1105 = vmul.f32 %v1099, %v98
    %v1106 = vmul.f32 %v1100, %v102
    %v1107 = vmul.f32 %v1101, %v106
    %1108 = vst [vmem:[#allocation2 + $0x8] sm:$0xff] %v1102
    %1109 = vst [vmem:[#allocation2 + $0x10] sm:$0xff] %v1103
    %1110 = vst [vmem:[#allocation2 + $0x18] sm:$0xff] %v1104
    %1111 = vst [vmem:[#allocation2 + $0x20] sm:$0xff] %v1105
    %1112 = vst [vmem:[#allocation2 + $0x28] sm:$0xff] %v1106
    %1113 = vst [vmem:[#allocation2 + $0x30] sm:$0xff] %v1107
    %v1114 = vld [vmem:[#allocation2] sm:$0xff]
    %v1115 = vld [vmem:[#allocation2 + $0x8] sm:$0xff]
    %v1116 = vld [vmem:[#allocation2 + $0x10] sm:$0xff]
    %v1117 = vld [vmem:[#allocation2 + $0x18] sm:$0xff]
    %v1118 = vld [vmem:[#allocation2 + $0x20] sm:$0xff]
    %v1119 = vld [vmem:[#allocation2 + $0x28] sm:$0xff]
    %v1120 = vld [vmem:[#allocation2 + $0x30] sm:$0xff]
    %1128 = vrot.lane.b32.xlu0 %v1114, 127
    %v1129 = vpop.permute.xlu0 %1128
    %1130 = vrot.lane.b32.xlu0 %v1115, 127
    %v1131 = vpop.permute.xlu0 %1130
    %1132 = vrot.lane.b32.xlu0 %v1116, 127
    %v1133 = vpop.permute.xlu0 %1132
    %1134 = vrot.lane.b32.xlu0 %v1117, 127
    %v1135 = vpop.permute.xlu0 %1134
    %1136 = vrot.lane.b32.xlu0 %v1118, 127
    %v1137 = vpop.permute.xlu0 %1136
    %1138 = vrot.lane.b32.xlu0 %v1119, 127
    %v1139 = vpop.permute.xlu0 %1138
    %1140 = vrot.lane.b32.xlu0 %v1120, 127
    %v1141 = vpop.permute.xlu0 %1140
    %v1142 = vsel %vm145, %v1129, %v1131
    %v1143 = vsel %vm145, %v1131, %v1133
    %v1144 = vsel %vm145, %v1133, %v1135
    %v1145 = vsel %vm145, %v1135, %v1137
    %v1146 = vsel %vm145, %v1137, %v1139
    %v1147 = vsel %vm145, %v1139, %v1141
    %v1155 = vpack.c.bf16 %v1142, %v1114
    %v1156 = vpack.c.bf16 %v1143, %v1115
    %v1157 = vpack.c.bf16 %v1144, %v1116
    %v1158 = vpack.c.bf16 %v1145, %v1117
    %v1159 = vpack.c.bf16 %v1146, %v1118
    %v1160 = vpack.c.bf16 %v1147, %v1119
    %v1161 = vpack.c.bf16 %v1141, %v1120
    %1169 = vrot.lane.b32.xlu0 %v1155, 19
    %v1170 = vpop.permute.xlu0 %1169
    %1171 = vrot.lane.b32.xlu0 %v1156, 19
    %v1172 = vpop.permute.xlu0 %1171
    %1173 = vrot.lane.b32.xlu0 %v1157, 19
    %v1174 = vpop.permute.xlu0 %1173
    %1175 = vrot.lane.b32.xlu0 %v1158, 19
    %v1176 = vpop.permute.xlu0 %1175
    %1177 = vrot.lane.b32.xlu0 %v1159, 19
    %v1178 = vpop.permute.xlu0 %1177
    %1179 = vrot.lane.b32.xlu0 %v1160, 19
    %v1180 = vpop.permute.xlu0 %1179
    %1181 = vrot.lane.b32.xlu0 %v1161, 19
    %v1182 = vpop.permute.xlu0 %1181
    %v1183 = vsel %vm187, %v1170, %v1172
    %v1184 = vsel %vm187, %v1172, %v1174
    %v1185 = vsel %vm187, %v1174, %v1176
    %v1186 = vsel %vm187, %v1176, %v1178
    %v1187 = vsel %vm187, %v1178, %v1180
    %v1188 = vsel %vm187, %v1180, %v1182
    %1195 = vst [vmem:[#allocation4] sm:$0xff] %v1183
    %1196 = vst [vmem:[#allocation4 + $0x8] sm:$0xff] %v1184
    %1197 = vst [vmem:[#allocation4 + $0x10] sm:$0xff] %v1185
    %1198 = vst [vmem:[#allocation4 + $0x18] sm:$0xff] %v1186
    %1199 = vst [vmem:[#allocation4 + $0x20] sm:$0xff] %v1187
    %1200 = vst [vmem:[#allocation4 + $0x28] sm:$0xff] %v1188
    %v1201 = vld [vmem:[#allocation2] sm:$0xff]
    %v1202 = vld [vmem:[#allocation2 + $0x8] sm:$0xff]
    %v1203 = vld [vmem:[#allocation2 + $0x10] sm:$0xff]
    %v1204 = vld [vmem:[#allocation2 + $0x18] sm:$0xff]
    %v1205 = vld [vmem:[#allocation2 + $0x20] sm:$0xff]
    %v1206 = vld [vmem:[#allocation2 + $0x28] sm:$0xff]
    %v1207 = vld [vmem:[#allocation2 + $0x30] sm:$0xff]
    %1215 = vrot.lane.b32.xlu0 %v1201, 112
    %v1216 = vpop.permute.xlu0 %1215
    %1217 = vrot.lane.b32.xlu0 %v1202, 112
    %v1218 = vpop.permute.xlu0 %1217
    %1219 = vrot.lane.b32.xlu0 %v1203, 112
    %v1220 = vpop.permute.xlu0 %1219
    %1221 = vrot.lane.b32.xlu0 %v1204, 112
    %v1222 = vpop.permute.xlu0 %1221
    %1223 = vrot.lane.b32.xlu0 %v1205, 112
    %v1224 = vpop.permute.xlu0 %1223
    %1225 = vrot.lane.b32.xlu0 %v1206, 112
    %v1226 = vpop.permute.xlu0 %1225
    %1227 = vrot.lane.b32.xlu0 %v1207, 112
    %v1228 = vpop.permute.xlu0 %1227
    %v1229 = vsel %vm234, %v1216, %v1218
    %v1230 = vsel %vm234, %v1218, %v1220
    %v1231 = vsel %vm234, %v1220, %v1222
    %v1232 = vsel %vm234, %v1222, %v1224
    %v1233 = vsel %vm234, %v1224, %v1226
    %v1234 = vsel %vm234, %v1226, %v1228
    %v1242 = vpack.c.bf16 %v1229, %v1201
    %v1243 = vpack.c.bf16 %v1230, %v1202
    %v1244 = vpack.c.bf16 %v1231, %v1203
    %v1245 = vpack.c.bf16 %v1232, %v1204
    %v1246 = vpack.c.bf16 %v1233, %v1205
    %v1247 = vpack.c.bf16 %v1234, %v1206
    %v1248 = vpack.c.bf16 %v1228, %v1207
    %1256 = vrot.lane.b32.xlu0 %v1242, 17
    %v1257 = vpop.permute.xlu0 %1256
    %1258 = vrot.lane.b32.xlu0 %v1243, 17
    %v1259 = vpop.permute.xlu0 %1258
    %1260 = vrot.lane.b32.xlu0 %v1244, 17
    %v1261 = vpop.permute.xlu0 %1260
    %1262 = vrot.lane.b32.xlu0 %v1245, 17
    %v1263 = vpop.permute.xlu0 %1262
    %1264 = vrot.lane.b32.xlu0 %v1246, 17
    %v1265 = vpop.permute.xlu0 %1264
    %1266 = vrot.lane.b32.xlu0 %v1247, 17
    %v1267 = vpop.permute.xlu0 %1266
    %1268 = vrot.lane.b32.xlu0 %v1248, 17
    %v1269 = vpop.permute.xlu0 %1268
    %v1270 = vsel %vm276, %v1257, %v1259
    %v1271 = vsel %vm276, %v1259, %v1261
    %v1272 = vsel %vm276, %v1261, %v1263
    %v1273 = vsel %vm276, %v1263, %v1265
    %v1274 = vsel %vm276, %v1265, %v1267
    %v1275 = vsel %vm276, %v1267, %v1269
    %1282 = vst [vmem:[#allocation4 + $0x30] sm:$0xff] %v1270
    %1283 = vst [vmem:[#allocation4 + $0x38] sm:$0xff] %v1271
    %1284 = vst [vmem:[#allocation4 + $0x40] sm:$0xff] %v1272
    %1285 = vst [vmem:[#allocation4 + $0x48] sm:$0xff] %v1273
    %1286 = vst [vmem:[#allocation4 + $0x50] sm:$0xff] %v1274
    %1287 = vst [vmem:[#allocation4 + $0x58] sm:$0xff] %v1275
    %v1288 = vld [vmem:[#allocation2 + $0x8] sm:$0xff]
    %v1289 = vld [vmem:[#allocation2 + $0x10] sm:$0xff]
    %v1290 = vld [vmem:[#allocation2 + $0x18] sm:$0xff]
    %v1291 = vld [vmem:[#allocation2 + $0x20] sm:$0xff]
    %v1292 = vld [vmem:[#allocation2 + $0x28] sm:$0xff]
    %v1293 = vld [vmem:[#allocation2 + $0x30] sm:$0xff]
    %v1294 = vld [vmem:[#allocation2 + $0x8] sm:$0xff]
    %v1295 = vld [vmem:[#allocation2 + $0x10] sm:$0xff]
    %v1296 = vld [vmem:[#allocation2 + $0x18] sm:$0xff]
    %v1297 = vld [vmem:[#allocation2 + $0x20] sm:$0xff]
    %v1298 = vld [vmem:[#allocation2 + $0x28] sm:$0xff]
    %v1299 = vld [vmem:[#allocation2 + $0x30] sm:$0xff]
    %v1300 = vld [vmem:[#allocation2 + $0x38] sm:$0xff]
    %1308 = vrot.lane.b32.xlu0 %v1294, 127
    %v1309 = vpop.permute.xlu0 %1308
    %1310 = vrot.lane.b32.xlu0 %v1295, 127
    %v1311 = vpop.permute.xlu0 %1310
    %1312 = vrot.lane.b32.xlu0 %v1296, 127
    %v1313 = vpop.permute.xlu0 %1312
    %1314 = vrot.lane.b32.xlu0 %v1297, 127
    %v1315 = vpop.permute.xlu0 %1314
    %1316 = vrot.lane.b32.xlu0 %v1298, 127
    %v1317 = vpop.permute.xlu0 %1316
    %1318 = vrot.lane.b32.xlu0 %v1299, 127
    %v1319 = vpop.permute.xlu0 %1318
    %1320 = vrot.lane.b32.xlu0 %v1300, 127
    %v1321 = vpop.permute.xlu0 %1320
    %v1322 = vsel %vm145, %v1309, %v1311
    %v1323 = vsel %vm145, %v1311, %v1313
    %v1324 = vsel %vm145, %v1313, %v1315
    %v1325 = vsel %vm145, %v1315, %v1317
    %v1326 = vsel %vm145, %v1317, %v1319
    %v1327 = vsel %vm145, %v1319, %v1321
    %v1334 = vpack.c.bf16 %v1322, %v1288
    %v1335 = vpack.c.bf16 %v1323, %v1289
    %v1336 = vpack.c.bf16 %v1324, %v1290
    %v1337 = vpack.c.bf16 %v1325, %v1291
    %v1338 = vpack.c.bf16 %v1326, %v1292
    %v1339 = vpack.c.bf16 %v1327, %v1293
    %1340 = vst [vmem:[#allocation4 + $0x60] sm:$0xff] %v1334
    %1341 = vst [vmem:[#allocation4 + $0x68] sm:$0xff] %v1335
    %1342 = vst [vmem:[#allocation4 + $0x70] sm:$0xff] %v1336
    %1343 = vst [vmem:[#allocation4 + $0x78] sm:$0xff] %v1337
    %1344 = vst [vmem:[#allocation4 + $0x80] sm:$0xff] %v1338
    %1345 = vst [vmem:[#allocation4 + $0x88] sm:$0xff] %v1339
    %v1346 = vld [vmem:[#allocation2 + $0x8] sm:$0xff]
    %v1347 = vld [vmem:[#allocation2 + $0x10] sm:$0xff]
    %v1348 = vld [vmem:[#allocation2 + $0x18] sm:$0xff]
    %v1349 = vld [vmem:[#allocation2 + $0x20] sm:$0xff]
    %v1350 = vld [vmem:[#allocation2 + $0x28] sm:$0xff]
    %v1351 = vld [vmem:[#allocation2 + $0x30] sm:$0xff]
    %v1352 = vld [vmem:[#allocation2 + $0x38] sm:$0xff]
    %1360 = vrot.lane.b32.xlu0 %v1346, 127
    %v1361 = vpop.permute.xlu0 %1360
    %1362 = vrot.lane.b32.xlu0 %v1347, 127
    %v1363 = vpop.permute.xlu0 %1362
    %1364 = vrot.lane.b32.xlu0 %v1348, 127
    %v1365 = vpop.permute.xlu0 %1364
    %1366 = vrot.lane.b32.xlu0 %v1349, 127
    %v1367 = vpop.permute.xlu0 %1366
    %1368 = vrot.lane.b32.xlu0 %v1350, 127
    %v1369 = vpop.permute.xlu0 %1368
    %1370 = vrot.lane.b32.xlu0 %v1351, 127
    %v1371 = vpop.permute.xlu0 %1370
    %1372 = vrot.lane.b32.xlu0 %v1352, 127
    %v1373 = vpop.permute.xlu0 %1372
    %v1374 = vsel %vm145, %v1361, %v1363
    %v1375 = vsel %vm145, %v1363, %v1365
    %v1376 = vsel %vm145, %v1365, %v1367
    %v1377 = vsel %vm145, %v1367, %v1369
    %v1378 = vsel %vm145, %v1369, %v1371
    %v1379 = vsel %vm145, %v1371, %v1373
    %v1387 = vpack.c.bf16 %v1374, %v1346
    %v1388 = vpack.c.bf16 %v1375, %v1347
    %v1389 = vpack.c.bf16 %v1376, %v1348
    %v1390 = vpack.c.bf16 %v1377, %v1349
    %v1391 = vpack.c.bf16 %v1378, %v1350
    %v1392 = vpack.c.bf16 %v1379, %v1351
    %v1393 = vpack.c.bf16 %v1373, %v1352
    %1401 = vrot.lane.b32.xlu0 %v1387, 111
    %v1402 = vpop.permute.xlu0 %1401
    %1403 = vrot.lane.b32.xlu0 %v1388, 111
    %v1404 = vpop.permute.xlu0 %1403
    %1405 = vrot.lane.b32.xlu0 %v1389, 111
    %v1406 = vpop.permute.xlu0 %1405
    %1407 = vrot.lane.b32.xlu0 %v1390, 111
    %v1408 = vpop.permute.xlu0 %1407
    %1409 = vrot.lane.b32.xlu0 %v1391, 111
    %v1410 = vpop.permute.xlu0 %1409
    %1411 = vrot.lane.b32.xlu0 %v1392, 111
    %v1412 = vpop.permute.xlu0 %1411
    %1413 = vrot.lane.b32.xlu0 %v1393, 111
    %v1414 = vpop.permute.xlu0 %1413
    %v1415 = vsel %vm422, %v1402, %v1404
    %v1416 = vsel %vm422, %v1404, %v1406
    %v1417 = vsel %vm422, %v1406, %v1408
    %v1418 = vsel %vm422, %v1408, %v1410
    %v1419 = vsel %vm422, %v1410, %v1412
    %v1420 = vsel %vm422, %v1412, %v1414
    %1427 = vst [vmem:[#allocation4 + $0x90] sm:$0xff] %v1415
    %1428 = vst [vmem:[#allocation4 + $0x98] sm:$0xff] %v1416
    %1429 = vst [vmem:[#allocation4 + $0xa0] sm:$0xff] %v1417
    %1430 = vst [vmem:[#allocation4 + $0xa8] sm:$0xff] %v1418
    %1431 = vst [vmem:[#allocation4 + $0xb0] sm:$0xff] %v1419
    %1432 = vst [vmem:[#allocation4 + $0xb8] sm:$0xff] %v1420
    %v1433 = vld [vmem:[#allocation2 + $0x8] sm:$0xff]
    %v1434 = vld [vmem:[#allocation2 + $0x10] sm:$0xff]
    %v1435 = vld [vmem:[#allocation2 + $0x18] sm:$0xff]
    %v1436 = vld [vmem:[#allocation2 + $0x20] sm:$0xff]
    %v1437 = vld [vmem:[#allocation2 + $0x28] sm:$0xff]
    %v1438 = vld [vmem:[#allocation2 + $0x30] sm:$0xff]
    %v1439 = vld [vmem:[#allocation2 + $0x38] sm:$0xff]
    %v1440 = vpack.c.bf16 0.0, %v1433
    %v1441 = vpack.c.bf16 0.0, %v1434
    %v1442 = vpack.c.bf16 0.0, %v1435
    %v1443 = vpack.c.bf16 0.0, %v1436
    %v1444 = vpack.c.bf16 0.0, %v1437
    %v1445 = vpack.c.bf16 0.0, %v1438
    %v1446 = vpack.c.bf16 0.0, %v1439
    %1454 = vrot.lane.b32.xlu0 %v1440, 109
    %v1455 = vpop.permute.xlu0 %1454
    %1456 = vrot.lane.b32.xlu0 %v1441, 109
    %v1457 = vpop.permute.xlu0 %1456
    %1458 = vrot.lane.b32.xlu0 %v1442, 109
    %v1459 = vpop.permute.xlu0 %1458
    %1460 = vrot.lane.b32.xlu0 %v1443, 109
    %v1461 = vpop.permute.xlu0 %1460
    %1462 = vrot.lane.b32.xlu0 %v1444, 109
    %v1463 = vpop.permute.xlu0 %1462
    %1464 = vrot.lane.b32.xlu0 %v1445, 109
    %v1465 = vpop.permute.xlu0 %1464
    %1466 = vrot.lane.b32.xlu0 %v1446, 109
    %v1467 = vpop.permute.xlu0 %1466
    %v1468 = vsel %vm476, %v1455, %v1457
    %v1469 = vsel %vm476, %v1457, %v1459
    %v1470 = vsel %vm476, %v1459, %v1461
    %v1471 = vsel %vm476, %v1461, %v1463
    %v1472 = vsel %vm476, %v1463, %v1465
    %v1473 = vsel %vm476, %v1465, %v1467
    %1480 = vst [vmem:[#allocation4 + $0xc0] sm:$0xff] %v1468
    %1481 = vst [vmem:[#allocation4 + $0xc8] sm:$0xff] %v1469
    %1482 = vst [vmem:[#allocation4 + $0xd0] sm:$0xff] %v1470
    %1483 = vst [vmem:[#allocation4 + $0xd8] sm:$0xff] %v1471
    %1484 = vst [vmem:[#allocation4 + $0xe0] sm:$0xff] %v1472
    %1485 = vst [vmem:[#allocation4 + $0xe8] sm:$0xff] %v1473
    %v1486 = vld [vmem:[%s14] sm:$0xf]
    %v1487 = vld [vmem:[#allocation4] sm:$0xff]
    %v1488 = vld [vmem:[#allocation4 + $0x8] sm:$0xff]
    %v1489 = vld [vmem:[#allocation4 + $0x10] sm:$0xff]
    %v1490 = vld [vmem:[#allocation4 + $0x18] sm:$0xff]
    %v1491 = vld [vmem:[#allocation4 + $0x20] sm:$0xff]
    %v1492 = vld [vmem:[#allocation4 + $0x28] sm:$0xff]
    %v1493 = vld [vmem:[#allocation4 + $0x30] sm:$0xff]
    %v1494 = vld [vmem:[#allocation4 + $0x38] sm:$0xff]
    %v1495 = vld [vmem:[#allocation4 + $0x40] sm:$0xff]
    %v1496 = vld [vmem:[#allocation4 + $0x48] sm:$0xff]
    %v1497 = vld [vmem:[#allocation4 + $0x50] sm:$0xff]
    %v1498 = vld [vmem:[#allocation4 + $0x58] sm:$0xff]
    %v1499 = vld [vmem:[#allocation4 + $0x60] sm:$0xff]
    %v1500 = vld [vmem:[#allocation4 + $0x68] sm:$0xff]
    %v1501 = vld [vmem:[#allocation4 + $0x70] sm:$0xff]
    %v1502 = vld [vmem:[#allocation4 + $0x78] sm:$0xff]
    %v1503 = vld [vmem:[#allocation4 + $0x80] sm:$0xff]
    %v1504 = vld [vmem:[#allocation4 + $0x88] sm:$0xff]
    %v1505 = vld [vmem:[#allocation4 + $0x90] sm:$0xff]
    %v1506 = vld [vmem:[#allocation4 + $0x98] sm:$0xff]
    %v1507 = vld [vmem:[#allocation4 + $0xa0] sm:$0xff]
    %v1508 = vld [vmem:[#allocation4 + $0xa8] sm:$0xff]
    %v1509 = vld [vmem:[#allocation4 + $0xb0] sm:$0xff]
    %v1510 = vld [vmem:[#allocation4 + $0xb8] sm:$0xff]
    %v1511 = vld [vmem:[#allocation4 + $0xc0] sm:$0xff]
    %v1512 = vld [vmem:[#allocation4 + $0xc8] sm:$0xff]
    %v1513 = vld [vmem:[#allocation4 + $0xd0] sm:$0xff]
    %v1514 = vld [vmem:[#allocation4 + $0xd8] sm:$0xff]
    %v1515 = vld [vmem:[#allocation4 + $0xe0] sm:$0xff]
    %v1516 = vld [vmem:[#allocation4 + $0xe8] sm:$0xff]
    %v1517 = vld [vmem:[%s15] sm:$0xff]
    %1519 = vset.pattern.permute.xlu0 0
    %1520 = vperm.xlu0 %1519, %v1517
    %v1521 = vpop.permute.xlu0 %1520
    %v1524 = vsel %vm532, %v1486, 0
    %1526 = vmatprep.subr.bf16.mxu0 %v1488
    %1527 = vmatpush1.bf16.msra.mxu0 %v1487
    %1528 = vmatprep.subr.bf16.mxu0 %v1494
    %1529 = vmatpush1.bf16.msra.mxu0 %v1493
    %1530 = vmatprep.subr.bf16.mxu0 %v1500
    %1531 = vmatpush1.bf16.msra.mxu0 %v1499
    %1532 = vmatprep.subr.bf16.mxu0 %v1506
    %1533 = vmatpush1.bf16.msra.mxu0 %v1505
    %1534 = vmatprep.subr.bf16.mxu0 %v1512
    %1535 = vmatpush1.bf16.msra.mxu0 %v1511
    %1536 = vmatprep.subr.bf16.mxu0 0
    %1537 = vmatpush1.bf16.msra.mxu0 0
    %1538 = vmatprep.subr.bf16.mxu0 0
    %1539 = vmatpush1.bf16.msra.mxu0 0
    %1540 = vmatprep.subr.bf16.mxu0 0
    %1541 = vmatpush1.bf16.msra.mxu0 0
    %1542 = vmatprep.subr.bf16.mxu0 0
    %1543 = vmatpush1.bf16.msra.mxu0 0
    %1544 = vmatprep.subr.bf16.mxu0 0
    %1545 = vmatpush1.bf16.msra.mxu0 0
    %1546 = vmatprep.subr.bf16.mxu0 0
    %1547 = vmatpush1.bf16.msra.mxu0 0
    %1548 = vmatprep.subr.bf16.mxu0 0
    %1549 = vmatpush1.bf16.msra.mxu0 0
    %1550 = vmatprep.subr.bf16.mxu0 0
    %1551 = vmatpush1.bf16.msra.mxu0 0
    %1552 = vmatprep.subr.bf16.mxu0 0
    %1553 = vmatpush1.bf16.msra.mxu0 0
    %1554 = vmatprep.subr.bf16.mxu0 0
    %1555 = vmatpush1.bf16.msra.mxu0 0
    %1556 = vmatprep.subr.bf16.mxu0 0
    %1557 = vmatpush1.bf16.msra.mxu0 0
    %1558 = vmatprep.mubr.bf16.mxu0 0
    %1559 = vmatmul.mubr.bf16.gmra.mrb[0].mxu0 %v1524
    %v1560 = vpop.f32.mrb[0].mxu0
    %v1561 = vadd.f32 %v1521, %v1560
    %v1562 = vpop.f32.mrb[0].mxu0
    %v1563 = vadd.f32 %v1521, %v1562
    %v1564 = vpop.f32.mrb[0].mxu0
    %v1565 = vpop.f32.mrb[0].mxu0
    %1566 = vdwg.mxu0
    %1567 = vmatprep.subr.bf16.mxu0 %v1490
    %1568 = vmatpush1.bf16.msra.mxu0 %v1489
    %1569 = vmatprep.subr.bf16.mxu0 %v1496
    %1570 = vmatpush1.bf16.msra.mxu0 %v1495
    %1571 = vmatprep.subr.bf16.mxu0 %v1502
    %1572 = vmatpush1.bf16.msra.mxu0 %v1501
    %1573 = vmatprep.subr.bf16.mxu0 %v1508
    %1574 = vmatpush1.bf16.msra.mxu0 %v1507
    %1575 = vmatprep.subr.bf16.mxu0 %v1514
    %1576 = vmatpush1.bf16.msra.mxu0 %v1513
    %1577 = vmatprep.subr.bf16.mxu0 0
    %1578 = vmatpush1.bf16.msra.mxu0 0
    %1579 = vmatprep.subr.bf16.mxu0 0
    %1580 = vmatpush1.bf16.msra.mxu0 0
    %1581 = vmatprep.subr.bf16.mxu0 0
    %1582 = vmatpush1.bf16.msra.mxu0 0
    %1583 = vmatprep.subr.bf16.mxu0 0
    %1584 = vmatpush1.bf16.msra.mxu0 0
    %1585 = vmatprep.subr.bf16.mxu0 0
    %1586 = vmatpush1.bf16.msra.mxu0 0
    %1587 = vmatprep.subr.bf16.mxu0 0
    %1588 = vmatpush1.bf16.msra.mxu0 0
    %1589 = vmatprep.subr.bf16.mxu0 0
    %1590 = vmatpush1.bf16.msra.mxu0 0
    %1591 = vmatprep.subr.bf16.mxu0 0
    %1592 = vmatpush1.bf16.msra.mxu0 0
    %1593 = vmatprep.subr.bf16.mxu0 0
    %1594 = vmatpush1.bf16.msra.mxu0 0
    %1595 = vmatprep.subr.bf16.mxu0 0
    %1596 = vmatpush1.bf16.msra.mxu0 0
    %1597 = vmatprep.subr.bf16.mxu0 0
    %1598 = vmatpush1.bf16.msra.mxu0 0
    %1599 = vmatprep.mubr.bf16.mxu0 0
    %1600 = vmatmul.mubr.bf16.gmra.mrb[0].mxu0 %v1524
    %v1601 = vpop.f32.mrb[0].mxu0
    %v1602 = vadd.f32 %v1521, %v1601
    %v1603 = vpop.f32.mrb[0].mxu0
    %v1604 = vadd.f32 %v1521, %v1603
    %v1605 = vpop.f32.mrb[0].mxu0
    %v1606 = vpop.f32.mrb[0].mxu0
    %1607 = vdwg.mxu0
    %1608 = vmatprep.subr.bf16.mxu0 %v1492
    %1609 = vmatpush1.bf16.msra.mxu0 %v1491
    %1610 = vmatprep.subr.bf16.mxu0 %v1498
    %1611 = vmatpush1.bf16.msra.mxu0 %v1497
    %1612 = vmatprep.subr.bf16.mxu0 %v1504
    %1613 = vmatpush1.bf16.msra.mxu0 %v1503
    %1614 = vmatprep.subr.bf16.mxu0 %v1510
    %1615 = vmatpush1.bf16.msra.mxu0 %v1509
    %1616 = vmatprep.subr.bf16.mxu0 %v1516
    %1617 = vmatpush1.bf16.msra.mxu0 %v1515
    %1618 = vmatprep.subr.bf16.mxu0 0
    %1619 = vmatpush1.bf16.msra.mxu0 0
    %1620 = vmatprep.subr.bf16.mxu0 0
    %1621 = vmatpush1.bf16.msra.mxu0 0
    %1622 = vmatprep.subr.bf16.mxu0 0
    %1623 = vmatpush1.bf16.msra.mxu0 0
    %1624 = vmatprep.subr.bf16.mxu0 0
    %1625 = vmatpush1.bf16.msra.mxu0 0
    %1626 = vmatprep.subr.bf16.mxu0 0
    %1627 = vmatpush1.bf16.msra.mxu0 0
    %1628 = vmatprep.subr.bf16.mxu0 0
    %1629 = vmatpush1.bf16.msra.mxu0 0
    %1630 = vmatprep.subr.bf16.mxu0 0
    %1631 = vmatpush1.bf16.msra.mxu0 0
    %1632 = vmatprep.subr.bf16.mxu0 0
    %1633 = vmatpush1.bf16.msra.mxu0 0
    %1634 = vmatprep.subr.bf16.mxu0 0
    %1635 = vmatpush1.bf16.msra.mxu0 0
    %1636 = vmatprep.subr.bf16.mxu0 0
    %1637 = vmatpush1.bf16.msra.mxu0 0
    %1638 = vmatprep.subr.bf16.mxu0 0
    %1639 = vmatpush1.bf16.msra.mxu0 0
    %1640 = vmatprep.mubr.bf16.mxu0 0
    %1641 = vmatmul.mubr.bf16.gmra.mrb[0].mxu0 %v1524
    %v1642 = vpop.f32.mrb[0].mxu0
    %v1643 = vadd.f32 %v1521, %v1642
    %v1644 = vpop.f32.mrb[0].mxu0
    %v1645 = vadd.f32 %v1521, %v1644
    %v1646 = vpop.f32.mrb[0].mxu0
    %v1647 = vpop.f32.mrb[0].mxu0
    %1648 = vdwg.mxu0
    %v1649 = vmax.f32 %v1561, 0.0
    %v1650 = vmax.f32 %v1563, 0.0
    %v1651 = vmax.f32 %v1602, 0.0
    %v1652 = vmax.f32 %v1604, 0.0
    %v1653 = vmax.f32 %v1643, 0.0
    %v1654 = vmax.f32 %v1645, 0.0
    %v1655 = vmul.f32 %v1649, %v86
    %v1656 = vmul.f32 %v1650, %v90
    %v1657 = vmul.f32 %v1651, %v94
    %v1658 = vmul.f32 %v1652, %v98
    %v1659 = vmul.f32 %v1653, %v102
    %v1660 = vmul.f32 %v1654, %v106
    %v1661 = vmul.f32 %v1655, %v1649
    %v1662 = vmul.f32 %v1656, %v1650
    %v1663 = vmul.f32 %v1657, %v1651
    %v1664 = vmul.f32 %v1658, %v1652
    %v1665 = vmul.f32 %v1659, %v1653
    %v1666 = vmul.f32 %v1660, %v1654
    %v1667 = vadd.f32 %v1655, %v1656
    %v1668 = vadd.f32 %v1667, %v1657
    %v1669 = vadd.f32 %v1668, %v1658
    %v1670 = vadd.f32 %v1669, %v1659
    %v1671 = vadd.f32 %v1670, %v1660
    %1672 = vadd.xlane.f32.xlu0 %v1671
    %v1673 = vpop.xlane.xlu0 %1672
    %v1674 = vadd.f32 %v1661, %v1662
    %v1675 = vadd.f32 %v1674, %v1663
    %v1676 = vadd.f32 %v1675, %v1664
    %v1677 = vadd.f32 %v1676, %v1665
    %v1678 = vadd.f32 %v1677, %v1666
    %1679 = vadd.xlane.f32.xlu0 %v1678
    %v1680 = vpop.xlane.xlu0 %1679
    %v1681 = vmul.f32 %v1673, 0.001953125
    %v1682 = vmul.f32 %v1680, 0.001953125
    %v1683 = vmul.f32 %v1681, %v1681
    %v1684 = vsub.f32 %v1682, %v1683
    %v1685 = vsub.f32 %v1649, %v1681
    %v1686 = vsub.f32 %v1650, %v1681
    %v1687 = vsub.f32 %v1651, %v1681
    %v1688 = vsub.f32 %v1652, %v1681
    %v1689 = vsub.f32 %v1653, %v1681
    %v1690 = vsub.f32 %v1654, %v1681
    %v1691 = vadd.f32 %v1684, 1e-05
    %v1692 = vrsqrt.pop %v1691
    %v1693 = vld [vmem:[%s16] sm:$0xff]
    %v1694 = vmul.f32 %v1692, %v1693
    %1696 = vset.pattern.permute.xlu0 0
    %1697 = vperm.xlu0 %1696, %v1694
    %v1698 = vpop.permute.xlu0 %1697
    %v1700 = vmul.f32 %v1685, %v1698
    %v1701 = vmul.f32 %v1686, %v1698
    %v1702 = vmul.f32 %v1687, %v1698
    %v1703 = vmul.f32 %v1688, %v1698
    %v1704 = vmul.f32 %v1689, %v1698
    %v1705 = vmul.f32 %v1690, %v1698
    %v1706 = vld [vmem:[%s17] sm:$0xff]
    %1708 = vset.pattern.permute.xlu0 0
    %1709 = vperm.xlu0 %1708, %v1706
    %v1710 = vpop.permute.xlu0 %1709
    %v1712 = vadd.f32 %v1700, %v1710
    %v1713 = vadd.f32 %v1701, %v1710
    %v1714 = vadd.f32 %v1702, %v1710
    %v1715 = vadd.f32 %v1703, %v1710
    %v1716 = vadd.f32 %v1704, %v1710
    %v1717 = vadd.f32 %v1705, %v1710
    %v1718 = vmul.f32 %v1712, %v86
    %v1719 = vmul.f32 %v1713, %v90
    %v1720 = vmul.f32 %v1714, %v94
    %v1721 = vmul.f32 %v1715, %v98
    %v1722 = vmul.f32 %v1716, %v102
    %v1723 = vmul.f32 %v1717, %v106
    %1724 = vst [vmem:[#allocation3 + $0x8] sm:$0xff] %v1718
    %1725 = vst [vmem:[#allocation3 + $0x10] sm:$0xff] %v1719
    %1726 = vst [vmem:[#allocation3 + $0x18] sm:$0xff] %v1720
    %1727 = vst [vmem:[#allocation3 + $0x20] sm:$0xff] %v1721
    %1728 = vst [vmem:[#allocation3 + $0x28] sm:$0xff] %v1722
    %1729 = vst [vmem:[#allocation3 + $0x30] sm:$0xff] %v1723
    %v1730 = vld [vmem:[#allocation3 + $0x8] sm:$0xff]
    %v1731 = vld [vmem:[#allocation3 + $0x10] sm:$0xff]
    %v1732 = vld [vmem:[#allocation3 + $0x18] sm:$0xff]
    %v1733 = vld [vmem:[#allocation3 + $0x20] sm:$0xff]
    %v1734 = vld [vmem:[#allocation3 + $0x28] sm:$0xff]
    %v1735 = vld [vmem:[#allocation3 + $0x30] sm:$0xff]
    %v1736 = vld [vmem:[#allocation3 + $0x8] sm:$0xff]
    %v1737 = vld [vmem:[#allocation3 + $0x10] sm:$0xff]
    %v1738 = vld [vmem:[#allocation3 + $0x18] sm:$0xff]
    %v1739 = vld [vmem:[#allocation3 + $0x20] sm:$0xff]
    %v1740 = vld [vmem:[#allocation3 + $0x28] sm:$0xff]
    %v1741 = vld [vmem:[#allocation3 + $0x30] sm:$0xff]
    %v1742 = vld [vmem:[#allocation3 + $0x38] sm:$0xff]
    %1750 = vrot.lane.b32.xlu0 %v1736, 127
    %v1751 = vpop.permute.xlu0 %1750
    %1752 = vrot.lane.b32.xlu0 %v1737, 127
    %v1753 = vpop.permute.xlu0 %1752
    %1754 = vrot.lane.b32.xlu0 %v1738, 127
    %v1755 = vpop.permute.xlu0 %1754
    %1756 = vrot.lane.b32.xlu0 %v1739, 127
    %v1757 = vpop.permute.xlu0 %1756
    %1758 = vrot.lane.b32.xlu0 %v1740, 127
    %v1759 = vpop.permute.xlu0 %1758
    %1760 = vrot.lane.b32.xlu0 %v1741, 127
    %v1761 = vpop.permute.xlu0 %1760
    %1762 = vrot.lane.b32.xlu0 %v1742, 127
    %v1763 = vpop.permute.xlu0 %1762
    %v1764 = vsel %vm145, %v1751, %v1753
    %v1765 = vsel %vm145, %v1753, %v1755
    %v1766 = vsel %vm145, %v1755, %v1757
    %v1767 = vsel %vm145, %v1757, %v1759
    %v1768 = vsel %vm145, %v1759, %v1761
    %v1769 = vsel %vm145, %v1761, %v1763
    %v1776 = vpack.c.bf16 %v1764, %v1730
    %v1777 = vpack.c.bf16 %v1765, %v1731
    %v1778 = vpack.c.bf16 %v1766, %v1732
    %v1779 = vpack.c.bf16 %v1767, %v1733
    %v1780 = vpack.c.bf16 %v1768, %v1734
    %v1781 = vpack.c.bf16 %v1769, %v1735
    %1782 = vst [vmem:[#allocation4] sm:$0xff] %v1776
    %1783 = vst [vmem:[#allocation4 + $0x8] sm:$0xff] %v1777
    %1784 = vst [vmem:[#allocation4 + $0x10] sm:$0xff] %v1778
    %1785 = vst [vmem:[#allocation4 + $0x18] sm:$0xff] %v1779
    %1786 = vst [vmem:[#allocation4 + $0x20] sm:$0xff] %v1780
    %1787 = vst [vmem:[#allocation4 + $0x28] sm:$0xff] %v1781
    %v1788 = vld [vmem:[#allocation3 + $0x8] sm:$0xff]
    %v1789 = vld [vmem:[#allocation3 + $0x10] sm:$0xff]
    %v1790 = vld [vmem:[#allocation3 + $0x18] sm:$0xff]
    %v1791 = vld [vmem:[#allocation3 + $0x20] sm:$0xff]
    %v1792 = vld [vmem:[#allocation3 + $0x28] sm:$0xff]
    %v1793 = vld [vmem:[#allocation3 + $0x30] sm:$0xff]
    %v1794 = vld [vmem:[#allocation3 + $0x38] sm:$0xff]
    %1802 = vrot.lane.b32.xlu0 %v1788, 127
    %v1803 = vpop.permute.xlu0 %1802
    %1804 = vrot.lane.b32.xlu0 %v1789, 127
    %v1805 = vpop.permute.xlu0 %1804
    %1806 = vrot.lane.b32.xlu0 %v1790, 127
    %v1807 = vpop.permute.xlu0 %1806
    %1808 = vrot.lane.b32.xlu0 %v1791, 127
    %v1809 = vpop.permute.xlu0 %1808
    %1810 = vrot.lane.b32.xlu0 %v1792, 127
    %v1811 = vpop.permute.xlu0 %1810
    %1812 = vrot.lane.b32.xlu0 %v1793, 127
    %v1813 = vpop.permute.xlu0 %1812
    %1814 = vrot.lane.b32.xlu0 %v1794, 127
    %v1815 = vpop.permute.xlu0 %1814
    %v1816 = vsel %vm145, %v1803, %v1805
    %v1817 = vsel %vm145, %v1805, %v1807
    %v1818 = vsel %vm145, %v1807, %v1809
    %v1819 = vsel %vm145, %v1809, %v1811
    %v1820 = vsel %vm145, %v1811, %v1813
    %v1821 = vsel %vm145, %v1813, %v1815
    %v1829 = vpack.c.bf16 %v1816, %v1788
    %v1830 = vpack.c.bf16 %v1817, %v1789
    %v1831 = vpack.c.bf16 %v1818, %v1790
    %v1832 = vpack.c.bf16 %v1819, %v1791
    %v1833 = vpack.c.bf16 %v1820, %v1792
    %v1834 = vpack.c.bf16 %v1821, %v1793
    %v1835 = vpack.c.bf16 %v1815, %v1794
    %1843 = vrot.lane.b32.xlu0 %v1829, 126
    %v1844 = vpop.permute.xlu0 %1843
    %1845 = vrot.lane.b32.xlu0 %v1830, 126
    %v1846 = vpop.permute.xlu0 %1845
    %1847 = vrot.lane.b32.xlu0 %v1831, 126
    %v1848 = vpop.permute.xlu0 %1847
    %1849 = vrot.lane.b32.xlu0 %v1832, 126
    %v1850 = vpop.permute.xlu0 %1849
    %1851 = vrot.lane.b32.xlu0 %v1833, 126
    %v1852 = vpop.permute.xlu0 %1851
    %1853 = vrot.lane.b32.xlu0 %v1834, 126
    %v1854 = vpop.permute.xlu0 %1853
    %1855 = vrot.lane.b32.xlu0 %v1835, 126
    %v1856 = vpop.permute.xlu0 %1855
    %vm1857 = vcmask 1031168
    %v1858 = vsel %vm1857, %v1844, %v1846
    %v1859 = vsel %vm1857, %v1846, %v1848
    %v1860 = vsel %vm1857, %v1848, %v1850
    %v1861 = vsel %vm1857, %v1850, %v1852
    %v1862 = vsel %vm1857, %v1852, %v1854
    %v1863 = vsel %vm1857, %v1854, %v1856
    %1870 = vst [vmem:[#allocation4 + $0x30] sm:$0xff] %v1858
    %1871 = vst [vmem:[#allocation4 + $0x38] sm:$0xff] %v1859
    %1872 = vst [vmem:[#allocation4 + $0x40] sm:$0xff] %v1860
    %1873 = vst [vmem:[#allocation4 + $0x48] sm:$0xff] %v1861
    %1874 = vst [vmem:[#allocation4 + $0x50] sm:$0xff] %v1862
    %1875 = vst [vmem:[#allocation4 + $0x58] sm:$0xff] %v1863
    %v1876 = vld [vmem:[#allocation3 + $0x8] sm:$0xff]
    %v1877 = vld [vmem:[#allocation3 + $0x10] sm:$0xff]
    %v1878 = vld [vmem:[#allocation3 + $0x18] sm:$0xff]
    %v1879 = vld [vmem:[#allocation3 + $0x20] sm:$0xff]
    %v1880 = vld [vmem:[#allocation3 + $0x28] sm:$0xff]
    %v1881 = vld [vmem:[#allocation3 + $0x30] sm:$0xff]
    %v1882 = vld [vmem:[#allocation3 + $0x38] sm:$0xff]
    %1890 = vrot.lane.b32.xlu0 %v1876, 127
    %v1891 = vpop.permute.xlu0 %1890
    %1892 = vrot.lane.b32.xlu0 %v1877, 127
    %v1893 = vpop.permute.xlu0 %1892
    %1894 = vrot.lane.b32.xlu0 %v1878, 127
    %v1895 = vpop.permute.xlu0 %1894
    %1896 = vrot.lane.b32.xlu0 %v1879, 127
    %v1897 = vpop.permute.xlu0 %1896
    %1898 = vrot.lane.b32.xlu0 %v1880, 127
    %v1899 = vpop.permute.xlu0 %1898
    %1900 = vrot.lane.b32.xlu0 %v1881, 127
    %v1901 = vpop.permute.xlu0 %1900
    %1902 = vrot.lane.b32.xlu0 %v1882, 127
    %v1903 = vpop.permute.xlu0 %1902
    %v1904 = vsel %vm145, %v1891, %v1893
    %v1905 = vsel %vm145, %v1893, %v1895
    %v1906 = vsel %vm145, %v1895, %v1897
    %v1907 = vsel %vm145, %v1897, %v1899
    %v1908 = vsel %vm145, %v1899, %v1901
    %v1909 = vsel %vm145, %v1901, %v1903
    %v1917 = vpack.c.bf16 %v1904, %v1876
    %v1918 = vpack.c.bf16 %v1905, %v1877
    %v1919 = vpack.c.bf16 %v1906, %v1878
    %v1920 = vpack.c.bf16 %v1907, %v1879
    %v1921 = vpack.c.bf16 %v1908, %v1880
    %v1922 = vpack.c.bf16 %v1909, %v1881
    %v1923 = vpack.c.bf16 %v1903, %v1882
    %1931 = vrot.lane.b32.xlu0 %v1917, 110
    %v1932 = vpop.permute.xlu0 %1931
    %1933 = vrot.lane.b32.xlu0 %v1918, 110
    %v1934 = vpop.permute.xlu0 %1933
    %1935 = vrot.lane.b32.xlu0 %v1919, 110
    %v1936 = vpop.permute.xlu0 %1935
    %1937 = vrot.lane.b32.xlu0 %v1920, 110
    %v1938 = vpop.permute.xlu0 %1937
    %1939 = vrot.lane.b32.xlu0 %v1921, 110
    %v1940 = vpop.permute.xlu0 %1939
    %1941 = vrot.lane.b32.xlu0 %v1922, 110
    %v1942 = vpop.permute.xlu0 %1941
    %1943 = vrot.lane.b32.xlu0 %v1923, 110
    %v1944 = vpop.permute.xlu0 %1943
    %vm1945 = vcmask 900096
    %v1946 = vsel %vm1945, %v1932, %v1934
    %v1947 = vsel %vm1945, %v1934, %v1936
    %v1948 = vsel %vm1945, %v1936, %v1938
    %v1949 = vsel %vm1945, %v1938, %v1940
    %v1950 = vsel %vm1945, %v1940, %v1942
    %v1951 = vsel %vm1945, %v1942, %v1944
    %1958 = vst [vmem:[#allocation4 + $0x60] sm:$0xff] %v1946
    %1959 = vst [vmem:[#allocation4 + $0x68] sm:$0xff] %v1947
    %1960 = vst [vmem:[#allocation4 + $0x70] sm:$0xff] %v1948
    %1961 = vst [vmem:[#allocation4 + $0x78] sm:$0xff] %v1949
    %1962 = vst [vmem:[#allocation4 + $0x80] sm:$0xff] %v1950
    %1963 = vst [vmem:[#allocation4 + $0x88] sm:$0xff] %v1951
    %v1964 = vld [vmem:[#allocation3 + $0x8] sm:$0xff]
    %v1965 = vld [vmem:[#allocation3 + $0x10] sm:$0xff]
    %v1966 = vld [vmem:[#allocation3 + $0x18] sm:$0xff]
    %v1967 = vld [vmem:[#allocation3 + $0x20] sm:$0xff]
    %v1968 = vld [vmem:[#allocation3 + $0x28] sm:$0xff]
    %v1969 = vld [vmem:[#allocation3 + $0x30] sm:$0xff]
    %v1970 = vld [vmem:[#allocation3 + $0x38] sm:$0xff]
    %1978 = vrot.lane.b32.xlu0 %v1964, 127
    %v1979 = vpop.permute.xlu0 %1978
    %1980 = vrot.lane.b32.xlu0 %v1965, 127
    %v1981 = vpop.permute.xlu0 %1980
    %1982 = vrot.lane.b32.xlu0 %v1966, 127
    %v1983 = vpop.permute.xlu0 %1982
    %1984 = vrot.lane.b32.xlu0 %v1967, 127
    %v1985 = vpop.permute.xlu0 %1984
    %1986 = vrot.lane.b32.xlu0 %v1968, 127
    %v1987 = vpop.permute.xlu0 %1986
    %1988 = vrot.lane.b32.xlu0 %v1969, 127
    %v1989 = vpop.permute.xlu0 %1988
    %1990 = vrot.lane.b32.xlu0 %v1970, 127
    %v1991 = vpop.permute.xlu0 %1990
    %v1992 = vsel %vm145, %v1979, %v1981
    %v1993 = vsel %vm145, %v1981, %v1983
    %v1994 = vsel %vm145, %v1983, %v1985
    %v1995 = vsel %vm145, %v1985, %v1987
    %v1996 = vsel %vm145, %v1987, %v1989
    %v1997 = vsel %vm145, %v1989, %v1991
    %v2005 = vpack.c.bf16 %v1992, %v1964
    %v2006 = vpack.c.bf16 %v1993, %v1965
    %v2007 = vpack.c.bf16 %v1994, %v1966
    %v2008 = vpack.c.bf16 %v1995, %v1967
    %v2009 = vpack.c.bf16 %v1996, %v1968
    %v2010 = vpack.c.bf16 %v1997, %v1969
    %v2011 = vpack.c.bf16 %v1991, %v1970
    %2019 = vrot.lane.b32.xlu0 %v2005, 108
    %v2020 = vpop.permute.xlu0 %2019
    %2021 = vrot.lane.b32.xlu0 %v2006, 108
    %v2022 = vpop.permute.xlu0 %2021
    %2023 = vrot.lane.b32.xlu0 %v2007, 108
    %v2024 = vpop.permute.xlu0 %2023
    %2025 = vrot.lane.b32.xlu0 %v2008, 108
    %v2026 = vpop.permute.xlu0 %2025
    %2027 = vrot.lane.b32.xlu0 %v2009, 108
    %v2028 = vpop.permute.xlu0 %2027
    %2029 = vrot.lane.b32.xlu0 %v2010, 108
    %v2030 = vpop.permute.xlu0 %2029
    %2031 = vrot.lane.b32.xlu0 %v2011, 108
    %v2032 = vpop.permute.xlu0 %2031
    %vm2033 = vcmask 883712
    %v2034 = vsel %vm2033, %v2020, %v2022
    %v2035 = vsel %vm2033, %v2022, %v2024
    %v2036 = vsel %vm2033, %v2024, %v2026
    %v2037 = vsel %vm2033, %v2026, %v2028
    %v2038 = vsel %vm2033, %v2028, %v2030
    %v2039 = vsel %vm2033, %v2030, %v2032
    %2046 = vst [vmem:[#allocation4 + $0x90] sm:$0xff] %v2034
    %2047 = vst [vmem:[#allocation4 + $0x98] sm:$0xff] %v2035
    %2048 = vst [vmem:[#allocation4 + $0xa0] sm:$0xff] %v2036
    %2049 = vst [vmem:[#allocation4 + $0xa8] sm:$0xff] %v2037
    %2050 = vst [vmem:[#allocation4 + $0xb0] sm:$0xff] %v2038
    %2051 = vst [vmem:[#allocation4 + $0xb8] sm:$0xff] %v2039
    %v2052 = vld [vmem:[#allocation3 + $0x8] sm:$0xff]
    %v2053 = vld [vmem:[#allocation3 + $0x10] sm:$0xff]
    %v2054 = vld [vmem:[#allocation3 + $0x18] sm:$0xff]
    %v2055 = vld [vmem:[#allocation3 + $0x20] sm:$0xff]
    %v2056 = vld [vmem:[#allocation3 + $0x28] sm:$0xff]
    %v2057 = vld [vmem:[#allocation3 + $0x30] sm:$0xff]
    %v2058 = vld [vmem:[#allocation3 + $0x38] sm:$0xff]
    %2066 = vrot.lane.b32.xlu0 %v2052, 127
    %v2067 = vpop.permute.xlu0 %2066
    %2068 = vrot.lane.b32.xlu0 %v2053, 127
    %v2069 = vpop.permute.xlu0 %2068
    %2070 = vrot.lane.b32.xlu0 %v2054, 127
    %v2071 = vpop.permute.xlu0 %2070
    %2072 = vrot.lane.b32.xlu0 %v2055, 127
    %v2073 = vpop.permute.xlu0 %2072
    %2074 = vrot.lane.b32.xlu0 %v2056, 127
    %v2075 = vpop.permute.xlu0 %2074
    %2076 = vrot.lane.b32.xlu0 %v2057, 127
    %v2077 = vpop.permute.xlu0 %2076
    %2078 = vrot.lane.b32.xlu0 %v2058, 127
    %v2079 = vpop.permute.xlu0 %2078
    %v2080 = vsel %vm145, %v2067, %v2069
    %v2081 = vsel %vm145, %v2069, %v2071
    %v2082 = vsel %vm145, %v2071, %v2073
    %v2083 = vsel %vm145, %v2073, %v2075
    %v2084 = vsel %vm145, %v2075, %v2077
    %v2085 = vsel %vm145, %v2077, %v2079
    %v2093 = vpack.c.bf16 %v2080, %v2052
    %v2094 = vpack.c.bf16 %v2081, %v2053
    %v2095 = vpack.c.bf16 %v2082, %v2054
    %v2096 = vpack.c.bf16 %v2083, %v2055
    %v2097 = vpack.c.bf16 %v2084, %v2056
    %v2098 = vpack.c.bf16 %v2085, %v2057
    %v2099 = vpack.c.bf16 %v2079, %v2058
    %2107 = vrot.lane.b32.xlu0 %v2093, 92
    %v2108 = vpop.permute.xlu0 %2107
    %2109 = vrot.lane.b32.xlu0 %v2094, 92
    %v2110 = vpop.permute.xlu0 %2109
    %2111 = vrot.lane.b32.xlu0 %v2095, 92
    %v2112 = vpop.permute.xlu0 %2111
    %2113 = vrot.lane.b32.xlu0 %v2096, 92
    %v2114 = vpop.permute.xlu0 %2113
    %2115 = vrot.lane.b32.xlu0 %v2097, 92
    %v2116 = vpop.permute.xlu0 %2115
    %2117 = vrot.lane.b32.xlu0 %v2098, 92
    %v2118 = vpop.permute.xlu0 %2117
    %2119 = vrot.lane.b32.xlu0 %v2099, 92
    %v2120 = vpop.permute.xlu0 %2119
    %vm2121 = vcmask 752640
    %v2122 = vsel %vm2121, %v2108, %v2110
    %v2123 = vsel %vm2121, %v2110, %v2112
    %v2124 = vsel %vm2121, %v2112, %v2114
    %v2125 = vsel %vm2121, %v2114, %v2116
    %v2126 = vsel %vm2121, %v2116, %v2118
    %v2127 = vsel %vm2121, %v2118, %v2120
    %2134 = vst [vmem:[#allocation4 + $0xc0] sm:$0xff] %v2122
    %2135 = vst [vmem:[#allocation4 + $0xc8] sm:$0xff] %v2123
    %2136 = vst [vmem:[#allocation4 + $0xd0] sm:$0xff] %v2124
    %2137 = vst [vmem:[#allocation4 + $0xd8] sm:$0xff] %v2125
    %2138 = vst [vmem:[#allocation4 + $0xe0] sm:$0xff] %v2126
    %2139 = vst [vmem:[#allocation4 + $0xe8] sm:$0xff] %v2127
    %v2140 = vld [vmem:[#allocation3 + $0x8] sm:$0xff]
    %v2141 = vld [vmem:[#allocation3 + $0x10] sm:$0xff]
    %v2142 = vld [vmem:[#allocation3 + $0x18] sm:$0xff]
    %v2143 = vld [vmem:[#allocation3 + $0x20] sm:$0xff]
    %v2144 = vld [vmem:[#allocation3 + $0x28] sm:$0xff]
    %v2145 = vld [vmem:[#allocation3 + $0x30] sm:$0xff]
    %v2146 = vld [vmem:[#allocation3 + $0x38] sm:$0xff]
    %2154 = vrot.lane.b32.xlu0 %v2140, 127
    %v2155 = vpop.permute.xlu0 %2154
    %2156 = vrot.lane.b32.xlu0 %v2141, 127
    %v2157 = vpop.permute.xlu0 %2156
    %2158 = vrot.lane.b32.xlu0 %v2142, 127
    %v2159 = vpop.permute.xlu0 %2158
    %2160 = vrot.lane.b32.xlu0 %v2143, 127
    %v2161 = vpop.permute.xlu0 %2160
    %2162 = vrot.lane.b32.xlu0 %v2144, 127
    %v2163 = vpop.permute.xlu0 %2162
    %2164 = vrot.lane.b32.xlu0 %v2145, 127
    %v2165 = vpop.permute.xlu0 %2164
    %2166 = vrot.lane.b32.xlu0 %v2146, 127
    %v2167 = vpop.permute.xlu0 %2166
    %v2168 = vsel %vm145, %v2155, %v2157
    %v2169 = vsel %vm145, %v2157, %v2159
    %v2170 = vsel %vm145, %v2159, %v2161
    %v2171 = vsel %vm145, %v2161, %v2163
    %v2172 = vsel %vm145, %v2163, %v2165
    %v2173 = vsel %vm145, %v2165, %v2167
    %v2181 = vpack.c.bf16 %v2168, %v2140
    %v2182 = vpack.c.bf16 %v2169, %v2141
    %v2183 = vpack.c.bf16 %v2170, %v2142
    %v2184 = vpack.c.bf16 %v2171, %v2143
    %v2185 = vpack.c.bf16 %v2172, %v2144
    %v2186 = vpack.c.bf16 %v2173, %v2145
    %v2187 = vpack.c.bf16 %v2167, %v2146
    %2195 = vrot.lane.b32.xlu0 %v2181, 90
    %v2196 = vpop.permute.xlu0 %2195
    %2197 = vrot.lane.b32.xlu0 %v2182, 90
    %v2198 = vpop.permute.xlu0 %2197
    %2199 = vrot.lane.b32.xlu0 %v2183, 90
    %v2200 = vpop.permute.xlu0 %2199
    %2201 = vrot.lane.b32.xlu0 %v2184, 90
    %v2202 = vpop.permute.xlu0 %2201
    %2203 = vrot.lane.b32.xlu0 %v2185, 90
    %v2204 = vpop.permute.xlu0 %2203
    %2205 = vrot.lane.b32.xlu0 %v2186, 90
    %v2206 = vpop.permute.xlu0 %2205
    %2207 = vrot.lane.b32.xlu0 %v2187, 90
    %v2208 = vpop.permute.xlu0 %2207
    %vm2209 = vcmask 736256
    %v2210 = vsel %vm2209, %v2196, %v2198
    %v2211 = vsel %vm2209, %v2198, %v2200
    %v2212 = vsel %vm2209, %v2200, %v2202
    %v2213 = vsel %vm2209, %v2202, %v2204
    %v2214 = vsel %vm2209, %v2204, %v2206
    %v2215 = vsel %vm2209, %v2206, %v2208
    %2222 = vst [vmem:[#allocation4 + $0xf0] sm:$0xff] %v2210
    %2223 = vst [vmem:[#allocation4 + $0xf8] sm:$0xff] %v2211
    %2224 = vst [vmem:[#allocation4 + $0x100] sm:$0xff] %v2212
    %2225 = vst [vmem:[#allocation4 + $0x108] sm:$0xff] %v2213
    %2226 = vst [vmem:[#allocation4 + $0x110] sm:$0xff] %v2214
    %2227 = vst [vmem:[#allocation4 + $0x118] sm:$0xff] %v2215
    %v2228 = vld [vmem:[#allocation3 + $0x8] sm:$0xff]
    %v2229 = vld [vmem:[#allocation3 + $0x10] sm:$0xff]
    %v2230 = vld [vmem:[#allocation3 + $0x18] sm:$0xff]
    %v2231 = vld [vmem:[#allocation3 + $0x20] sm:$0xff]
    %v2232 = vld [vmem:[#allocation3 + $0x28] sm:$0xff]
    %v2233 = vld [vmem:[#allocation3 + $0x30] sm:$0xff]
    %v2234 = vld [vmem:[#allocation3 + $0x38] sm:$0xff]
    %2242 = vrot.lane.b32.xlu0 %v2228, 127
    %v2243 = vpop.permute.xlu0 %2242
    %2244 = vrot.lane.b32.xlu0 %v2229, 127
    %v2245 = vpop.permute.xlu0 %2244
    %2246 = vrot.lane.b32.xlu0 %v2230, 127
    %v2247 = vpop.permute.xlu0 %2246
    %2248 = vrot.lane.b32.xlu0 %v2231, 127
    %v2249 = vpop.permute.xlu0 %2248
    %2250 = vrot.lane.b32.xlu0 %v2232, 127
    %v2251 = vpop.permute.xlu0 %2250
    %2252 = vrot.lane.b32.xlu0 %v2233, 127
    %v2253 = vpop.permute.xlu0 %2252
    %2254 = vrot.lane.b32.xlu0 %v2234, 127
    %v2255 = vpop.permute.xlu0 %2254
    %v2256 = vsel %vm145, %v2243, %v2245
    %v2257 = vsel %vm145, %v2245, %v2247
    %v2258 = vsel %vm145, %v2247, %v2249
    %v2259 = vsel %vm145, %v2249, %v2251
    %v2260 = vsel %vm145, %v2251, %v2253
    %v2261 = vsel %vm145, %v2253, %v2255
    %v2269 = vpack.c.bf16 %v2256, %v2228
    %v2270 = vpack.c.bf16 %v2257, %v2229
    %v2271 = vpack.c.bf16 %v2258, %v2230
    %v2272 = vpack.c.bf16 %v2259, %v2231
    %v2273 = vpack.c.bf16 %v2260, %v2232
    %v2274 = vpack.c.bf16 %v2261, %v2233
    %v2275 = vpack.c.bf16 %v2255, %v2234
    %2283 = vrot.lane.b32.xlu0 %v2269, 74
    %v2284 = vpop.permute.xlu0 %2283
    %2285 = vrot.lane.b32.xlu0 %v2270, 74
    %v2286 = vpop.permute.xlu0 %2285
    %2287 = vrot.lane.b32.xlu0 %v2271, 74
    %v2288 = vpop.permute.xlu0 %2287
    %2289 = vrot.lane.b32.xlu0 %v2272, 74
    %v2290 = vpop.permute.xlu0 %2289
    %2291 = vrot.lane.b32.xlu0 %v2273, 74
    %v2292 = vpop.permute.xlu0 %2291
    %2293 = vrot.lane.b32.xlu0 %v2274, 74
    %v2294 = vpop.permute.xlu0 %2293
    %2295 = vrot.lane.b32.xlu0 %v2275, 74
    %v2296 = vpop.permute.xlu0 %2295
    %vm2297 = vcmask 605184
    %v2298 = vsel %vm2297, %v2284, %v2286
    %v2299 = vsel %vm2297, %v2286, %v2288
    %v2300 = vsel %vm2297, %v2288, %v2290
    %v2301 = vsel %vm2297, %v2290, %v2292
    %v2302 = vsel %vm2297, %v2292, %v2294
    %v2303 = vsel %vm2297, %v2294, %v2296
    %2310 = vst [vmem:[#allocation4 + $0x120] sm:$0xff] %v2298
    %2311 = vst [vmem:[#allocation4 + $0x128] sm:$0xff] %v2299
    %2312 = vst [vmem:[#allocation4 + $0x130] sm:$0xff] %v2300
    %2313 = vst [vmem:[#allocation4 + $0x138] sm:$0xff] %v2301
    %2314 = vst [vmem:[#allocation4 + $0x140] sm:$0xff] %v2302
    %2315 = vst [vmem:[#allocation4 + $0x148] sm:$0xff] %v2303
    %v2316 = vld [vmem:[#allocation3 + $0x8] sm:$0xff]
    %v2317 = vld [vmem:[#allocation3 + $0x10] sm:$0xff]
    %v2318 = vld [vmem:[#allocation3 + $0x18] sm:$0xff]
    %v2319 = vld [vmem:[#allocation3 + $0x20] sm:$0xff]
    %v2320 = vld [vmem:[#allocation3 + $0x28] sm:$0xff]
    %v2321 = vld [vmem:[#allocation3 + $0x30] sm:$0xff]
    %v2322 = vld [vmem:[#allocation3 + $0x38] sm:$0xff]
    %2330 = vrot.lane.b32.xlu0 %v2316, 127
    %v2331 = vpop.permute.xlu0 %2330
    %2332 = vrot.lane.b32.xlu0 %v2317, 127
    %v2333 = vpop.permute.xlu0 %2332
    %2334 = vrot.lane.b32.xlu0 %v2318, 127
    %v2335 = vpop.permute.xlu0 %2334
    %2336 = vrot.lane.b32.xlu0 %v2319, 127
    %v2337 = vpop.permute.xlu0 %2336
    %2338 = vrot.lane.b32.xlu0 %v2320, 127
    %v2339 = vpop.permute.xlu0 %2338
    %2340 = vrot.lane.b32.xlu0 %v2321, 127
    %v2341 = vpop.permute.xlu0 %2340
    %2342 = vrot.lane.b32.xlu0 %v2322, 127
    %v2343 = vpop.permute.xlu0 %2342
    %v2344 = vsel %vm145, %v2331, %v2333
    %v2345 = vsel %vm145, %v2333, %v2335
    %v2346 = vsel %vm145, %v2335, %v2337
    %v2347 = vsel %vm145, %v2337, %v2339
    %v2348 = vsel %vm145, %v2339, %v2341
    %v2349 = vsel %vm145, %v2341, %v2343
    %v2357 = vpack.c.bf16 %v2344, %v2316
    %v2358 = vpack.c.bf16 %v2345, %v2317
    %v2359 = vpack.c.bf16 %v2346, %v2318
    %v2360 = vpack.c.bf16 %v2347, %v2319
    %v2361 = vpack.c.bf16 %v2348, %v2320
    %v2362 = vpack.c.bf16 %v2349, %v2321
    %v2363 = vpack.c.bf16 %v2343, %v2322
    %2371 = vrot.lane.b32.xlu0 %v2357, 72
    %v2372 = vpop.permute.xlu0 %2371
    %2373 = vrot.lane.b32.xlu0 %v2358, 72
    %v2374 = vpop.permute.xlu0 %2373
    %2375 = vrot.lane.b32.xlu0 %v2359, 72
    %v2376 = vpop.permute.xlu0 %2375
    %2377 = vrot.lane.b32.xlu0 %v2360, 72
    %v2378 = vpop.permute.xlu0 %2377
    %2379 = vrot.lane.b32.xlu0 %v2361, 72
    %v2380 = vpop.permute.xlu0 %2379
    %2381 = vrot.lane.b32.xlu0 %v2362, 72
    %v2382 = vpop.permute.xlu0 %2381
    %2383 = vrot.lane.b32.xlu0 %v2363, 72
    %v2384 = vpop.permute.xlu0 %2383
    %vm2385 = vcmask 588800
    %v2386 = vsel %vm2385, %v2372, %v2374
    %v2387 = vsel %vm2385, %v2374, %v2376
    %v2388 = vsel %vm2385, %v2376, %v2378
    %v2389 = vsel %vm2385, %v2378, %v2380
    %v2390 = vsel %vm2385, %v2380, %v2382
    %v2391 = vsel %vm2385, %v2382, %v2384
    %2398 = vst [vmem:[#allocation4 + $0x150] sm:$0xff] %v2386
    %2399 = vst [vmem:[#allocation4 + $0x158] sm:$0xff] %v2387
    %2400 = vst [vmem:[#allocation4 + $0x160] sm:$0xff] %v2388
    %2401 = vst [vmem:[#allocation4 + $0x168] sm:$0xff] %v2389
    %2402 = vst [vmem:[#allocation4 + $0x170] sm:$0xff] %v2390
    %2403 = vst [vmem:[#allocation4 + $0x178] sm:$0xff] %v2391
    %v2404 = vld [vmem:[%s18] sm:$0xf]
    %v2405 = vld [vmem:[#allocation4] sm:$0xff]
    %v2406 = vld [vmem:[#allocation4 + $0x8] sm:$0xff]
    %v2407 = vld [vmem:[#allocation4 + $0x10] sm:$0xff]
    %v2408 = vld [vmem:[#allocation4 + $0x18] sm:$0xff]
    %v2409 = vld [vmem:[#allocation4 + $0x20] sm:$0xff]
    %v2410 = vld [vmem:[#allocation4 + $0x28] sm:$0xff]
    %v2411 = vld [vmem:[#allocation4 + $0x30] sm:$0xff]
    %v2412 = vld [vmem:[#allocation4 + $0x38] sm:$0xff]
    %v2413 = vld [vmem:[#allocation4 + $0x40] sm:$0xff]
    %v2414 = vld [vmem:[#allocation4 + $0x48] sm:$0xff]
    %v2415 = vld [vmem:[#allocation4 + $0x50] sm:$0xff]
    %v2416 = vld [vmem:[#allocation4 + $0x58] sm:$0xff]
    %v2417 = vld [vmem:[#allocation4 + $0x60] sm:$0xff]
    %v2418 = vld [vmem:[#allocation4 + $0x68] sm:$0xff]
    %v2419 = vld [vmem:[#allocation4 + $0x70] sm:$0xff]
    %v2420 = vld [vmem:[#allocation4 + $0x78] sm:$0xff]
    %v2421 = vld [vmem:[#allocation4 + $0x80] sm:$0xff]
    %v2422 = vld [vmem:[#allocation4 + $0x88] sm:$0xff]
    %v2423 = vld [vmem:[#allocation4 + $0x90] sm:$0xff]
    %v2424 = vld [vmem:[#allocation4 + $0x98] sm:$0xff]
    %v2425 = vld [vmem:[#allocation4 + $0xa0] sm:$0xff]
    %v2426 = vld [vmem:[#allocation4 + $0xa8] sm:$0xff]
    %v2427 = vld [vmem:[#allocation4 + $0xb0] sm:$0xff]
    %v2428 = vld [vmem:[#allocation4 + $0xb8] sm:$0xff]
    %v2429 = vld [vmem:[#allocation4 + $0xc0] sm:$0xff]
    %v2430 = vld [vmem:[#allocation4 + $0xc8] sm:$0xff]
    %v2431 = vld [vmem:[#allocation4 + $0xd0] sm:$0xff]
    %v2432 = vld [vmem:[#allocation4 + $0xd8] sm:$0xff]
    %v2433 = vld [vmem:[#allocation4 + $0xe0] sm:$0xff]
    %v2434 = vld [vmem:[#allocation4 + $0xe8] sm:$0xff]
    %v2435 = vld [vmem:[#allocation4 + $0xf0] sm:$0xff]
    %v2436 = vld [vmem:[#allocation4 + $0xf8] sm:$0xff]
    %v2437 = vld [vmem:[#allocation4 + $0x100] sm:$0xff]
    %v2438 = vld [vmem:[#allocation4 + $0x108] sm:$0xff]
    %v2439 = vld [vmem:[#allocation4 + $0x110] sm:$0xff]
    %v2440 = vld [vmem:[#allocation4 + $0x118] sm:$0xff]
    %v2441 = vld [vmem:[#allocation4 + $0x120] sm:$0xff]
    %v2442 = vld [vmem:[#allocation4 + $0x128] sm:$0xff]
    %v2443 = vld [vmem:[#allocation4 + $0x130] sm:$0xff]
    %v2444 = vld [vmem:[#allocation4 + $0x138] sm:$0xff]
    %v2445 = vld [vmem:[#allocation4 + $0x140] sm:$0xff]
    %v2446 = vld [vmem:[#allocation4 + $0x148] sm:$0xff]
    %v2447 = vld [vmem:[#allocation4 + $0x150] sm:$0xff]
    %v2448 = vld [vmem:[#allocation4 + $0x158] sm:$0xff]
    %v2449 = vld [vmem:[#allocation4 + $0x160] sm:$0xff]
    %v2450 = vld [vmem:[#allocation4 + $0x168] sm:$0xff]
    %v2451 = vld [vmem:[#allocation4 + $0x170] sm:$0xff]
    %v2452 = vld [vmem:[#allocation4 + $0x178] sm:$0xff]
    %v2453 = vld [vmem:[%s19] sm:$0xff]
    %2455 = vset.pattern.permute.xlu0 0
    %2456 = vperm.xlu0 %2455, %v2453
    %v2457 = vpop.permute.xlu0 %2456
    %2459 = vmatprep.subr.bf16.mxu0 %v2406
    %2460 = vmatpush1.bf16.msra.mxu0 %v2405
    %2461 = vmatprep.subr.bf16.mxu0 %v2412
    %2462 = vmatpush1.bf16.msra.mxu0 %v2411
    %2463 = vmatprep.subr.bf16.mxu0 %v2418
    %2464 = vmatpush1.bf16.msra.mxu0 %v2417
    %2465 = vmatprep.subr.bf16.mxu0 %v2424
    %2466 = vmatpush1.bf16.msra.mxu0 %v2423
    %2467 = vmatprep.subr.bf16.mxu0 %v2430
    %2468 = vmatpush1.bf16.msra.mxu0 %v2429
    %2469 = vmatprep.subr.bf16.mxu0 %v2436
    %2470 = vmatpush1.bf16.msra.mxu0 %v2435
    %2471 = vmatprep.subr.bf16.mxu0 %v2442
    %2472 = vmatpush1.bf16.msra.mxu0 %v2441
    %2473 = vmatprep.subr.bf16.mxu0 %v2448
    %2474 = vmatpush1.bf16.msra.mxu0 %v2447
    %2475 = vmatprep.subr.bf16.mxu0 0
    %2476 = vmatpush1.bf16.msra.mxu0 0
    %2477 = vmatprep.subr.bf16.mxu0 0
    %2478 = vmatpush1.bf16.msra.mxu0 0
    %2479 = vmatprep.subr.bf16.mxu0 0
    %2480 = vmatpush1.bf16.msra.mxu0 0
    %2481 = vmatprep.subr.bf16.mxu0 0
    %2482 = vmatpush1.bf16.msra.mxu0 0
    %2483 = vmatprep.subr.bf16.mxu0 0
    %2484 = vmatpush1.bf16.msra.mxu0 0
    %2485 = vmatprep.subr.bf16.mxu0 0
    %2486 = vmatpush1.bf16.msra.mxu0 0
    %2487 = vmatprep.subr.bf16.mxu0 0
    %2488 = vmatpush1.bf16.msra.mxu0 0
    %2489 = vmatprep.subr.bf16.mxu0 0
    %2490 = vmatpush1.bf16.msra.mxu0 0
    %2491 = vmatprep.mubr.bf16.mxu0 0
    %2492 = vmatmul.mubr.bf16.gmra.mrb[0].mxu0 %v2404
    %v2493 = vpop.f32.mrb[0].mxu0
    %v2494 = vadd.f32 %v2457, %v2493
    %v2495 = vpop.f32.mrb[0].mxu0
    %v2496 = vadd.f32 %v2457, %v2495
    %v2497 = vpop.f32.mrb[0].mxu0
    %v2498 = vpop.f32.mrb[0].mxu0
    %2499 = vdwg.mxu0
    %2500 = vmatprep.subr.bf16.mxu0 %v2408
    %2501 = vmatpush1.bf16.msra.mxu0 %v2407
    %2502 = vmatprep.subr.bf16.mxu0 %v2414
    %2503 = vmatpush1.bf16.msra.mxu0 %v2413
    %2504 = vmatprep.subr.bf16.mxu0 %v2420
    %2505 = vmatpush1.bf16.msra.mxu0 %v2419
    %2506 = vmatprep.subr.bf16.mxu0 %v2426
    %2507 = vmatpush1.bf16.msra.mxu0 %v2425
    %2508 = vmatprep.subr.bf16.mxu0 %v2432
    %2509 = vmatpush1.bf16.msra.mxu0 %v2431
    %2510 = vmatprep.subr.bf16.mxu0 %v2438
    %2511 = vmatpush1.bf16.msra.mxu0 %v2437
    %2512 = vmatprep.subr.bf16.mxu0 %v2444
    %2513 = vmatpush1.bf16.msra.mxu0 %v2443
    %2514 = vmatprep.subr.bf16.mxu0 %v2450
    %2515 = vmatpush1.bf16.msra.mxu0 %v2449
    %2516 = vmatprep.subr.bf16.mxu0 0
    %2517 = vmatpush1.bf16.msra.mxu0 0
    %2518 = vmatprep.subr.bf16.mxu0 0
    %2519 = vmatpush1.bf16.msra.mxu0 0
    %2520 = vmatprep.subr.bf16.mxu0 0
    %2521 = vmatpush1.bf16.msra.mxu0 0
    %2522 = vmatprep.subr.bf16.mxu0 0
    %2523 = vmatpush1.bf16.msra.mxu0 0
    %2524 = vmatprep.subr.bf16.mxu0 0
    %2525 = vmatpush1.bf16.msra.mxu0 0
    %2526 = vmatprep.subr.bf16.mxu0 0
    %2527 = vmatpush1.bf16.msra.mxu0 0
    %2528 = vmatprep.subr.bf16.mxu0 0
    %2529 = vmatpush1.bf16.msra.mxu0 0
    %2530 = vmatprep.subr.bf16.mxu0 0
    %2531 = vmatpush1.bf16.msra.mxu0 0
    %2532 = vmatprep.mubr.bf16.mxu0 0
    %2533 = vmatmul.mubr.bf16.gmra.mrb[0].mxu0 %v2404
    %v2534 = vpop.f32.mrb[0].mxu0
    %v2535 = vadd.f32 %v2457, %v2534
    %v2536 = vpop.f32.mrb[0].mxu0
    %v2537 = vadd.f32 %v2457, %v2536
    %v2538 = vpop.f32.mrb[0].mxu0
    %v2539 = vpop.f32.mrb[0].mxu0
    %2540 = vdwg.mxu0
    %2541 = vmatprep.subr.bf16.mxu0 %v2410
    %2542 = vmatpush1.bf16.msra.mxu0 %v2409
    %2543 = vmatprep.subr.bf16.mxu0 %v2416
    %2544 = vmatpush1.bf16.msra.mxu0 %v2415
    %2545 = vmatprep.subr.bf16.mxu0 %v2422
    %2546 = vmatpush1.bf16.msra.mxu0 %v2421
    %2547 = vmatprep.subr.bf16.mxu0 %v2428
    %2548 = vmatpush1.bf16.msra.mxu0 %v2427
    %2549 = vmatprep.subr.bf16.mxu0 %v2434
    %2550 = vmatpush1.bf16.msra.mxu0 %v2433
    %2551 = vmatprep.subr.bf16.mxu0 %v2440
    %2552 = vmatpush1.bf16.msra.mxu0 %v2439
    %2553 = vmatprep.subr.bf16.mxu0 %v2446
    %2554 = vmatpush1.bf16.msra.mxu0 %v2445
    %2555 = vmatprep.subr.bf16.mxu0 %v2452
    %2556 = vmatpush1.bf16.msra.mxu0 %v2451
    %2557 = vmatprep.subr.bf16.mxu0 0
    %2558 = vmatpush1.bf16.msra.mxu0 0
    %2559 = vmatprep.subr.bf16.mxu0 0
    %2560 = vmatpush1.bf16.msra.mxu0 0
    %2561 = vmatprep.subr.bf16.mxu0 0
    %2562 = vmatpush1.bf16.msra.mxu0 0
    %2563 = vmatprep.subr.bf16.mxu0 0
    %2564 = vmatpush1.bf16.msra.mxu0 0
    %2565 = vmatprep.subr.bf16.mxu0 0
    %2566 = vmatpush1.bf16.msra.mxu0 0
    %2567 = vmatprep.subr.bf16.mxu0 0
    %2568 = vmatpush1.bf16.msra.mxu0 0
    %2569 = vmatprep.subr.bf16.mxu0 0
    %2570 = vmatpush1.bf16.msra.mxu0 0
    %2571 = vmatprep.subr.bf16.mxu0 0
    %2572 = vmatpush1.bf16.msra.mxu0 0
    %2573 = vmatprep.mubr.bf16.mxu0 0
    %2574 = vmatmul.mubr.bf16.gmra.mrb[0].mxu0 %v2404
    %v2575 = vpop.f32.mrb[0].mxu0
    %v2576 = vadd.f32 %v2457, %v2575
    %v2577 = vpop.f32.mrb[0].mxu0
    %v2578 = vadd.f32 %v2457, %v2577
    %v2579 = vpop.f32.mrb[0].mxu0
    %v2580 = vpop.f32.mrb[0].mxu0
    %2581 = vdwg.mxu0
    %v2582 = vld [vmem:[#allocation5] sm:$0xff]
    %v2583 = vld [vmem:[#allocation5 + $0x8] sm:$0xff]
    %v2584 = vld [vmem:[#allocation5 + $0x10] sm:$0xff]
    %v2585 = vld [vmem:[#allocation5 + $0x18] sm:$0xff]
    %v2586 = vld [vmem:[#allocation5 + $0x20] sm:$0xff]
    %v2587 = vld [vmem:[#allocation5 + $0x28] sm:$0xff]
    %v2588 = vld [vmem:[#allocation5 + $0x30] sm:$0xff]
    %v2589 = vld [vmem:[#allocation5 + $0x38] sm:$0xff]
    %v2590 = vld [vmem:[#allocation5 + $0x40] sm:$0xff]
    %v2591 = vld [vmem:[#allocation5 + $0x48] sm:$0xff]
    %v2592 = vld [vmem:[#allocation5 + $0x50] sm:$0xff]
    %v2593 = vld [vmem:[#allocation5 + $0x58] sm:$0xff]
    %v2594 = vld [vmem:[#allocation5 + $0x60] sm:$0xff]
    %v2595 = vld [vmem:[#allocation5 + $0x68] sm:$0xff]
    %v2596 = vld [vmem:[#allocation5 + $0x70] sm:$0xff]
    %v2597 = vld [vmem:[#allocation5 + $0x78] sm:$0xff]
    %v2598 = vld [vmem:[#allocation5 + $0x80] sm:$0xff]
    %v2599 = vld [vmem:[#allocation5 + $0x88] sm:$0xff]
    %v2600 = vld [vmem:[#allocation5 + $0x90] sm:$0xff]
    %v2601 = vld [vmem:[#allocation5 + $0x98] sm:$0xff]
    %v2602 = vld [vmem:[#allocation5 + $0xa0] sm:$0xff]
    %v2603 = vld [vmem:[#allocation5 + $0xa8] sm:$0xff]
    %v2604 = vld [vmem:[#allocation5 + $0xb0] sm:$0xff]
    %v2605 = vld [vmem:[#allocation5 + $0xb8] sm:$0xff]
    %v2606 = vld [vmem:[#allocation5 + $0xc0] sm:$0xff]
    %v2607 = vld [vmem:[#allocation5 + $0xc8] sm:$0xff]
    %v2608 = vld [vmem:[#allocation5 + $0xd0] sm:$0xff]
    %v2609 = vld [vmem:[#allocation5 + $0xd8] sm:$0xff]
    %v2610 = vld [vmem:[#allocation5 + $0xe0] sm:$0xff]
    %v2611 = vld [vmem:[#allocation5 + $0xe8] sm:$0xff]
    %v2612 = vld [vmem:[#allocation5 + $0xf0] sm:$0xff]
    %v2613 = vld [vmem:[#allocation5 + $0xf8] sm:$0xff]
    %v2614 = vld [vmem:[#allocation5 + $0x100] sm:$0xff]
    %v2615 = vld [vmem:[#allocation5 + $0x108] sm:$0xff]
    %v2616 = vld [vmem:[#allocation5 + $0x110] sm:$0xff]
    %v2617 = vld [vmem:[#allocation5 + $0x118] sm:$0xff]
    %v2618 = vld [vmem:[#allocation5 + $0x120] sm:$0xff]
    %v2619 = vld [vmem:[#allocation5 + $0x128] sm:$0xff]
    %v2620 = vld [vmem:[#allocation5 + $0x130] sm:$0xff]
    %v2621 = vld [vmem:[#allocation5 + $0x138] sm:$0xff]
    %v2622 = vld [vmem:[#allocation5 + $0x140] sm:$0xff]
    %v2623 = vld [vmem:[#allocation5 + $0x148] sm:$0xff]
    %v2624 = vld [vmem:[#allocation5 + $0x150] sm:$0xff]
    %v2625 = vld [vmem:[#allocation5 + $0x158] sm:$0xff]
    %v2626 = vld [vmem:[#allocation5 + $0x160] sm:$0xff]
    %v2627 = vld [vmem:[#allocation5 + $0x168] sm:$0xff]
    %v2628 = vld [vmem:[#allocation5 + $0x170] sm:$0xff]
    %v2629 = vld [vmem:[#allocation5 + $0x178] sm:$0xff]
    %v2630 = vld [vmem:[#allocation5 + $0x180] sm:$0xff]
    %v2631 = vld [vmem:[#allocation5 + $0x188] sm:$0xff]
    %v2632 = vld [vmem:[#allocation5 + $0x190] sm:$0xff]
    %v2633 = vld [vmem:[#allocation5 + $0x198] sm:$0xff]
    %v2634 = vld [vmem:[#allocation5 + $0x1a0] sm:$0xff]
    %v2635 = vld [vmem:[#allocation5 + $0x1a8] sm:$0xff]
    %v2636 = vld [vmem:[#allocation5 + $0x1b0] sm:$0xff]
    %v2637 = vld [vmem:[#allocation5 + $0x1b8] sm:$0xff]
    %v2638 = vld [vmem:[#allocation5 + $0x1c0] sm:$0xff]
    %v2639 = vld [vmem:[#allocation5 + $0x1c8] sm:$0xff]
    %v2640 = vld [vmem:[#allocation5 + $0x1d0] sm:$0xff]
    %v2641 = vld [vmem:[#allocation5 + $0x1d8] sm:$0xff]
    %v2642 = vld [vmem:[#allocation5 + $0x1e0] sm:$0xff]
    %v2643 = vld [vmem:[#allocation5 + $0x1e8] sm:$0xff]
    %v2644 = vld [vmem:[#allocation5 + $0x1f0] sm:$0xff]
    %v2645 = vld [vmem:[#allocation5 + $0x1f8] sm:$0xff]
    %v2646 = vld [vmem:[#allocation5 + $0x200] sm:$0xff]
    %v2647 = vld [vmem:[#allocation5 + $0x208] sm:$0xff]
    %v2648 = vld [vmem:[#allocation5 + $0x210] sm:$0xff]
    %v2649 = vld [vmem:[#allocation5 + $0x218] sm:$0xff]
    %v2650 = vld [vmem:[#allocation5 + $0x220] sm:$0xff]
    %v2651 = vld [vmem:[#allocation5 + $0x228] sm:$0xff]
    %v2652 = vld [vmem:[#allocation5 + $0x230] sm:$0xff]
    %v2653 = vld [vmem:[#allocation5 + $0x238] sm:$0xff]
    %v2654 = vld [vmem:[#allocation5 + $0x240] sm:$0xff]
    %v2655 = vld [vmem:[#allocation5 + $0x248] sm:$0xff]
    %v2656 = vld [vmem:[#allocation5 + $0x250] sm:$0xff]
    %v2657 = vld [vmem:[#allocation5 + $0x258] sm:$0xff]
    %v2658 = vld [vmem:[#allocation5 + $0x260] sm:$0xff]
    %v2659 = vld [vmem:[#allocation5 + $0x268] sm:$0xff]
    %v2660 = vld [vmem:[#allocation5 + $0x270] sm:$0xff]
    %v2661 = vld [vmem:[#allocation5 + $0x278] sm:$0xff]
    %v2662 = vld [vmem:[#allocation5 + $0x280] sm:$0xff]
    %v2663 = vld [vmem:[#allocation5 + $0x288] sm:$0xff]
    %v2664 = vld [vmem:[#allocation5 + $0x290] sm:$0xff]
    %v2665 = vld [vmem:[#allocation5 + $0x298] sm:$0xff]
    %v2666 = vld [vmem:[#allocation5 + $0x2a0] sm:$0xff]
    %v2667 = vld [vmem:[#allocation5 + $0x2a8] sm:$0xff]
    %v2668 = vld [vmem:[#allocation5 + $0x2b0] sm:$0xff]
    %v2669 = vld [vmem:[#allocation5 + $0x2b8] sm:$0xff]
    %v2670 = vld [vmem:[#allocation5 + $0x2c0] sm:$0xff]
    %v2671 = vld [vmem:[#allocation5 + $0x2c8] sm:$0xff]
    %v2672 = vld [vmem:[#allocation5 + $0x2d0] sm:$0xff]
    %v2673 = vld [vmem:[#allocation5 + $0x2d8] sm:$0xff]
    %v2674 = vld [vmem:[#allocation5 + $0x2e0] sm:$0xff]
    %v2675 = vld [vmem:[#allocation5 + $0x2e8] sm:$0xff]
    %v2676 = vld [vmem:[#allocation5 + $0x2f0] sm:$0xff]
    %v2677 = vld [vmem:[#allocation5 + $0x2f8] sm:$0xff]
    %2678 = vmatprep.subr.mxu0 0.0
    %2679 = vmatpush1.msra.mxu0 %v2582
    %2680 = vmatprep.subr.mxu0 0.0
    %2681 = vmatpush1.msra.mxu0 %v2583
    %2682 = vmatprep.subr.mxu0 0.0
    %2683 = vmatpush1.msra.mxu0 %v2584
    %2684 = vmatprep.subr.mxu0 0.0
    %2685 = vmatpush1.msra.mxu0 %v2585
    %2686 = vmatprep.subr.mxu0 0.0
    %2687 = vmatpush1.msra.mxu0 %v2586
    %2688 = vmatprep.subr.mxu0 0.0
    %2689 = vmatpush1.msra.mxu0 %v2587
    %2690 = vmatprep.subr.mxu0 0.0
    %2691 = vmatpush1.msra.mxu0 %v2588
    %2692 = vmatprep.subr.mxu0 0.0
    %2693 = vmatpush1.msra.mxu0 %v2589
    %2694 = vmatprep.subr.mxu0 0.0
    %2695 = vmatpush1.msra.mxu0 %v2590
    %2696 = vmatprep.subr.mxu0 0.0
    %2697 = vmatpush1.msra.mxu0 %v2591
    %2698 = vmatprep.subr.mxu0 0.0
    %2699 = vmatpush1.msra.mxu0 %v2592
    %2700 = vmatprep.subr.mxu0 0.0
    %2701 = vmatpush1.msra.mxu0 %v2593
    %2702 = vmatprep.subr.mxu0 0.0
    %2703 = vmatpush1.msra.mxu0 %v2594
    %2704 = vmatprep.subr.mxu0 0.0
    %2705 = vmatpush1.msra.mxu0 %v2595
    %2706 = vmatprep.subr.mxu0 0.0
    %2707 = vmatpush1.msra.mxu0 %v2596
    %2708 = vmatprep.subr.mxu0 0.0
    %2709 = vmatpush1.msra.mxu0 %v2597
    %2710 = vmatprep.subr.mxu0 0.0
    %2711 = vmatpush1.msra.mxu0 %v2598
    %2712 = vmatprep.subr.mxu0 0.0
    %2713 = vmatpush1.msra.mxu0 %v2599
    %2714 = vmatprep.subr.mxu0 0.0
    %2715 = vmatpush1.msra.mxu0 %v2600
    %2716 = vmatprep.subr.mxu0 0.0
    %2717 = vmatpush1.msra.mxu0 %v2601
    %2718 = vmatprep.subr.mxu0 0.0
    %2719 = vmatpush1.msra.mxu0 %v2602
    %2720 = vmatprep.subr.mxu0 0.0
    %2721 = vmatpush1.msra.mxu0 %v2603
    %2722 = vmatprep.subr.mxu0 0.0
    %2723 = vmatpush1.msra.mxu0 %v2604
    %2724 = vmatprep.subr.mxu0 0.0
    %2725 = vmatpush1.msra.mxu0 %v2605
    %2726 = vmatprep.subr.mxu0 0.0
    %2727 = vmatpush1.msra.mxu0 %v2606
    %2728 = vmatprep.subr.mxu0 0.0
    %2729 = vmatpush1.msra.mxu0 %v2607
    %2730 = vmatprep.subr.mxu0 0.0
    %2731 = vmatpush1.msra.mxu0 %v2608
    %2732 = vmatprep.subr.mxu0 0.0
    %2733 = vmatpush1.msra.mxu0 %v2609
    %2734 = vmatprep.subr.mxu0 0.0
    %2735 = vmatpush1.msra.mxu0 %v2610
    %2736 = vmatprep.subr.mxu0 0.0
    %2737 = vmatpush1.msra.mxu0 %v2611
    %2738 = vmatprep.subr.mxu0 0.0
    %2739 = vmatpush1.msra.mxu0 %v2612
    %2740 = vmatprep.subr.mxu0 0.0
    %2741 = vmatpush1.msra.mxu0 %v2613
    %2742 = vmatprep.mubr.f32.mxu0 %v2496
    %2743 = vmatmul.mubr.f32.gmra.mrb[0].mxu0 %v2494
    %v2744 = vpop.f32.mrb[0].mxu0
    %v2745 = vadd.f32 0.0, %v2744
    %v2746 = vpop.f32.mrb[0].mxu0
    %2747 = vdwg.mxu0
    %2748 = vmatprep.subr.mxu0 0.0
    %2749 = vmatpush1.msra.mxu0 %v2614
    %2750 = vmatprep.subr.mxu0 0.0
    %2751 = vmatpush1.msra.mxu0 %v2615
    %2752 = vmatprep.subr.mxu0 0.0
    %2753 = vmatpush1.msra.mxu0 %v2616
    %2754 = vmatprep.subr.mxu0 0.0
    %2755 = vmatpush1.msra.mxu0 %v2617
    %2756 = vmatprep.subr.mxu0 0.0
    %2757 = vmatpush1.msra.mxu0 %v2618
    %2758 = vmatprep.subr.mxu0 0.0
    %2759 = vmatpush1.msra.mxu0 %v2619
    %2760 = vmatprep.subr.mxu0 0.0
    %2761 = vmatpush1.msra.mxu0 %v2620
    %2762 = vmatprep.subr.mxu0 0.0
    %2763 = vmatpush1.msra.mxu0 %v2621
    %2764 = vmatprep.subr.mxu0 0.0
    %2765 = vmatpush1.msra.mxu0 %v2622
    %2766 = vmatprep.subr.mxu0 0.0
    %2767 = vmatpush1.msra.mxu0 %v2623
    %2768 = vmatprep.subr.mxu0 0.0
    %2769 = vmatpush1.msra.mxu0 %v2624
    %2770 = vmatprep.subr.mxu0 0.0
    %2771 = vmatpush1.msra.mxu0 %v2625
    %2772 = vmatprep.subr.mxu0 0.0
    %2773 = vmatpush1.msra.mxu0 %v2626
    %2774 = vmatprep.subr.mxu0 0.0
    %2775 = vmatpush1.msra.mxu0 %v2627
    %2776 = vmatprep.subr.mxu0 0.0
    %2777 = vmatpush1.msra.mxu0 %v2628
    %2778 = vmatprep.subr.mxu0 0.0
    %2779 = vmatpush1.msra.mxu0 %v2629
    %2780 = vmatprep.subr.mxu0 0.0
    %2781 = vmatpush1.msra.mxu0 %v2630
    %2782 = vmatprep.subr.mxu0 0.0
    %2783 = vmatpush1.msra.mxu0 %v2631
    %2784 = vmatprep.subr.mxu0 0.0
    %2785 = vmatpush1.msra.mxu0 %v2632
    %2786 = vmatprep.subr.mxu0 0.0
    %2787 = vmatpush1.msra.mxu0 %v2633
    %2788 = vmatprep.subr.mxu0 0.0
    %2789 = vmatpush1.msra.mxu0 %v2634
    %2790 = vmatprep.subr.mxu0 0.0
    %2791 = vmatpush1.msra.mxu0 %v2635
    %2792 = vmatprep.subr.mxu0 0.0
    %2793 = vmatpush1.msra.mxu0 %v2636
    %2794 = vmatprep.subr.mxu0 0.0
    %2795 = vmatpush1.msra.mxu0 %v2637
    %2796 = vmatprep.subr.mxu0 0.0
    %2797 = vmatpush1.msra.mxu0 %v2638
    %2798 = vmatprep.subr.mxu0 0.0
    %2799 = vmatpush1.msra.mxu0 %v2639
    %2800 = vmatprep.subr.mxu0 0.0
    %2801 = vmatpush1.msra.mxu0 %v2640
    %2802 = vmatprep.subr.mxu0 0.0
    %2803 = vmatpush1.msra.mxu0 %v2641
    %2804 = vmatprep.subr.mxu0 0.0
    %2805 = vmatpush1.msra.mxu0 %v2642
    %2806 = vmatprep.subr.mxu0 0.0
    %2807 = vmatpush1.msra.mxu0 %v2643
    %2808 = vmatprep.subr.mxu0 0.0
    %2809 = vmatpush1.msra.mxu0 %v2644
    %2810 = vmatprep.subr.mxu0 0.0
    %2811 = vmatpush1.msra.mxu0 %v2645
    %2812 = vmatprep.mubr.f32.mxu0 %v2537
    %2813 = vmatmul.mubr.f32.gmra.mrb[0].mxu0 %v2535
    %v2814 = vpop.f32.mrb[0].mxu0
    %v2815 = vadd.f32 %v2745, %v2814
    %v2816 = vpop.f32.mrb[0].mxu0
    %2817 = vdwg.mxu0
    %2818 = vmatprep.subr.mxu0 0.0
    %2819 = vmatpush1.msra.mxu0 %v2646
    %2820 = vmatprep.subr.mxu0 0.0
    %2821 = vmatpush1.msra.mxu0 %v2647
    %2822 = vmatprep.subr.mxu0 0.0
    %2823 = vmatpush1.msra.mxu0 %v2648
    %2824 = vmatprep.subr.mxu0 0.0
    %2825 = vmatpush1.msra.mxu0 %v2649
    %2826 = vmatprep.subr.mxu0 0.0
    %2827 = vmatpush1.msra.mxu0 %v2650
    %2828 = vmatprep.subr.mxu0 0.0
    %2829 = vmatpush1.msra.mxu0 %v2651
    %2830 = vmatprep.subr.mxu0 0.0
    %2831 = vmatpush1.msra.mxu0 %v2652
    %2832 = vmatprep.subr.mxu0 0.0
    %2833 = vmatpush1.msra.mxu0 %v2653
    %2834 = vmatprep.subr.mxu0 0.0
    %2835 = vmatpush1.msra.mxu0 %v2654
    %2836 = vmatprep.subr.mxu0 0.0
    %2837 = vmatpush1.msra.mxu0 %v2655
    %2838 = vmatprep.subr.mxu0 0.0
    %2839 = vmatpush1.msra.mxu0 %v2656
    %2840 = vmatprep.subr.mxu0 0.0
    %2841 = vmatpush1.msra.mxu0 %v2657
    %2842 = vmatprep.subr.mxu0 0.0
    %2843 = vmatpush1.msra.mxu0 %v2658
    %2844 = vmatprep.subr.mxu0 0.0
    %2845 = vmatpush1.msra.mxu0 %v2659
    %2846 = vmatprep.subr.mxu0 0.0
    %2847 = vmatpush1.msra.mxu0 %v2660
    %2848 = vmatprep.subr.mxu0 0.0
    %2849 = vmatpush1.msra.mxu0 %v2661
    %2850 = vmatprep.subr.mxu0 0.0
    %2851 = vmatpush1.msra.mxu0 %v2662
    %2852 = vmatprep.subr.mxu0 0.0
    %2853 = vmatpush1.msra.mxu0 %v2663
    %2854 = vmatprep.subr.mxu0 0.0
    %2855 = vmatpush1.msra.mxu0 %v2664
    %2856 = vmatprep.subr.mxu0 0.0
    %2857 = vmatpush1.msra.mxu0 %v2665
    %2858 = vmatprep.subr.mxu0 0.0
    %2859 = vmatpush1.msra.mxu0 %v2666
    %2860 = vmatprep.subr.mxu0 0.0
    %2861 = vmatpush1.msra.mxu0 %v2667
    %2862 = vmatprep.subr.mxu0 0.0
    %2863 = vmatpush1.msra.mxu0 %v2668
    %2864 = vmatprep.subr.mxu0 0.0
    %2865 = vmatpush1.msra.mxu0 %v2669
    %2866 = vmatprep.subr.mxu0 0.0
    %2867 = vmatpush1.msra.mxu0 %v2670
    %2868 = vmatprep.subr.mxu0 0.0
    %2869 = vmatpush1.msra.mxu0 %v2671
    %2870 = vmatprep.subr.mxu0 0.0
    %2871 = vmatpush1.msra.mxu0 %v2672
    %2872 = vmatprep.subr.mxu0 0.0
    %2873 = vmatpush1.msra.mxu0 %v2673
    %2874 = vmatprep.subr.mxu0 0.0
    %2875 = vmatpush1.msra.mxu0 %v2674
    %2876 = vmatprep.subr.mxu0 0.0
    %2877 = vmatpush1.msra.mxu0 %v2675
    %2878 = vmatprep.subr.mxu0 0.0
    %2879 = vmatpush1.msra.mxu0 %v2676
    %2880 = vmatprep.subr.mxu0 0.0
    %2881 = vmatpush1.msra.mxu0 %v2677
    %2882 = vmatprep.mubr.f32.mxu0 %v2578
    %2883 = vmatmul.mubr.f32.gmra.mrb[0].mxu0 %v2576
    %v2884 = vpop.f32.mrb[0].mxu0
    %v2885 = vadd.f32 %v2815, %v2884
    %v2886 = vpop.f32.mrb[0].mxu0
    %2887 = vdwg.mxu0
    %2888 = vst [vmem:[#allocation8] sm:$0xff] %v2885
    // Predicated region
    $region86: #{tpu_custom_call.1} parent=1 // pred_check
      _
    $region87: #{tpu_custom_call.1} parent=1 // pred_check_branch
      %2890 = sbr.rel (0) target = $region89
    $region88: #{tpu_custom_call.1} parent=1 // pred_region
      %s2892 = ssub.s32 128, 128
      %2893 = vsyncadd [#allocation7], %s2892
      %s2895 = sshll.u32 [#allocation8], 4
      %s2896 = int_to_ptr.vmem [resolvable:$true] %s2895
      %2898 = dma.vmem_to_hbm [thread:$0]  %s2896, 128, %s20, [#allocation7]
    $region89: #{tpu_custom_call.1} parent=1 // pred_fallthru
      _
    // Predicated region
    $region90: #{tpu_custom_call.1} parent=1 // pred_check
      _
    $region91: #{tpu_custom_call.1} parent=1 // pred_check_branch
      %2900 = sbr.rel (0) target = $region93
    $region92: #{tpu_custom_call.1} parent=1 // pred_region
      %2901 = dma.done [#allocation7], 128
    $region93: #{tpu_custom_call.1} parent=1 // pred_fallthru
      _
    %2902 = vsyncpa [#allocation6], 1
    %2903 = vsyncpa [#allocation7], 1

</llo_original>
